<compile_context>
chip_gen: v5e
topology: v5e:2x2
jax: 0.10.0
libtpu: 0.0.40
codegen_flags: <defaults>
</compile_context>

<pallas_src>
import functools

import jax
import jax.numpy as jnp
from jax.experimental import pallas as pl
from jax.experimental.pallas import tpu as pltpu


# ----------------------------- Pallas kernel -------------------------------


def _layer_norm(h, gamma, beta, eps=1e-5):
    mu = jnp.mean(h, axis=-1, keepdims=True)
    var = jnp.mean((h - mu) ** 2, axis=-1, keepdims=True)
    return (h - mu) * jax.lax.rsqrt(var + eps) * gamma + beta


def fused_gps_kernel(num_heads,
                     x0_ref, adj_ref,
                     wloc_ref, bloc_ref,
                     wq_ref, wk_ref, wv_ref, wo_ref,
                     g1_ref, be1_ref,
                     w1_ref, b1_ref, w2_ref, b2_ref,
                     g2_ref, be2_ref,
                     woff_ref, boff_ref,
                     x_out_ref, off_out_ref):
    """grid=(L,): one GPS layer per grid step, x / offsets carried in VMEM."""
    layer = pl.program_id(0)
    bf16 = jnp.bfloat16

    # Layer 0: seed the VMEM-resident carries (x_out_ref doubles as the x
    # state, off_out_ref as the padding_zeros accumulator).
    @pl.when(layer == 0)
    def _():
        x_out_ref[...] = x0_ref[...]
        off_out_ref[...] = jnp.zeros_like(off_out_ref)

    x = x_out_ref[...]                       # (N, D) f32 residual stream
    x_bf = x.astype(bf16)
    A = adj_ref[...]                         # (N, N) bf16 row-normalized adj
    N, D = x.shape
    H = num_heads
    dh = D // H
    scale = float(dh) ** -0.5

    # --- local GNN: mean-aggregation message passing (dense adjacency) -----
    msg = jnp.dot(x_bf, wloc_ref[...],
                  preferred_element_type=jnp.float32) + bloc_ref[...]
    agg = jnp.dot(A, msg.astype(bf16), preferred_element_type=jnp.float32)
    h_local = x + jnp.maximum(agg, 0.0)

    # --- global multi-head self-attention (batched heads, f32 softmax) -----
    q = jnp.dot(x_bf, wq_ref[...], preferred_element_type=jnp.float32)
    k = jnp.dot(x_bf, wk_ref[...], preferred_element_type=jnp.float32)
    v = jnp.dot(x_bf, wv_ref[...], preferred_element_type=jnp.float32)
    qh = jnp.transpose(q.reshape(N, H, dh), (1, 0, 2)).astype(bf16)  # (H,N,dh)
    kh = jnp.transpose(k.reshape(N, H, dh), (1, 0, 2)).astype(bf16)
    vh = jnp.transpose(v.reshape(N, H, dh), (1, 0, 2)).astype(bf16)

    s = jnp.einsum('hnd,hmd->hnm', qh, kh,
                   preferred_element_type=jnp.float32) * scale       # (H,N,N)
    s = s - jnp.max(s, axis=-1, keepdims=True)
    p = jnp.exp(s)
    p = p * pl.reciprocal(jnp.sum(p, axis=-1, keepdims=True), approx=True)
    o = jnp.einsum('hnm,hmd->hnd', p.astype(bf16), vh,
                   preferred_element_type=jnp.float32)               # (H,N,dh)
    attn = jnp.transpose(o, (1, 0, 2)).reshape(N, D)
    h_attn = x + jnp.dot(attn.astype(bf16), wo_ref[...],
                         preferred_element_type=jnp.float32)

    h = _layer_norm(h_local + h_attn, g1_ref[...], be1_ref[...])

    # --- feed-forward block + residual --------------------------------------
    ff = jnp.maximum(
        jnp.dot(h.astype(bf16), w1_ref[...],
                preferred_element_type=jnp.float32) + b1_ref[...], 0.0)
    ff = jnp.dot(ff.astype(bf16), w2_ref[...],
                 preferred_element_type=jnp.float32) + b2_ref[...]
    h = _layer_norm(h + ff, g2_ref[...], be2_ref[...])

    x_out_ref[...] = h

    # --- offset head: padding_zeros += Linear(D, 4*9)(x) ---------------------
    off = jnp.dot(h.astype(bf16), woff_ref[...],
                  preferred_element_type=jnp.float32) + boff_ref[...]
    off_out_ref[...] = off_out_ref[...] + off


# ------------------------------ JAX wrapper ---------------------------------


def gps_model_anchor_voting(params, batch):
    """Mirrors GPSModel_anchor_voting.forward: returns (x, padding_zeros)."""
    x, edge_index, node_indices = batch  # node_indices unused (bookkeeping)
    del node_indices
    N, D = x.shape
    layers = params["layers"]
    L = len(layers)
    H = int(layers[0]["num_heads"])
    assert all(int(lp["num_heads"]) == H for lp in layers), \
        "fused kernel requires a uniform head count across layers"
    assert D % H == 0, "hidden dim must be divisible by num_heads"
    # TODO(synk): fused weight stacking requires in_dim == all latent_dims;
    #             heterogeneous dims would need a separate first-layer call.

    # Dense row-normalized adjacency from edge_index (mean aggregation,
    # duplicate edges counted, as in edge-list message passing).
    src, dst = edge_index[0], edge_index[1]
    A = jnp.zeros((N, N), jnp.float32).at[dst, src].add(1.0)
    deg = jnp.maximum(A.sum(axis=-1, keepdims=True), 1.0)
    A = (A / deg).astype(jnp.bfloat16)

    f32, bf16 = jnp.float32, jnp.bfloat16

    def stk(key, dtype):
        return jnp.stack([lp[key] for lp in layers], axis=0).astype(dtype)

    wloc, bloc = stk("wloc", bf16), stk("bloc", f32)
    wq, wk, wv, wo = stk("wq", bf16), stk("wk", bf16), stk("wv", bf16), stk("wo", bf16)
    g1, be1 = stk("g1", f32), stk("be1", f32)
    w1, b1 = stk("w1", bf16), stk("b1", f32)
    w2, b2 = stk("w2", bf16), stk("b2", f32)
    g2, be2 = stk("g2", f32), stk("be2", f32)
    woff = params["offset_head"]["w"].astype(bf16)
    boff = params["offset_head"]["b"].astype(f32)

    inputs = (x.astype(f32), A,
              wloc, bloc, wq, wk, wv, wo,
              g1, be1, w1, b1, w2, b2, g2, be2,
              woff, boff)

    def const_spec(shape):           # same block for every layer -> DMA once
        return pl.BlockSpec(shape, lambda l: (0, 0))

    def layer_spec(arr):             # select this layer's stacked weights
        return pl.BlockSpec((None,) + arr.shape[1:], lambda l: (l, 0, 0))

    in_specs = [
        const_spec((N, D)),          # x0
        const_spec((N, N)),          # A
        layer_spec(wloc), layer_spec(bloc),
        layer_spec(wq), layer_spec(wk), layer_spec(wv), layer_spec(wo),
        layer_spec(g1), layer_spec(be1),
        layer_spec(w1), layer_spec(b1), layer_spec(w2), layer_spec(b2),
        layer_spec(g2), layer_spec(be2),
        const_spec(woff.shape), const_spec(boff.shape),
    ]
    out_shapes = (jax.ShapeDtypeStruct((N, D), f32),
                  jax.ShapeDtypeStruct((N, 4 * 9), f32))
    out_specs = [const_spec((N, D)), const_spec((N, 4 * 9))]

    x_out, offsets = pl.pallas_call(
        functools.partial(fused_gps_kernel, H),
        out_shape=out_shapes,
        grid=(L,),
        in_specs=in_specs,
        out_specs=out_specs,
        compiler_params=pltpu.CompilerParams(
            dimension_semantics=("arbitrary",),       # sequential layer carry
            vmem_limit_bytes=48 * 1024 * 1024),
    )(*inputs)
    return x_out, offsets


# --------------------------- deterministic params ---------------------------


def _glorot(key, shape):
    lim = jnp.sqrt(6.0 / (shape[0] + shape[1]))
    return jax.random.uniform(key, shape, jnp.float32, -lim, lim)


def init_params(key, in_dim, latent_dims, num_heads):
    layers = []
    D = in_dim
    for latent_dim, H in zip(latent_dims, num_heads):
        key, *ks = jax.random.split(key, 9)
        layers.append(dict(
            num_heads=int(H),
            wloc=_glorot(ks[0], (D, latent_dim)),
            bloc=jnp.zeros((1, latent_dim), jnp.float32),
            wq=_glorot(ks[1], (D, latent_dim)),
            wk=_glorot(ks[2], (D, latent_dim)),
            wv=_glorot(ks[3], (D, latent_dim)),
            wo=_glorot(ks[4], (latent_dim, latent_dim)),
            g1=jnp.ones((1, latent_dim), jnp.float32),
            be1=jnp.zeros((1, latent_dim), jnp.float32),
            w1=_glorot(ks[5], (latent_dim, 2 * latent_dim)),
            b1=jnp.zeros((1, 2 * latent_dim), jnp.float32),
            w2=_glorot(ks[6], (2 * latent_dim, latent_dim)),
            b2=jnp.zeros((1, latent_dim), jnp.float32),
            g2=jnp.ones((1, latent_dim), jnp.float32),
            be2=jnp.zeros((1, latent_dim), jnp.float32),
        ))
        D = latent_dim
    key, k_off = jax.random.split(key)
    offset_head = dict(
        w=_glorot(k_off, (latent_dims[-1], 4 * 9)),
        b=jnp.zeros((1, 4 * 9), jnp.float32),
    )
    return dict(layers=layers, offset_head=offset_head)


# --------------------------------- main --------------------------------------


if __name__ == "__main__":
    key = jax.random.PRNGKey(0)

    # Small config consistent with the module: D=128 keeps the residual stream
    # lane-dense; latent dims all equal so the shared offset_head
    # (Linear(latent_dims[-1], 36)) applies after each layer.
    N, D, E = 16, 128, 48
    latent_dims = [D, D]
    num_heads = [4, 4]

    k_x, k_e, k_p = jax.random.split(key, 3)
    x = jax.random.normal(k_x, (N, D), jnp.float32)
    edge_index = jax.random.randint(k_e, (2, E), 0, N, dtype=jnp.int32)
    node_indices = jnp.arange(N, dtype=jnp.int32)

    params = init_params(k_p, D, latent_dims, num_heads)

    x_out, offsets = gps_model_anchor_voting(params, (x, edge_index, node_indices))
    jax.block_until_ready((x_out, offsets))

    assert x_out.shape == (N, D)
    assert offsets.shape == (N, 4 * 9)
    print("KERNEL_OK")
</pallas_src>

<mosaic_0001>
module attributes {stable_mosaic.version = 11 : i64} {
  func.func @fused_gps_kernel(%arg0: i32, %arg1: memref<16x128xf32, #tpu.memory_space<vmem>>, %arg2: memref<16x16xbf16, #tpu.memory_space<vmem>>, %arg3: memref<1x128x128xbf16, #tpu.memory_space<vmem>>, %arg4: memref<1x1x128xf32, #tpu.memory_space<vmem>>, %arg5: memref<1x128x128xbf16, #tpu.memory_space<vmem>>, %arg6: memref<1x128x128xbf16, #tpu.memory_space<vmem>>, %arg7: memref<1x128x128xbf16, #tpu.memory_space<vmem>>, %arg8: memref<1x128x128xbf16, #tpu.memory_space<vmem>>, %arg9: memref<1x1x128xf32, #tpu.memory_space<vmem>>, %arg10: memref<1x1x128xf32, #tpu.memory_space<vmem>>, %arg11: memref<1x128x256xbf16, #tpu.memory_space<vmem>>, %arg12: memref<1x1x256xf32, #tpu.memory_space<vmem>>, %arg13: memref<1x256x128xbf16, #tpu.memory_space<vmem>>, %arg14: memref<1x1x128xf32, #tpu.memory_space<vmem>>, %arg15: memref<1x1x128xf32, #tpu.memory_space<vmem>>, %arg16: memref<1x1x128xf32, #tpu.memory_space<vmem>>, %arg17: memref<128x36xbf16, #tpu.memory_space<vmem>>, %arg18: memref<1x36xf32, #tpu.memory_space<vmem>>, %arg19: memref<16x128xf32, #tpu.memory_space<vmem>>, %arg20: memref<16x36xf32, #tpu.memory_space<vmem>>) attributes {dimension_semantics = [#tpu.dimension_semantics<arbitrary>], iteration_bounds = array<i64: 2>, scalar_prefetch = 0 : i64, scratch_operands = 0 : i64, tpu.core_type = #tpu.core_type<tc>, window_params = [{pipeline_mode = #tpu.pipeline_mode<synchronous>, transform_indices = @transform_0, window_bounds = array<i64: 16, 128>}, {pipeline_mode = #tpu.pipeline_mode<synchronous>, transform_indices = @transform_1, window_bounds = array<i64: 16, 16>}, {transform_indices = @transform_2, window_bounds = array<i64: 1, 128, 128>}, {transform_indices = @transform_3, window_bounds = array<i64: 1, 1, 128>}, {transform_indices = @transform_4, window_bounds = array<i64: 1, 128, 128>}, {transform_indices = @transform_5, window_bounds = array<i64: 1, 128, 128>}, {transform_indices = @transform_6, window_bounds = array<i64: 1, 128, 128>}, {transform_indices = @transform_7, window_bounds = array<i64: 1, 128, 128>}, {transform_indices = @transform_8, window_bounds = array<i64: 1, 1, 128>}, {transform_indices = @transform_9, window_bounds = array<i64: 1, 1, 128>}, {transform_indices = @transform_10, window_bounds = array<i64: 1, 128, 256>}, {transform_indices = @transform_11, window_bounds = array<i64: 1, 1, 256>}, {transform_indices = @transform_12, window_bounds = array<i64: 1, 256, 128>}, {transform_indices = @transform_13, window_bounds = array<i64: 1, 1, 128>}, {transform_indices = @transform_14, window_bounds = array<i64: 1, 1, 128>}, {transform_indices = @transform_15, window_bounds = array<i64: 1, 1, 128>}, {pipeline_mode = #tpu.pipeline_mode<synchronous>, transform_indices = @transform_16, window_bounds = array<i64: 128, 36>}, {pipeline_mode = #tpu.pipeline_mode<synchronous>, transform_indices = @transform_17, window_bounds = array<i64: 1, 36>}, {pipeline_mode = #tpu.pipeline_mode<synchronous>, transform_indices = @transform_18, window_bounds = array<i64: 16, 128>}, {pipeline_mode = #tpu.pipeline_mode<synchronous>, transform_indices = @transform_19, window_bounds = array<i64: 16, 36>}]} {
    %c0_i32 = arith.constant 0 : i32
    %0 = arith.cmpi eq, %arg0, %c0_i32 : i32
    %1 = arith.extui %0 : i1 to i32
    %c0_i32_0 = arith.constant 0 : i32
    %2 = arith.cmpi ne, %1, %c0_i32_0 : i32
    scf.if %2 {
      %c0_81 = arith.constant 0 : index
      %c0_82 = arith.constant 0 : index
      %140 = vector.load %arg1[%c0_81, %c0_82] : memref<16x128xf32, #tpu.memory_space<vmem>>, vector<16x128xf32>
      %c0_83 = arith.constant 0 : index
      %c0_84 = arith.constant 0 : index
      %141 = vector.load %arg19[%c0_83, %c0_84] : memref<16x128xf32, #tpu.memory_space<vmem>>, vector<16x128xf32>
      tpu.vector_store %arg19[%c0_83, %c0_84], %140 {strides = array<i32>} : memref<16x128xf32, #tpu.memory_space<vmem>>, vector<16x128xf32>,
      %cst_85 = arith.constant 0.000000e+00 : f32
      %142 = vector.broadcast %cst_85 : f32 to vector<16x36xf32>
      %c0_86 = arith.constant 0 : index
      %c0_87 = arith.constant 0 : index
      %143 = vector.load %arg20[%c0_86, %c0_87] : memref<16x36xf32, #tpu.memory_space<vmem>>, vector<16x36xf32>
      tpu.vector_store %arg20[%c0_86, %c0_87], %142 {strides = array<i32>} : memref<16x36xf32, #tpu.memory_space<vmem>>, vector<16x36xf32>,
    } else {
    }
    %c0 = arith.constant 0 : index
    %c0_1 = arith.constant 0 : index
    %3 = vector.load %arg19[%c0, %c0_1] : memref<16x128xf32, #tpu.memory_space<vmem>>, vector<16x128xf32>
    %4 = arith.truncf %3 : vector<16x128xf32> to vector<16x128xbf16>
    %c0_2 = arith.constant 0 : index
    %c0_3 = arith.constant 0 : index
    %5 = vector.load %arg2[%c0_2, %c0_3] : memref<16x16xbf16, #tpu.memory_space<vmem>>, vector<16x16xbf16>
    %c0_4 = arith.constant 0 : index
    %c0_5 = arith.constant 0 : index
    %c0_6 = arith.constant 0 : index
    %6 = vector.load %arg3[%c0_4, %c0_5, %c0_6] : memref<1x128x128xbf16, #tpu.memory_space<vmem>>, vector<1x128x128xbf16>
    %7 = vector.shape_cast %6 : vector<1x128x128xbf16> to vector<128x128xbf16>
    %cst = arith.constant dense<0.000000e+00> : vector<16x128xf32>
    %8 = tpu.matmul %4, %7, %cst {dimension_numbers = #tpu.dot_dimension_numbers<[1], [0], [0], [1], [0, 0, 1, 1], [], []>} : vector<16x128xbf16>, vector<128x128xbf16>, vector<16x128xf32> -> vector<16x128xf32>
    %c0_7 = arith.constant 0 : index
    %c0_8 = arith.constant 0 : index
    %c0_9 = arith.constant 0 : index
    %9 = vector.load %arg4[%c0_7, %c0_8, %c0_9] : memref<1x1x128xf32, #tpu.memory_space<vmem>>, vector<1x1x128xf32>
    %10 = vector.shape_cast %9 : vector<1x1x128xf32> to vector<1x128xf32>
    %11 = vector.broadcast %10 : vector<1x128xf32> to vector<16x128xf32>
    %12 = arith.addf %8, %11 : vector<16x128xf32>
    %13 = arith.truncf %12 : vector<16x128xf32> to vector<16x128xbf16>
    %cst_10 = arith.constant dense<0.000000e+00> : vector<16x128xf32>
    %14 = tpu.matmul %5, %13, %cst_10 {dimension_numbers = #tpu.dot_dimension_numbers<[1], [0], [0], [1], [0, 0, 1, 1], [], []>} : vector<16x16xbf16>, vector<16x128xbf16>, vector<16x128xf32> -> vector<16x128xf32>
    %cst_11 = arith.constant 0.000000e+00 : f32
    %15 = vector.broadcast %cst_11 : f32 to vector<16x128xf32>
    %16 = arith.maximumf %14, %15 : vector<16x128xf32>
    %17 = arith.addf %3, %16 : vector<16x128xf32>
    %c0_12 = arith.constant 0 : index
    %c0_13 = arith.constant 0 : index
    %c0_14 = arith.constant 0 : index
    %18 = vector.load %arg5[%c0_12, %c0_13, %c0_14] : memref<1x128x128xbf16, #tpu.memory_space<vmem>>, vector<1x128x128xbf16>
    %19 = vector.shape_cast %18 : vector<1x128x128xbf16> to vector<128x128xbf16>
    %cst_15 = arith.constant dense<0.000000e+00> : vector<16x128xf32>
    %20 = tpu.matmul %4, %19, %cst_15 {dimension_numbers = #tpu.dot_dimension_numbers<[1], [0], [0], [1], [0, 0, 1, 1], [], []>} : vector<16x128xbf16>, vector<128x128xbf16>, vector<16x128xf32> -> vector<16x128xf32>
    %c0_16 = arith.constant 0 : index
    %c0_17 = arith.constant 0 : index
    %c0_18 = arith.constant 0 : index
    %21 = vector.load %arg6[%c0_16, %c0_17, %c0_18] : memref<1x128x128xbf16, #tpu.memory_space<vmem>>, vector<1x128x128xbf16>
    %22 = vector.shape_cast %21 : vector<1x128x128xbf16> to vector<128x128xbf16>
    %cst_19 = arith.constant dense<0.000000e+00> : vector<16x128xf32>
    %23 = tpu.matmul %4, %22, %cst_19 {dimension_numbers = #tpu.dot_dimension_numbers<[1], [0], [0], [1], [0, 0, 1, 1], [], []>} : vector<16x128xbf16>, vector<128x128xbf16>, vector<16x128xf32> -> vector<16x128xf32>
    %c0_20 = arith.constant 0 : index
    %c0_21 = arith.constant 0 : index
    %c0_22 = arith.constant 0 : index
    %24 = vector.load %arg7[%c0_20, %c0_21, %c0_22] : memref<1x128x128xbf16, #tpu.memory_space<vmem>>, vector<1x128x128xbf16>
    %25 = vector.shape_cast %24 : vector<1x128x128xbf16> to vector<128x128xbf16>
    %cst_23 = arith.constant dense<0.000000e+00> : vector<16x128xf32>
    %26 = tpu.matmul %4, %25, %cst_23 {dimension_numbers = #tpu.dot_dimension_numbers<[1], [0], [0], [1], [0, 0, 1, 1], [], []>} : vector<16x128xbf16>, vector<128x128xbf16>, vector<16x128xf32> -> vector<16x128xf32>
    %27 = vector.shape_cast %20 : vector<16x128xf32> to vector<16x4x32xf32>
    %28 = tpu.transpose %27, [1, 0, 2] : vector<16x4x32xf32> -> vector<4x16x32xf32>
    %29 = arith.truncf %28 : vector<4x16x32xf32> to vector<4x16x32xbf16>
    %30 = vector.shape_cast %23 : vector<16x128xf32> to vector<16x4x32xf32>
    %31 = tpu.transpose %30, [1, 0, 2] : vector<16x4x32xf32> -> vector<4x16x32xf32>
    %32 = arith.truncf %31 : vector<4x16x32xf32> to vector<4x16x32xbf16>
    %33 = vector.shape_cast %26 : vector<16x128xf32> to vector<16x4x32xf32>
    %34 = tpu.transpose %33, [1, 0, 2] : vector<16x4x32xf32> -> vector<4x16x32xf32>
    %35 = arith.truncf %34 : vector<4x16x32xf32> to vector<4x16x32xbf16>
    "tpu.trace_start"() <{level = 10 : i32, message = "hnd,hmd->hnm"}> : () -> ()
    %cst_24 = arith.constant dense<0.000000e+00> : vector<4x16x16xf32>
    %36 = tpu.matmul %29, %32, %cst_24 {dimension_numbers = #tpu.dot_dimension_numbers<[2], [2], [1], [1], [0, 0, 0, 1, 1, 1], [0], [0]>} : vector<4x16x32xbf16>, vector<4x16x32xbf16>, vector<4x16x16xf32> -> vector<4x16x16xf32>
    "tpu.trace_stop"() : () -> ()
    %cst_25 = arith.constant 0.176776692 : f32
    %37 = vector.broadcast %cst_25 : f32 to vector<4x16x16xf32>
    %38 = arith.mulf %36, %37 : vector<4x16x16xf32>
    %cst_26 = arith.constant dense<0xFF800000> : vector<4x16xf32>
    %39 = vector.multi_reduction <maximumf>, %38, %cst_26 [2] : vector<4x16x16xf32> to vector<4x16xf32>
    %40 = vector.shape_cast %39 : vector<4x16xf32> to vector<4x16x1xf32>
    %41 = vector.broadcast %40 : vector<4x16x1xf32> to vector<4x16x16xf32>
    %42 = arith.subf %38, %41 : vector<4x16x16xf32>
    %43 = math.exp %42 : vector<4x16x16xf32>
    %cst_27 = arith.constant dense<0.000000e+00> : vector<4x16xf32>
    %44 = vector.multi_reduction <add>, %43, %cst_27 [2] : vector<4x16x16xf32> to vector<4x16xf32>
    %45 = vector.shape_cast %44 : vector<4x16xf32> to vector<4x16x1xf32>
    %46 = tpu.reciprocal %45 {approx = true} : vector<4x16x1xf32> -> vector<4x16x1xf32>
    %47 = vector.broadcast %46 : vector<4x16x1xf32> to vector<4x16x16xf32>
    %48 = arith.mulf %43, %47 : vector<4x16x16xf32>
    %49 = arith.truncf %48 : vector<4x16x16xf32> to vector<4x16x16xbf16>
    "tpu.trace_start"() <{level = 10 : i32, message = "hnm,hmd->hnd"}> : () -> ()
    %cst_28 = arith.constant dense<0.000000e+00> : vector<4x16x32xf32>
    %50 = tpu.matmul %49, %35, %cst_28 {dimension_numbers = #tpu.dot_dimension_numbers<[2], [1], [1], [2], [0, 0, 0, 1, 1, 2], [0], [0]>} : vector<4x16x16xbf16>, vector<4x16x32xbf16>, vector<4x16x32xf32> -> vector<4x16x32xf32>
    "tpu.trace_stop"() : () -> ()
    %51 = tpu.transpose %50, [1, 0, 2] : vector<4x16x32xf32> -> vector<16x4x32xf32>
    %52 = vector.shape_cast %51 : vector<16x4x32xf32> to vector<16x128xf32>
    %53 = arith.truncf %52 : vector<16x128xf32> to vector<16x128xbf16>
    %c0_29 = arith.constant 0 : index
    %c0_30 = arith.constant 0 : index
    %c0_31 = arith.constant 0 : index
    %54 = vector.load %arg8[%c0_29, %c0_30, %c0_31] : memref<1x128x128xbf16, #tpu.memory_space<vmem>>, vector<1x128x128xbf16>
    %55 = vector.shape_cast %54 : vector<1x128x128xbf16> to vector<128x128xbf16>
    %cst_32 = arith.constant dense<0.000000e+00> : vector<16x128xf32>
    %56 = tpu.matmul %53, %55, %cst_32 {dimension_numbers = #tpu.dot_dimension_numbers<[1], [0], [0], [1], [0, 0, 1, 1], [], []>} : vector<16x128xbf16>, vector<128x128xbf16>, vector<16x128xf32> -> vector<16x128xf32>
    %57 = arith.addf %3, %56 : vector<16x128xf32>
    %58 = arith.addf %17, %57 : vector<16x128xf32>
    %c0_33 = arith.constant 0 : index
    %c0_34 = arith.constant 0 : index
    %c0_35 = arith.constant 0 : index
    %59 = vector.load %arg9[%c0_33, %c0_34, %c0_35] : memref<1x1x128xf32, #tpu.memory_space<vmem>>, vector<1x1x128xf32>
    %60 = vector.shape_cast %59 : vector<1x1x128xf32> to vector<1x128xf32>
    %c0_36 = arith.constant 0 : index
    %c0_37 = arith.constant 0 : index
    %c0_38 = arith.constant 0 : index
    %61 = vector.load %arg10[%c0_36, %c0_37, %c0_38] : memref<1x1x128xf32, #tpu.memory_space<vmem>>, vector<1x1x128xf32>
    %62 = vector.shape_cast %61 : vector<1x1x128xf32> to vector<1x128xf32>
    %cst_39 = arith.constant dense<0.000000e+00> : vector<16xf32>
    %63 = vector.multi_reduction <add>, %58, %cst_39 [1] : vector<16x128xf32> to vector<16xf32>
    %64 = vector.shape_cast %63 : vector<16xf32> to vector<16x1xf32>
    %cst_40 = arith.constant 1.280000e+02 : f32
    %65 = vector.broadcast %cst_40 : f32 to vector<16x1xf32>
    %66 = arith.divf %64, %65 : vector<16x1xf32>
    %67 = vector.broadcast %66 : vector<16x1xf32> to vector<16x128xf32>
    %68 = arith.subf %58, %67 : vector<16x128xf32>
    %69 = arith.mulf %68, %68 : vector<16x128xf32>
    %cst_41 = arith.constant dense<0.000000e+00> : vector<16xf32>
    %70 = vector.multi_reduction <add>, %69, %cst_41 [1] : vector<16x128xf32> to vector<16xf32>
    %71 = vector.shape_cast %70 : vector<16xf32> to vector<16x1xf32>
    %cst_42 = arith.constant 1.280000e+02 : f32
    %72 = vector.broadcast %cst_42 : f32 to vector<16x1xf32>
    %73 = arith.divf %71, %72 : vector<16x1xf32>
    %74 = vector.broadcast %66 : vector<16x1xf32> to vector<16x128xf32>
    %75 = arith.subf %58, %74 : vector<16x128xf32>
    %cst_43 = arith.constant 9.99999974E-6 : f32
    %76 = vector.broadcast %cst_43 : f32 to vector<16x1xf32>
    %77 = arith.addf %73, %76 : vector<16x1xf32>
    %78 = math.rsqrt %77 : vector<16x1xf32>
    %79 = vector.broadcast %78 : vector<16x1xf32> to vector<16x128xf32>
    %80 = arith.mulf %75, %79 : vector<16x128xf32>
    %81 = vector.broadcast %60 : vector<1x128xf32> to vector<16x128xf32>
    %82 = arith.mulf %80, %81 : vector<16x128xf32>
    %83 = vector.broadcast %62 : vector<1x128xf32> to vector<16x128xf32>
    %84 = arith.addf %82, %83 : vector<16x128xf32>
    %85 = arith.truncf %84 : vector<16x128xf32> to vector<16x128xbf16>
    %c0_44 = arith.constant 0 : index
    %c0_45 = arith.constant 0 : index
    %c0_46 = arith.constant 0 : index
    %86 = vector.load %arg11[%c0_44, %c0_45, %c0_46] : memref<1x128x256xbf16, #tpu.memory_space<vmem>>, vector<1x128x256xbf16>
    %87 = vector.shape_cast %86 : vector<1x128x256xbf16> to vector<128x256xbf16>
    %cst_47 = arith.constant dense<0.000000e+00> : vector<16x256xf32>
    %88 = tpu.matmul %85, %87, %cst_47 {dimension_numbers = #tpu.dot_dimension_numbers<[1], [0], [0], [1], [0, 0, 1, 1], [], []>} : vector<16x128xbf16>, vector<128x256xbf16>, vector<16x256xf32> -> vector<16x256xf32>
    %c0_48 = arith.constant 0 : index
    %c0_49 = arith.constant 0 : index
    %c0_50 = arith.constant 0 : index
    %89 = vector.load %arg12[%c0_48, %c0_49, %c0_50] : memref<1x1x256xf32, #tpu.memory_space<vmem>>, vector<1x1x256xf32>
    %90 = vector.shape_cast %89 : vector<1x1x256xf32> to vector<1x256xf32>
    %91 = vector.broadcast %90 : vector<1x256xf32> to vector<16x256xf32>
    %92 = arith.addf %88, %91 : vector<16x256xf32>
    %cst_51 = arith.constant 0.000000e+00 : f32
    %93 = vector.broadcast %cst_51 : f32 to vector<16x256xf32>
    %94 = arith.maximumf %92, %93 : vector<16x256xf32>
    %95 = arith.truncf %94 : vector<16x256xf32> to vector<16x256xbf16>
    %c0_52 = arith.constant 0 : index
    %c0_53 = arith.constant 0 : index
    %c0_54 = arith.constant 0 : index
    %96 = vector.load %arg13[%c0_52, %c0_53, %c0_54] : memref<1x256x128xbf16, #tpu.memory_space<vmem>>, vector<1x256x128xbf16>
    %97 = vector.shape_cast %96 : vector<1x256x128xbf16> to vector<256x128xbf16>
    %cst_55 = arith.constant dense<0.000000e+00> : vector<16x128xf32>
    %98 = tpu.matmul %95, %97, %cst_55 {dimension_numbers = #tpu.dot_dimension_numbers<[1], [0], [0], [1], [0, 0, 1, 1], [], []>} : vector<16x256xbf16>, vector<256x128xbf16>, vector<16x128xf32> -> vector<16x128xf32>
    %c0_56 = arith.constant 0 : index
    %c0_57 = arith.constant 0 : index
    %c0_58 = arith.constant 0 : index
    %99 = vector.load %arg14[%c0_56, %c0_57, %c0_58] : memref<1x1x128xf32, #tpu.memory_space<vmem>>, vector<1x1x128xf32>
    %100 = vector.shape_cast %99 : vector<1x1x128xf32> to vector<1x128xf32>
    %101 = vector.broadcast %100 : vector<1x128xf32> to vector<16x128xf32>
    %102 = arith.addf %98, %101 : vector<16x128xf32>
    %103 = arith.addf %84, %102 : vector<16x128xf32>
    %c0_59 = arith.constant 0 : index
    %c0_60 = arith.constant 0 : index
    %c0_61 = arith.constant 0 : index
    %104 = vector.load %arg15[%c0_59, %c0_60, %c0_61] : memref<1x1x128xf32, #tpu.memory_space<vmem>>, vector<1x1x128xf32>
    %105 = vector.shape_cast %104 : vector<1x1x128xf32> to vector<1x128xf32>
    %c0_62 = arith.constant 0 : index
    %c0_63 = arith.constant 0 : index
    %c0_64 = arith.constant 0 : index
    %106 = vector.load %arg16[%c0_62, %c0_63, %c0_64] : memref<1x1x128xf32, #tpu.memory_space<vmem>>, vector<1x1x128xf32>
    %107 = vector.shape_cast %106 : vector<1x1x128xf32> to vector<1x128xf32>
    %cst_65 = arith.constant dense<0.000000e+00> : vector<16xf32>
    %108 = vector.multi_reduction <add>, %103, %cst_65 [1] : vector<16x128xf32> to vector<16xf32>
    %109 = vector.shape_cast %108 : vector<16xf32> to vector<16x1xf32>
    %cst_66 = arith.constant 1.280000e+02 : f32
    %110 = vector.broadcast %cst_66 : f32 to vector<16x1xf32>
    %111 = arith.divf %109, %110 : vector<16x1xf32>
    %112 = vector.broadcast %111 : vector<16x1xf32> to vector<16x128xf32>
    %113 = arith.subf %103, %112 : vector<16x128xf32>
    %114 = arith.mulf %113, %113 : vector<16x128xf32>
    %cst_67 = arith.constant dense<0.000000e+00> : vector<16xf32>
    %115 = vector.multi_reduction <add>, %114, %cst_67 [1] : vector<16x128xf32> to vector<16xf32>
    %116 = vector.shape_cast %115 : vector<16xf32> to vector<16x1xf32>
    %cst_68 = arith.constant 1.280000e+02 : f32
    %117 = vector.broadcast %cst_68 : f32 to vector<16x1xf32>
    %118 = arith.divf %116, %117 : vector<16x1xf32>
    %119 = vector.broadcast %111 : vector<16x1xf32> to vector<16x128xf32>
    %120 = arith.subf %103, %119 : vector<16x128xf32>
    %cst_69 = arith.constant 9.99999974E-6 : f32
    %121 = vector.broadcast %cst_69 : f32 to vector<16x1xf32>
    %122 = arith.addf %118, %121 : vector<16x1xf32>
    %123 = math.rsqrt %122 : vector<16x1xf32>
    %124 = vector.broadcast %123 : vector<16x1xf32> to vector<16x128xf32>
    %125 = arith.mulf %120, %124 : vector<16x128xf32>
    %126 = vector.broadcast %105 : vector<1x128xf32> to vector<16x128xf32>
    %127 = arith.mulf %125, %126 : vector<16x128xf32>
    %128 = vector.broadcast %107 : vector<1x128xf32> to vector<16x128xf32>
    %129 = arith.addf %127, %128 : vector<16x128xf32>
    %c0_70 = arith.constant 0 : index
    %c0_71 = arith.constant 0 : index
    %130 = vector.load %arg19[%c0_70, %c0_71] : memref<16x128xf32, #tpu.memory_space<vmem>>, vector<16x128xf32>
    tpu.vector_store %arg19[%c0_70, %c0_71], %129 {strides = array<i32>} : memref<16x128xf32, #tpu.memory_space<vmem>>, vector<16x128xf32>,
    %131 = arith.truncf %129 : vector<16x128xf32> to vector<16x128xbf16>
    %c0_72 = arith.constant 0 : index
    %c0_73 = arith.constant 0 : index
    %132 = vector.load %arg17[%c0_72, %c0_73] : memref<128x36xbf16, #tpu.memory_space<vmem>>, vector<128x36xbf16>
    %cst_74 = arith.constant dense<0.000000e+00> : vector<16x36xf32>
    %133 = tpu.matmul %131, %132, %cst_74 {dimension_numbers = #tpu.dot_dimension_numbers<[1], [0], [0], [1], [0, 0, 1, 1], [], []>} : vector<16x128xbf16>, vector<128x36xbf16>, vector<16x36xf32> -> vector<16x36xf32>
    %c0_75 = arith.constant 0 : index
    %c0_76 = arith.constant 0 : index
    %134 = vector.load %arg18[%c0_75, %c0_76] : memref<1x36xf32, #tpu.memory_space<vmem>>, vector<1x36xf32>
    %135 = vector.broadcast %134 : vector<1x36xf32> to vector<16x36xf32>
    %136 = arith.addf %133, %135 : vector<16x36xf32>
    %c0_77 = arith.constant 0 : index
    %c0_78 = arith.constant 0 : index
    %137 = vector.load %arg20[%c0_77, %c0_78] : memref<16x36xf32, #tpu.memory_space<vmem>>, vector<16x36xf32>
    %138 = arith.addf %137, %136 : vector<16x36xf32>
    %c0_79 = arith.constant 0 : index
    %c0_80 = arith.constant 0 : index
    %139 = vector.load %arg20[%c0_79, %c0_80] : memref<16x36xf32, #tpu.memory_space<vmem>>, vector<16x36xf32>
    tpu.vector_store %arg20[%c0_79, %c0_80], %138 {strides = array<i32>} : memref<16x36xf32, #tpu.memory_space<vmem>>, vector<16x36xf32>,
    return
  }
  func.func @transform_0(%arg0: i32) -> (i32, i32) {
    %c0_i32 = arith.constant 0 : i32
    %c0_i32_0 = arith.constant 0 : i32
    %c0_i32_1 = arith.constant 0 : i32
    return %c0_i32, %c0_i32_0 : i32, i32
  }
  func.func @transform_1(%arg0: i32) -> (i32, i32) {
    %c0_i32 = arith.constant 0 : i32
    %c0_i32_0 = arith.constant 0 : i32
    %c0_i32_1 = arith.constant 0 : i32
    return %c0_i32, %c0_i32_0 : i32, i32
  }
  func.func @transform_2(%arg0: i32) -> (i32, i32, i32) {
    %c0_i32 = arith.constant 0 : i32
    %c0_i32_0 = arith.constant 0 : i32
    %c0_i32_1 = arith.constant 0 : i32
    return %arg0, %c0_i32, %c0_i32_0 : i32, i32, i32
  }
  func.func @transform_3(%arg0: i32) -> (i32, i32, i32) {
    %c0_i32 = arith.constant 0 : i32
    %c0_i32_0 = arith.constant 0 : i32
    %c0_i32_1 = arith.constant 0 : i32
    return %arg0, %c0_i32, %c0_i32_0 : i32, i32, i32
  }
  func.func @transform_4(%arg0: i32) -> (i32, i32, i32) {
    %c0_i32 = arith.constant 0 : i32
    %c0_i32_0 = arith.constant 0 : i32
    %c0_i32_1 = arith.constant 0 : i32
    return %arg0, %c0_i32, %c0_i32_0 : i32, i32, i32
  }
  func.func @transform_5(%arg0: i32) -> (i32, i32, i32) {
    %c0_i32 = arith.constant 0 : i32
    %c0_i32_0 = arith.constant 0 : i32
    %c0_i32_1 = arith.constant 0 : i32
    return %arg0, %c0_i32, %c0_i32_0 : i32, i32, i32
  }
  func.func @transform_6(%arg0: i32) -> (i32, i32, i32) {
    %c0_i32 = arith.constant 0 : i32
    %c0_i32_0 = arith.constant 0 : i32
    %c0_i32_1 = arith.constant 0 : i32
    return %arg0, %c0_i32, %c0_i32_0 : i32, i32, i32
  }
  func.func @transform_7(%arg0: i32) -> (i32, i32, i32) {
    %c0_i32 = arith.constant 0 : i32
    %c0_i32_0 = arith.constant 0 : i32
    %c0_i32_1 = arith.constant 0 : i32
    return %arg0, %c0_i32, %c0_i32_0 : i32, i32, i32
  }
  func.func @transform_8(%arg0: i32) -> (i32, i32, i32) {
    %c0_i32 = arith.constant 0 : i32
    %c0_i32_0 = arith.constant 0 : i32
    %c0_i32_1 = arith.constant 0 : i32
    return %arg0, %c0_i32, %c0_i32_0 : i32, i32, i32
  }
  func.func @transform_9(%arg0: i32) -> (i32, i32, i32) {
    %c0_i32 = arith.constant 0 : i32
    %c0_i32_0 = arith.constant 0 : i32
    %c0_i32_1 = arith.constant 0 : i32
    return %arg0, %c0_i32, %c0_i32_0 : i32, i32, i32
  }
  func.func @transform_10(%arg0: i32) -> (i32, i32, i32) {
    %c0_i32 = arith.constant 0 : i32
    %c0_i32_0 = arith.constant 0 : i32
    %c0_i32_1 = arith.constant 0 : i32
    return %arg0, %c0_i32, %c0_i32_0 : i32, i32, i32
  }
  func.func @transform_11(%arg0: i32) -> (i32, i32, i32) {
    %c0_i32 = arith.constant 0 : i32
    %c0_i32_0 = arith.constant 0 : i32
    %c0_i32_1 = arith.constant 0 : i32
    return %arg0, %c0_i32, %c0_i32_0 : i32, i32, i32
  }
  func.func @transform_12(%arg0: i32) -> (i32, i32, i32) {
    %c0_i32 = arith.constant 0 : i32
    %c0_i32_0 = arith.constant 0 : i32
    %c0_i32_1 = arith.constant 0 : i32
    return %arg0, %c0_i32, %c0_i32_0 : i32, i32, i32
  }
  func.func @transform_13(%arg0: i32) -> (i32, i32, i32) {
    %c0_i32 = arith.constant 0 : i32
    %c0_i32_0 = arith.constant 0 : i32
    %c0_i32_1 = arith.constant 0 : i32
    return %arg0, %c0_i32, %c0_i32_0 : i32, i32, i32
  }
  func.func @transform_14(%arg0: i32) -> (i32, i32, i32) {
    %c0_i32 = arith.constant 0 : i32
    %c0_i32_0 = arith.constant 0 : i32
    %c0_i32_1 = arith.constant 0 : i32
    return %arg0, %c0_i32, %c0_i32_0 : i32, i32, i32
  }
  func.func @transform_15(%arg0: i32) -> (i32, i32, i32) {
    %c0_i32 = arith.constant 0 : i32
    %c0_i32_0 = arith.constant 0 : i32
    %c0_i32_1 = arith.constant 0 : i32
    return %arg0, %c0_i32, %c0_i32_0 : i32, i32, i32
  }
  func.func @transform_16(%arg0: i32) -> (i32, i32) {
    %c0_i32 = arith.constant 0 : i32
    %c0_i32_0 = arith.constant 0 : i32
    %c0_i32_1 = arith.constant 0 : i32
    return %c0_i32, %c0_i32_0 : i32, i32
  }
  func.func @transform_17(%arg0: i32) -> (i32, i32) {
    %c0_i32 = arith.constant 0 : i32
    %c0_i32_0 = arith.constant 0 : i32
    %c0_i32_1 = arith.constant 0 : i32
    return %c0_i32, %c0_i32_0 : i32, i32
  }
  func.func @transform_18(%arg0: i32) -> (i32, i32) {
    %c0_i32 = arith.constant 0 : i32
    %c0_i32_0 = arith.constant 0 : i32
    %c0_i32_1 = arith.constant 0 : i32
    return %c0_i32, %c0_i32_0 : i32, i32
  }
  func.func @transform_19(%arg0: i32) -> (i32, i32) {
    %c0_i32 = arith.constant 0 : i32
    %c0_i32_0 = arith.constant 0 : i32
    %c0_i32_1 = arith.constant 0 : i32
    return %c0_i32, %c0_i32_0 : i32, i32
  }
}

</mosaic_0001>

<llo_original>
// kernel: tpu_custom_call.1
$region0: #{tpu_custom_call.1}
  #allocation0 [shape = 'u32[]', space=smem, size = 0x4, offset = 0x4, fixed_abs, tag = 'smem constant byte address 0x4 - core index']
  #allocation1 [shape = 'u32[72,128]{1,0:T(1,128)}', space=vmem, size = 0x9000, scoped, tag = 'internal scratch']
  %s0 = inlined_call_operand.vmem [shape: f32[16,128], index: 0, kind: input, shape index: {}]
  %s1 = inlined_call_operand.vmem [shape: bf16[16,16], index: 1, kind: input, shape index: {}]
  %s2 = inlined_call_operand.hbm [shape: bf16[2,128,128], index: 2, kind: input, shape index: {}]
  %s3 = inlined_call_operand.vmem [shape: f32[2,1,128], index: 3, kind: input, shape index: {}]
  %s4 = inlined_call_operand.hbm [shape: bf16[2,128,128], index: 4, kind: input, shape index: {}]
  %s5 = inlined_call_operand.hbm [shape: bf16[2,128,128], index: 5, kind: input, shape index: {}]
  %s6 = inlined_call_operand.hbm [shape: bf16[2,128,128], index: 6, kind: input, shape index: {}]
  %s7 = inlined_call_operand.hbm [shape: bf16[2,128,128], index: 7, kind: input, shape index: {}]
  %s8 = inlined_call_operand.vmem [shape: f32[2,1,128], index: 8, kind: input, shape index: {}]
  %s9 = inlined_call_operand.vmem [shape: f32[2,1,128], index: 9, kind: input, shape index: {}]
  %s10 = inlined_call_operand.hbm [shape: bf16[2,128,256], index: 10, kind: input, shape index: {}]
  %s11 = inlined_call_operand.vmem [shape: f32[2,1,256], index: 11, kind: input, shape index: {}]
  %s12 = inlined_call_operand.hbm [shape: bf16[2,256,128], index: 12, kind: input, shape index: {}]
  %s13 = inlined_call_operand.vmem [shape: f32[2,1,128], index: 13, kind: input, shape index: {}]
  %s14 = inlined_call_operand.vmem [shape: f32[2,1,128], index: 14, kind: input, shape index: {}]
  %s15 = inlined_call_operand.vmem [shape: f32[2,1,128], index: 15, kind: input, shape index: {}]
  %s16 = inlined_call_operand.vmem [shape: bf16[128,36], index: 16, kind: input, shape index: {}]
  %s17 = inlined_call_operand.vmem [shape: f32[1,36], index: 17, kind: input, shape index: {}]
  %s18 = inlined_call_operand.hbm [shape: f32[16,128], index: 18, kind: output, shape index: {0}]
  %s19 = inlined_call_operand.hbm [shape: f32[16,36], index: 19, kind: output, shape index: {1}]
  %20 = xla_tuple %s18, %s19
  %s21 = sld [smem:[#allocation0]]
  $region145: #{tpu_custom_call.1} parent=0
    _
  %s23 = ssub.s32 1, %s21
  %s24 = scalar_select 0, %s23, %s21
  $region1: #{tpu_custom_call.1} parent=0
    #allocation2 [shape = 'u8[65536]{0}', space=vmem, size = 0x10000, scoped, tag = 'input window, operand 2']
    #allocation3 [shape = 's32[2]{0}', space=sflag, size = 0x8, scoped, tag = 'scoped memory for tpu_custom_call.1']
    #allocation4 [shape = 's32[2]{0}', space=sflag, size = 0x8, scoped, tag = 'scoped memory for tpu_custom_call.1']
    #allocation5 [shape = 'u8[65536]{0}', space=vmem, size = 0x10000, scoped, tag = 'input window, operand 4']
    #allocation6 [shape = 's32[2]{0}', space=sflag, size = 0x8, scoped, tag = 'scoped memory for tpu_custom_call.1']
    #allocation7 [shape = 'u8[65536]{0}', space=vmem, size = 0x10000, scoped, tag = 'input window, operand 5']
    #allocation8 [shape = 'u8[65536]{0}', space=vmem, size = 0x10000, scoped, tag = 'input window, operand 6']
    #allocation9 [shape = 's32[2]{0}', space=sflag, size = 0x8, scoped, tag = 'scoped memory for tpu_custom_call.1']
    #allocation10 [shape = 'u8[65536]{0}', space=vmem, size = 0x10000, scoped, tag = 'input window, operand 7']
    #allocation11 [shape = 'u8[131072]{0}', space=vmem, size = 0x20000, scoped, tag = 'input window, operand 10']
    #allocation12 [shape = 's32[2]{0}', space=sflag, size = 0x8, scoped, tag = 'scoped memory for tpu_custom_call.1']
    #allocation13 [shape = 'u8[131072]{0}', space=vmem, size = 0x20000, scoped, tag = 'input window, operand 12']
    #allocation14 [shape = 'u8[8192]{0}', space=vmem, size = 0x2000, scoped, tag = 'output window, operand 0, single buffered']
    #allocation15 [shape = 'u8[8192]{0}', space=vmem, size = 0x2000, scoped, tag = 'output window, operand 1, single buffered']
    #allocation16 [shape = 's32[1]{0}', space=sflag, size = 0x4, scoped, tag = 'scoped memory for tpu_custom_call.1']
    %25 = vsyncpa [#allocation3], 0
    %s26 = scalar_lea.sflag [#allocation3], 1
    %27 = vsyncpa %s26, 0
    %28 = vsyncpa [#allocation6], 0
    %s29 = scalar_lea.sflag [#allocation6], 1
    %30 = vsyncpa %s29, 0
    %31 = vsyncpa [#allocation9], 0
    %s32 = scalar_lea.sflag [#allocation9], 1
    %33 = vsyncpa %s32, 0
    %34 = vsyncpa [#allocation12], 0
    %s35 = scalar_lea.sflag [#allocation12], 1
    %36 = vsyncpa %s35, 0
    %37 = vsyncpa [#allocation4], 0
    %38 = vsyncpa [#allocation16], 0
    loop: start=0, step=1, limit=4
    $region2: #{tpu_custom_call.1} parent=1 // loop_pre_header
      _
    $region3: #{tpu_custom_call.1} parent=1 // loop_header
      %s40 = sphi 0, %s44
      %p41 = scmp.ge.s32.totalorder %s40, 4
      %s48 = sphi 0, %s48
      %s50 = sphi 0, %s48
      %s51 = sphi 0, %s50
      %s65 = sphi 0, %s51
      %s69 = sphi 0, %s69
      %s71 = sphi 0, %s69
      %s72 = sphi 0, %s71
      %s86 = sphi 0, %s72
      %s92 = sphi 0, %s94
      %s95 = sphi 0, %s92
      %s96 = sphi 0, %s95
      %s112 = sphi 0, %s96
      %s118 = sphi 0, %s120
      %s121 = sphi 0, %s118
      %s122 = sphi 0, %s121
      %s138 = sphi 0, %s122
      %s144 = sphi 0, %s146
      %s147 = sphi 0, %s144
      %s148 = sphi 0, %s147
      %s164 = sphi 0, %s148
      %s170 = sphi 0, %s172
      %s173 = sphi 0, %s170
      %s174 = sphi 0, %s173
      %s190 = sphi 0, %s174
      %s196 = sphi 0, %s198
      %s199 = sphi 0, %s196
      %s200 = sphi 0, %s199
      %s216 = sphi 0, %s200
      %s222 = sphi 0, %s224
      %s225 = sphi 0, %s222
      %s226 = sphi 0, %s225
      %s242 = sphi 0, %s226
      %s248 = sphi 0, %s250
      %s251 = sphi 0, %s248
      %s252 = sphi 0, %s251
      %s268 = sphi 0, %s252
      %s274 = sphi 0, %s276
      %s277 = sphi 0, %s274
      %s278 = sphi 0, %s277
      %s294 = sphi 0, %s278
      %s300 = sphi 0, %s302
      %s303 = sphi 0, %s300
      %s304 = sphi 0, %s303
      %s320 = sphi 0, %s304
      %s326 = sphi 0, %s328
      %s329 = sphi 0, %s326
      %s330 = sphi 0, %s329
      %s346 = sphi 0, %s330
      %s352 = sphi 0, %s354
      %s355 = sphi 0, %s352
      %s356 = sphi 0, %s355
      %s372 = sphi 0, %s356
      %s378 = sphi 0, %s380
      %s381 = sphi 0, %s378
      %s382 = sphi 0, %s381
      %s398 = sphi 0, %s382
      %s404 = sphi 0, %s406
      %s407 = sphi 0, %s404
      %s408 = sphi 0, %s407
      %s424 = sphi 0, %s408
      %s430 = sphi 0, %s432
      %s433 = sphi 0, %s430
      %s434 = sphi 0, %s433
      %s450 = sphi 0, %s434
      %s454 = sphi 0, %s454
      %s456 = sphi 0, %s454
      %s457 = sphi 0, %s456
      %s471 = sphi 0, %s457
      %s475 = sphi 0, %s475
      %s477 = sphi 0, %s475
      %s478 = sphi 0, %s477
      %s492 = sphi 0, %s478
      %s496 = sphi 0, %s496
      %s498 = sphi 0, %s496
      %s499 = sphi 0, %s498
      %s513 = sphi 0, %s499
      %s517 = sphi 0, %s517
      %s519 = sphi 0, %s517
      %s520 = sphi 0, %s519
      %s534 = sphi 0, %s520
    $region4: #{tpu_custom_call.1} parent=1 // loop_header_branch
      %43 = sbr.rel (%p41) target = $region8
    $region5: #{tpu_custom_call.1} parent=1 // loop_body
      %s45 = ssub.s32 %s40, 1
      %s46 = ssub.s32 %s40, 2
      %s47 = sadd.s32 %s40, 1
      %s49 = sadd.s32 %s48, 1
      %p52 = scmp.eq.s32.totalorder %s40, 1
      %p53 = scmp.ne.s32.totalorder %s48, %s50
      %p54 = scmp.eq.s32.totalorder %s40, 0
      %p55 = por %p53, %p54
      %p56 = scmp.ne.s32.totalorder %s48, %s50
      %p57 = scmp.eq.s32.totalorder %s45, 1
      %p58 = por %p56, %p57
      %p59 = scmp.ne.s32.totalorder %s50, %s51
      %p60 = scmp.eq.s32.totalorder %s45, 0
      %p61 = por %p59, %p60
      %p62 = scmp.ne.s32.totalorder %s50, %s51
      %p63 = scmp.eq.s32.totalorder %s46, 1
      %p64 = por %p62, %p63
      %p66 = scmp.ne.s32.totalorder %s51, %s65
      %p67 = scmp.eq.s32.totalorder %s46, 0
      %p68 = por %p66, %p67
      %s70 = sadd.s32 %s69, 1
      %p73 = scmp.eq.s32.totalorder %s40, 1
      %p74 = scmp.ne.s32.totalorder %s69, %s71
      %p75 = scmp.eq.s32.totalorder %s40, 0
      %p76 = por %p74, %p75
      %p77 = scmp.ne.s32.totalorder %s69, %s71
      %p78 = scmp.eq.s32.totalorder %s45, 1
      %p79 = por %p77, %p78
      %p80 = scmp.ne.s32.totalorder %s71, %s72
      %p81 = scmp.eq.s32.totalorder %s45, 0
      %p82 = por %p80, %p81
      %p83 = scmp.ne.s32.totalorder %s71, %s72
      %p84 = scmp.eq.s32.totalorder %s46, 1
      %p85 = por %p83, %p84
      %p87 = scmp.ne.s32.totalorder %s72, %s86
      %p88 = scmp.eq.s32.totalorder %s46, 0
      %p89 = por %p87, %p88
      %s90 = ssub.s32 %s40, %s47
      %p91 = scmp.eq.s32.totalorder %s90, 0
      %s93 = sadd.s32 %s92, 1
      %s94 = scalar_select %p91, %s92, %s93
      %p97 = pneg %p91
      %p98 = scmp.eq.s32.totalorder %s40, 1
      %p99 = por %p97, %p98
      %p100 = scmp.ne.s32.totalorder %s92, %s95
      %p101 = scmp.eq.s32.totalorder %s40, 0
      %p102 = por %p100, %p101
      %p103 = scmp.ne.s32.totalorder %s92, %s95
      %p104 = scmp.eq.s32.totalorder %s45, 1
      %p105 = por %p103, %p104
      %p106 = scmp.ne.s32.totalorder %s95, %s96
      %p107 = scmp.eq.s32.totalorder %s45, 0
      %p108 = por %p106, %p107
      %p109 = scmp.ne.s32.totalorder %s95, %s96
      %p110 = scmp.eq.s32.totalorder %s46, 1
      %p111 = por %p109, %p110
      %p113 = scmp.ne.s32.totalorder %s96, %s112
      %p114 = scmp.eq.s32.totalorder %s46, 0
      %p115 = por %p113, %p114
      %s116 = ssub.s32 %s40, %s47
      %p117 = scmp.eq.s32.totalorder %s116, 0
      %s119 = sadd.s32 %s118, 1
      %s120 = scalar_select %p117, %s118, %s119
      %p123 = pneg %p117
      %p124 = scmp.eq.s32.totalorder %s40, 1
      %p125 = por %p123, %p124
      %p126 = scmp.ne.s32.totalorder %s118, %s121
      %p127 = scmp.eq.s32.totalorder %s40, 0
      %p128 = por %p126, %p127
      %p129 = scmp.ne.s32.totalorder %s118, %s121
      %p130 = scmp.eq.s32.totalorder %s45, 1
      %p131 = por %p129, %p130
      %p132 = scmp.ne.s32.totalorder %s121, %s122
      %p133 = scmp.eq.s32.totalorder %s45, 0
      %p134 = por %p132, %p133
      %p135 = scmp.ne.s32.totalorder %s121, %s122
      %p136 = scmp.eq.s32.totalorder %s46, 1
      %p137 = por %p135, %p136
      %p139 = scmp.ne.s32.totalorder %s122, %s138
      %p140 = scmp.eq.s32.totalorder %s46, 0
      %p141 = por %p139, %p140
      %s142 = ssub.s32 %s40, %s47
      %p143 = scmp.eq.s32.totalorder %s142, 0
      %s145 = sadd.s32 %s144, 1
      %s146 = scalar_select %p143, %s144, %s145
      %p149 = pneg %p143
      %p150 = scmp.eq.s32.totalorder %s40, 1
      %p151 = por %p149, %p150
      %p152 = scmp.ne.s32.totalorder %s144, %s147
      %p153 = scmp.eq.s32.totalorder %s40, 0
      %p154 = por %p152, %p153
      %p155 = scmp.ne.s32.totalorder %s144, %s147
      %p156 = scmp.eq.s32.totalorder %s45, 1
      %p157 = por %p155, %p156
      %p158 = scmp.ne.s32.totalorder %s147, %s148
      %p159 = scmp.eq.s32.totalorder %s45, 0
      %p160 = por %p158, %p159
      %p161 = scmp.ne.s32.totalorder %s147, %s148
      %p162 = scmp.eq.s32.totalorder %s46, 1
      %p163 = por %p161, %p162
      %p165 = scmp.ne.s32.totalorder %s148, %s164
      %p166 = scmp.eq.s32.totalorder %s46, 0
      %p167 = por %p165, %p166
      %s168 = ssub.s32 %s40, %s47
      %p169 = scmp.eq.s32.totalorder %s168, 0
      %s171 = sadd.s32 %s170, 1
      %s172 = scalar_select %p169, %s170, %s171
      %p175 = pneg %p169
      %p176 = scmp.eq.s32.totalorder %s40, 1
      %p177 = por %p175, %p176
      %p178 = scmp.ne.s32.totalorder %s170, %s173
      %p179 = scmp.eq.s32.totalorder %s40, 0
      %p180 = por %p178, %p179
      %p181 = scmp.ne.s32.totalorder %s170, %s173
      %p182 = scmp.eq.s32.totalorder %s45, 1
      %p183 = por %p181, %p182
      %p184 = scmp.ne.s32.totalorder %s173, %s174
      %p185 = scmp.eq.s32.totalorder %s45, 0
      %p186 = por %p184, %p185
      %p187 = scmp.ne.s32.totalorder %s173, %s174
      %p188 = scmp.eq.s32.totalorder %s46, 1
      %p189 = por %p187, %p188
      %p191 = scmp.ne.s32.totalorder %s174, %s190
      %p192 = scmp.eq.s32.totalorder %s46, 0
      %p193 = por %p191, %p192
      %s194 = ssub.s32 %s40, %s47
      %p195 = scmp.eq.s32.totalorder %s194, 0
      %s197 = sadd.s32 %s196, 1
      %s198 = scalar_select %p195, %s196, %s197
      %p201 = pneg %p195
      %p202 = scmp.eq.s32.totalorder %s40, 1
      %p203 = por %p201, %p202
      %p204 = scmp.ne.s32.totalorder %s196, %s199
      %p205 = scmp.eq.s32.totalorder %s40, 0
      %p206 = por %p204, %p205
      %p207 = scmp.ne.s32.totalorder %s196, %s199
      %p208 = scmp.eq.s32.totalorder %s45, 1
      %p209 = por %p207, %p208
      %p210 = scmp.ne.s32.totalorder %s199, %s200
      %p211 = scmp.eq.s32.totalorder %s45, 0
      %p212 = por %p210, %p211
      %p213 = scmp.ne.s32.totalorder %s199, %s200
      %p214 = scmp.eq.s32.totalorder %s46, 1
      %p215 = por %p213, %p214
      %p217 = scmp.ne.s32.totalorder %s200, %s216
      %p218 = scmp.eq.s32.totalorder %s46, 0
      %p219 = por %p217, %p218
      %s220 = ssub.s32 %s40, %s47
      %p221 = scmp.eq.s32.totalorder %s220, 0
      %s223 = sadd.s32 %s222, 1
      %s224 = scalar_select %p221, %s222, %s223
      %p227 = pneg %p221
      %p228 = scmp.eq.s32.totalorder %s40, 1
      %p229 = por %p227, %p228
      %p230 = scmp.ne.s32.totalorder %s222, %s225
      %p231 = scmp.eq.s32.totalorder %s40, 0
      %p232 = por %p230, %p231
      %p233 = scmp.ne.s32.totalorder %s222, %s225
      %p234 = scmp.eq.s32.totalorder %s45, 1
      %p235 = por %p233, %p234
      %p236 = scmp.ne.s32.totalorder %s225, %s226
      %p237 = scmp.eq.s32.totalorder %s45, 0
      %p238 = por %p236, %p237
      %p239 = scmp.ne.s32.totalorder %s225, %s226
      %p240 = scmp.eq.s32.totalorder %s46, 1
      %p241 = por %p239, %p240
      %p243 = scmp.ne.s32.totalorder %s226, %s242
      %p244 = scmp.eq.s32.totalorder %s46, 0
      %p245 = por %p243, %p244
      %s246 = ssub.s32 %s40, %s47
      %p247 = scmp.eq.s32.totalorder %s246, 0
      %s249 = sadd.s32 %s248, 1
      %s250 = scalar_select %p247, %s248, %s249
      %p253 = pneg %p247
      %p254 = scmp.eq.s32.totalorder %s40, 1
      %p255 = por %p253, %p254
      %p256 = scmp.ne.s32.totalorder %s248, %s251
      %p257 = scmp.eq.s32.totalorder %s40, 0
      %p258 = por %p256, %p257
      %p259 = scmp.ne.s32.totalorder %s248, %s251
      %p260 = scmp.eq.s32.totalorder %s45, 1
      %p261 = por %p259, %p260
      %p262 = scmp.ne.s32.totalorder %s251, %s252
      %p263 = scmp.eq.s32.totalorder %s45, 0
      %p264 = por %p262, %p263
      %p265 = scmp.ne.s32.totalorder %s251, %s252
      %p266 = scmp.eq.s32.totalorder %s46, 1
      %p267 = por %p265, %p266
      %p269 = scmp.ne.s32.totalorder %s252, %s268
      %p270 = scmp.eq.s32.totalorder %s46, 0
      %p271 = por %p269, %p270
      %s272 = ssub.s32 %s40, %s47
      %p273 = scmp.eq.s32.totalorder %s272, 0
      %s275 = sadd.s32 %s274, 1
      %s276 = scalar_select %p273, %s274, %s275
      %p279 = pneg %p273
      %p280 = scmp.eq.s32.totalorder %s40, 1
      %p281 = por %p279, %p280
      %p282 = scmp.ne.s32.totalorder %s274, %s277
      %p283 = scmp.eq.s32.totalorder %s40, 0
      %p284 = por %p282, %p283
      %p285 = scmp.ne.s32.totalorder %s274, %s277
      %p286 = scmp.eq.s32.totalorder %s45, 1
      %p287 = por %p285, %p286
      %p288 = scmp.ne.s32.totalorder %s277, %s278
      %p289 = scmp.eq.s32.totalorder %s45, 0
      %p290 = por %p288, %p289
      %p291 = scmp.ne.s32.totalorder %s277, %s278
      %p292 = scmp.eq.s32.totalorder %s46, 1
      %p293 = por %p291, %p292
      %p295 = scmp.ne.s32.totalorder %s278, %s294
      %p296 = scmp.eq.s32.totalorder %s46, 0
      %p297 = por %p295, %p296
      %s298 = ssub.s32 %s40, %s47
      %p299 = scmp.eq.s32.totalorder %s298, 0
      %s301 = sadd.s32 %s300, 1
      %s302 = scalar_select %p299, %s300, %s301
      %p305 = pneg %p299
      %p306 = scmp.eq.s32.totalorder %s40, 1
      %p307 = por %p305, %p306
      %p308 = scmp.ne.s32.totalorder %s300, %s303
      %p309 = scmp.eq.s32.totalorder %s40, 0
      %p310 = por %p308, %p309
      %p311 = scmp.ne.s32.totalorder %s300, %s303
      %p312 = scmp.eq.s32.totalorder %s45, 1
      %p313 = por %p311, %p312
      %p314 = scmp.ne.s32.totalorder %s303, %s304
      %p315 = scmp.eq.s32.totalorder %s45, 0
      %p316 = por %p314, %p315
      %p317 = scmp.ne.s32.totalorder %s303, %s304
      %p318 = scmp.eq.s32.totalorder %s46, 1
      %p319 = por %p317, %p318
      %p321 = scmp.ne.s32.totalorder %s304, %s320
      %p322 = scmp.eq.s32.totalorder %s46, 0
      %p323 = por %p321, %p322
      %s324 = ssub.s32 %s40, %s47
      %p325 = scmp.eq.s32.totalorder %s324, 0
      %s327 = sadd.s32 %s326, 1
      %s328 = scalar_select %p325, %s326, %s327
      %p331 = pneg %p325
      %p332 = scmp.eq.s32.totalorder %s40, 1
      %p333 = por %p331, %p332
      %p334 = scmp.ne.s32.totalorder %s326, %s329
      %p335 = scmp.eq.s32.totalorder %s40, 0
      %p336 = por %p334, %p335
      %p337 = scmp.ne.s32.totalorder %s326, %s329
      %p338 = scmp.eq.s32.totalorder %s45, 1
      %p339 = por %p337, %p338
      %p340 = scmp.ne.s32.totalorder %s329, %s330
      %p341 = scmp.eq.s32.totalorder %s45, 0
      %p342 = por %p340, %p341
      %p343 = scmp.ne.s32.totalorder %s329, %s330
      %p344 = scmp.eq.s32.totalorder %s46, 1
      %p345 = por %p343, %p344
      %p347 = scmp.ne.s32.totalorder %s330, %s346
      %p348 = scmp.eq.s32.totalorder %s46, 0
      %p349 = por %p347, %p348
      %s350 = ssub.s32 %s40, %s47
      %p351 = scmp.eq.s32.totalorder %s350, 0
      %s353 = sadd.s32 %s352, 1
      %s354 = scalar_select %p351, %s352, %s353
      %p357 = pneg %p351
      %p358 = scmp.eq.s32.totalorder %s40, 1
      %p359 = por %p357, %p358
      %p360 = scmp.ne.s32.totalorder %s352, %s355
      %p361 = scmp.eq.s32.totalorder %s40, 0
      %p362 = por %p360, %p361
      %p363 = scmp.ne.s32.totalorder %s352, %s355
      %p364 = scmp.eq.s32.totalorder %s45, 1
      %p365 = por %p363, %p364
      %p366 = scmp.ne.s32.totalorder %s355, %s356
      %p367 = scmp.eq.s32.totalorder %s45, 0
      %p368 = por %p366, %p367
      %p369 = scmp.ne.s32.totalorder %s355, %s356
      %p370 = scmp.eq.s32.totalorder %s46, 1
      %p371 = por %p369, %p370
      %p373 = scmp.ne.s32.totalorder %s356, %s372
      %p374 = scmp.eq.s32.totalorder %s46, 0
      %p375 = por %p373, %p374
      %s376 = ssub.s32 %s40, %s47
      %p377 = scmp.eq.s32.totalorder %s376, 0
      %s379 = sadd.s32 %s378, 1
      %s380 = scalar_select %p377, %s378, %s379
      %p383 = pneg %p377
      %p384 = scmp.eq.s32.totalorder %s40, 1
      %p385 = por %p383, %p384
      %p386 = scmp.ne.s32.totalorder %s378, %s381
      %p387 = scmp.eq.s32.totalorder %s40, 0
      %p388 = por %p386, %p387
      %p389 = scmp.ne.s32.totalorder %s378, %s381
      %p390 = scmp.eq.s32.totalorder %s45, 1
      %p391 = por %p389, %p390
      %p392 = scmp.ne.s32.totalorder %s381, %s382
      %p393 = scmp.eq.s32.totalorder %s45, 0
      %p394 = por %p392, %p393
      %p395 = scmp.ne.s32.totalorder %s381, %s382
      %p396 = scmp.eq.s32.totalorder %s46, 1
      %p397 = por %p395, %p396
      %p399 = scmp.ne.s32.totalorder %s382, %s398
      %p400 = scmp.eq.s32.totalorder %s46, 0
      %p401 = por %p399, %p400
      %s402 = ssub.s32 %s40, %s47
      %p403 = scmp.eq.s32.totalorder %s402, 0
      %s405 = sadd.s32 %s404, 1
      %s406 = scalar_select %p403, %s404, %s405
      %p409 = pneg %p403
      %p410 = scmp.eq.s32.totalorder %s40, 1
      %p411 = por %p409, %p410
      %p412 = scmp.ne.s32.totalorder %s404, %s407
      %p413 = scmp.eq.s32.totalorder %s40, 0
      %p414 = por %p412, %p413
      %p415 = scmp.ne.s32.totalorder %s404, %s407
      %p416 = scmp.eq.s32.totalorder %s45, 1
      %p417 = por %p415, %p416
      %p418 = scmp.ne.s32.totalorder %s407, %s408
      %p419 = scmp.eq.s32.totalorder %s45, 0
      %p420 = por %p418, %p419
      %p421 = scmp.ne.s32.totalorder %s407, %s408
      %p422 = scmp.eq.s32.totalorder %s46, 1
      %p423 = por %p421, %p422
      %p425 = scmp.ne.s32.totalorder %s408, %s424
      %p426 = scmp.eq.s32.totalorder %s46, 0
      %p427 = por %p425, %p426
      %s428 = ssub.s32 %s40, %s47
      %p429 = scmp.eq.s32.totalorder %s428, 0
      %s431 = sadd.s32 %s430, 1
      %s432 = scalar_select %p429, %s430, %s431
      %p435 = pneg %p429
      %p436 = scmp.eq.s32.totalorder %s40, 1
      %p437 = por %p435, %p436
      %p438 = scmp.ne.s32.totalorder %s430, %s433
      %p439 = scmp.eq.s32.totalorder %s40, 0
      %p440 = por %p438, %p439
      %p441 = scmp.ne.s32.totalorder %s430, %s433
      %p442 = scmp.eq.s32.totalorder %s45, 1
      %p443 = por %p441, %p442
      %p444 = scmp.ne.s32.totalorder %s433, %s434
      %p445 = scmp.eq.s32.totalorder %s45, 0
      %p446 = por %p444, %p445
      %p447 = scmp.ne.s32.totalorder %s433, %s434
      %p448 = scmp.eq.s32.totalorder %s46, 1
      %p449 = por %p447, %p448
      %p451 = scmp.ne.s32.totalorder %s434, %s450
      %p452 = scmp.eq.s32.totalorder %s46, 0
      %p453 = por %p451, %p452
      %s455 = sadd.s32 %s454, 1
      %p458 = scmp.eq.s32.totalorder %s40, 1
      %p459 = scmp.ne.s32.totalorder %s454, %s456
      %p460 = scmp.eq.s32.totalorder %s40, 0
      %p461 = por %p459, %p460
      %p462 = scmp.ne.s32.totalorder %s454, %s456
      %p463 = scmp.eq.s32.totalorder %s45, 1
      %p464 = por %p462, %p463
      %p465 = scmp.ne.s32.totalorder %s456, %s457
      %p466 = scmp.eq.s32.totalorder %s45, 0
      %p467 = por %p465, %p466
      %p468 = scmp.ne.s32.totalorder %s456, %s457
      %p469 = scmp.eq.s32.totalorder %s46, 1
      %p470 = por %p468, %p469
      %p472 = scmp.ne.s32.totalorder %s457, %s471
      %p473 = scmp.eq.s32.totalorder %s46, 0
      %p474 = por %p472, %p473
      %s476 = sadd.s32 %s475, 1
      %p479 = scmp.eq.s32.totalorder %s40, 1
      %p480 = scmp.ne.s32.totalorder %s475, %s477
      %p481 = scmp.eq.s32.totalorder %s40, 0
      %p482 = por %p480, %p481
      %p483 = scmp.ne.s32.totalorder %s475, %s477
      %p484 = scmp.eq.s32.totalorder %s45, 1
      %p485 = por %p483, %p484
      %p486 = scmp.ne.s32.totalorder %s477, %s478
      %p487 = scmp.eq.s32.totalorder %s45, 0
      %p488 = por %p486, %p487
      %p489 = scmp.ne.s32.totalorder %s477, %s478
      %p490 = scmp.eq.s32.totalorder %s46, 1
      %p491 = por %p489, %p490
      %p493 = scmp.ne.s32.totalorder %s478, %s492
      %p494 = scmp.eq.s32.totalorder %s46, 0
      %p495 = por %p493, %p494
      %s497 = sadd.s32 %s496, 1
      %p500 = scmp.eq.s32.totalorder %s40, 1
      %p501 = scmp.ne.s32.totalorder %s496, %s498
      %p502 = scmp.eq.s32.totalorder %s40, 0
      %p503 = por %p501, %p502
      %p504 = scmp.ne.s32.totalorder %s496, %s498
      %p505 = scmp.eq.s32.totalorder %s45, 1
      %p506 = por %p504, %p505
      %p507 = scmp.ne.s32.totalorder %s498, %s499
      %p508 = scmp.eq.s32.totalorder %s45, 0
      %p509 = por %p507, %p508
      %p510 = scmp.ne.s32.totalorder %s498, %s499
      %p511 = scmp.eq.s32.totalorder %s46, 1
      %p512 = por %p510, %p511
      %p514 = scmp.ne.s32.totalorder %s499, %s513
      %p515 = scmp.eq.s32.totalorder %s46, 0
      %p516 = por %p514, %p515
      %s518 = sadd.s32 %s517, 1
      %p521 = scmp.eq.s32.totalorder %s40, 1
      %p522 = scmp.ne.s32.totalorder %s517, %s519
      %p523 = scmp.eq.s32.totalorder %s40, 0
      %p524 = por %p522, %p523
      %p525 = scmp.ne.s32.totalorder %s517, %s519
      %p526 = scmp.eq.s32.totalorder %s45, 1
      %p527 = por %p525, %p526
      %p528 = scmp.ne.s32.totalorder %s519, %s520
      %p529 = scmp.eq.s32.totalorder %s45, 0
      %p530 = por %p528, %p529
      %p531 = scmp.ne.s32.totalorder %s519, %s520
      %p532 = scmp.eq.s32.totalorder %s46, 1
      %p533 = por %p531, %p532
      %p535 = scmp.ne.s32.totalorder %s520, %s534
      %p536 = scmp.eq.s32.totalorder %s46, 0
      %p537 = por %p535, %p536
      %p538 = scmp.le.s32.totalorder 1, %s40
      %p539 = scmp.lt.s32.totalorder %s40, 3
      %p540 = pnand %p538, %p539
      %p541 = pneg %p540
      // Predicated region
      $region9: #{tpu_custom_call.1} parent=5 // pred_check
        _
      $region10: #{tpu_custom_call.1} parent=5 // pred_check_branch
        %543 = sbr.rel (%p540) target = $region12
      $region11: #{tpu_custom_call.1} parent=5 // pred_region
        %s544 = ssub.s32 %s40, 1
        // Predicated region
        $region13: #{tpu_custom_call.1} parent=11 // pred_check
          %p545 = pneg %p61
        $region14: #{tpu_custom_call.1} parent=11 // pred_check_branch
          %547 = sbr.rel (%p545) target = $region16
        $region15: #{tpu_custom_call.1} parent=11 // pred_region
          _
        $region16: #{tpu_custom_call.1} parent=11 // pred_fallthru
          _
        // Predicated region
        $region17: #{tpu_custom_call.1} parent=11 // pred_check
          %p548 = pneg %p82
        $region18: #{tpu_custom_call.1} parent=11 // pred_check_branch
          %550 = sbr.rel (%p548) target = $region20
        $region19: #{tpu_custom_call.1} parent=11 // pred_region
          _
        $region20: #{tpu_custom_call.1} parent=11 // pred_fallthru
          _
        // Predicated region
        $region21: #{tpu_custom_call.1} parent=11 // pred_check
          %p551 = pneg %p467
        $region22: #{tpu_custom_call.1} parent=11 // pred_check_branch
          %553 = sbr.rel (%p551) target = $region24
        $region23: #{tpu_custom_call.1} parent=11 // pred_region
          _
        $region24: #{tpu_custom_call.1} parent=11 // pred_fallthru
          _
        // Predicated region
        $region25: #{tpu_custom_call.1} parent=11 // pred_check
          %p554 = pneg %p488
        $region26: #{tpu_custom_call.1} parent=11 // pred_check_branch
          %556 = sbr.rel (%p554) target = $region28
        $region27: #{tpu_custom_call.1} parent=11 // pred_region
          _
        $region28: #{tpu_custom_call.1} parent=11 // pred_fallthru
          _
      $region12: #{tpu_custom_call.1} parent=5 // pred_fallthru
        _
      %p557 = scmp.lt.s32.totalorder %s40, 2
      // Predicated region
      $region29: #{tpu_custom_call.1} parent=5 // pred_check
        %p558 = pneg %p557
      $region30: #{tpu_custom_call.1} parent=5 // pred_check_branch
        %560 = sbr.rel (%p558) target = $region32
      $region31: #{tpu_custom_call.1} parent=5 // pred_region
        // Predicated region
        $region33: #{tpu_custom_call.1} parent=31 // pred_check
          %p561 = pneg %p102
        $region34: #{tpu_custom_call.1} parent=31 // pred_check_branch
          %563 = sbr.rel (%p561) target = $region36
        $region35: #{tpu_custom_call.1} parent=31 // pred_region
          %s564 = sand.u32 %s92, 1
          %s565 = scalar_lea.sflag [#allocation3], %s564
          %s566 = sand.u32 %s92, 1
          %s567 = smul.addr %s566, 64
          %s568 = scalar_lea.vmem [#allocation2], %s567
          %570 = vsyncadd %s565, 0
          %s571 = smul.addr %s40, 16
          %s572 = smul.addr %s571, 4
          %s573 = scalar_lea.hbm %s2, %s572
          %s574 = sshll.u32 %s573, 4
          %s575 = int_to_ptr.hbm [resolvable:$true] %s574
          %s576 = sshll.u32 %s568, 4
          %s577 = int_to_ptr.vmem [resolvable:$true] %s576
          %582 = dma.hbm_to_vmem [thread:$0]  %s575, 1024, %s577, %s565, 64, 64, 4
        $region36: #{tpu_custom_call.1} parent=31 // pred_fallthru
          _
        // Predicated region
        $region37: #{tpu_custom_call.1} parent=31 // pred_check
          %p583 = pneg %p128
        $region38: #{tpu_custom_call.1} parent=31 // pred_check_branch
          %585 = sbr.rel (%p583) target = $region40
        $region39: #{tpu_custom_call.1} parent=31 // pred_region
          %p586 = scmp.lt.s32.totalorder %s40, 1
          %s587 = scalar_select %p586, %s40, 1
          %s588 = scalar_lea.vmem %s3, %s587
        $region40: #{tpu_custom_call.1} parent=31 // pred_fallthru
          _
        // Predicated region
        $region41: #{tpu_custom_call.1} parent=31 // pred_check
          %p589 = pneg %p154
        $region42: #{tpu_custom_call.1} parent=31 // pred_check_branch
          %591 = sbr.rel (%p589) target = $region44
        $region43: #{tpu_custom_call.1} parent=31 // pred_region
          %s592 = sand.u32 %s40, 1
          %s593 = scalar_lea.sflag [#allocation6], %s592
          %s594 = sand.u32 %s144, 1
          %s595 = smul.addr %s594, 64
          %s596 = scalar_lea.vmem [#allocation5], %s595
          %598 = vsyncadd %s593, 0
          %s599 = smul.addr %s40, 16
          %s600 = smul.addr %s599, 4
          %s601 = scalar_lea.hbm %s4, %s600
          %s602 = sshll.u32 %s601, 4
          %s603 = int_to_ptr.hbm [resolvable:$true] %s602
          %s604 = sshll.u32 %s596, 4
          %s605 = int_to_ptr.vmem [resolvable:$true] %s604
          %610 = dma.hbm_to_vmem [thread:$0]  %s603, 1024, %s605, %s593, 64, 64, 4
        $region44: #{tpu_custom_call.1} parent=31 // pred_fallthru
          _
        // Predicated region
        $region45: #{tpu_custom_call.1} parent=31 // pred_check
          %p611 = pneg %p180
        $region46: #{tpu_custom_call.1} parent=31 // pred_check_branch
          %613 = sbr.rel (%p611) target = $region48
        $region47: #{tpu_custom_call.1} parent=31 // pred_region
          %s614 = sand.u32 %s40, 1
          %s615 = scalar_lea.sflag [#allocation6], %s614
          %s616 = sand.u32 %s170, 1
          %s617 = smul.addr %s616, 64
          %s618 = scalar_lea.vmem [#allocation7], %s617
          %620 = vsyncadd %s615, 0
          %s621 = smul.addr %s40, 16
          %s622 = smul.addr %s621, 4
          %s623 = scalar_lea.hbm %s5, %s622
          %s624 = sshll.u32 %s623, 4
          %s625 = int_to_ptr.hbm [resolvable:$true] %s624
          %s626 = sshll.u32 %s618, 4
          %s627 = int_to_ptr.vmem [resolvable:$true] %s626
          %632 = dma.hbm_to_vmem [thread:$0]  %s625, 1024, %s627, %s615, 64, 64, 4
        $region48: #{tpu_custom_call.1} parent=31 // pred_fallthru
          _
        // Predicated region
        $region49: #{tpu_custom_call.1} parent=31 // pred_check
          %p633 = pneg %p206
        $region50: #{tpu_custom_call.1} parent=31 // pred_check_branch
          %635 = sbr.rel (%p633) target = $region52
        $region51: #{tpu_custom_call.1} parent=31 // pred_region
          %s636 = sand.u32 %s40, 1
          %s637 = scalar_lea.sflag [#allocation9], %s636
          %s638 = sand.u32 %s196, 1
          %s639 = smul.addr %s638, 64
          %s640 = scalar_lea.vmem [#allocation8], %s639
          %642 = vsyncadd %s637, 0
          %s643 = smul.addr %s40, 16
          %s644 = smul.addr %s643, 4
          %s645 = scalar_lea.hbm %s6, %s644
          %s646 = sshll.u32 %s645, 4
          %s647 = int_to_ptr.hbm [resolvable:$true] %s646
          %s648 = sshll.u32 %s640, 4
          %s649 = int_to_ptr.vmem [resolvable:$true] %s648
          %654 = dma.hbm_to_vmem [thread:$0]  %s647, 1024, %s649, %s637, 64, 64, 4
        $region52: #{tpu_custom_call.1} parent=31 // pred_fallthru
          _
        // Predicated region
        $region53: #{tpu_custom_call.1} parent=31 // pred_check
          %p655 = pneg %p232
        $region54: #{tpu_custom_call.1} parent=31 // pred_check_branch
          %657 = sbr.rel (%p655) target = $region56
        $region55: #{tpu_custom_call.1} parent=31 // pred_region
          %s658 = sand.u32 %s40, 1
          %s659 = scalar_lea.sflag [#allocation9], %s658
          %s660 = sand.u32 %s222, 1
          %s661 = smul.addr %s660, 64
          %s662 = scalar_lea.vmem [#allocation10], %s661
          %664 = vsyncadd %s659, 0
          %s665 = smul.addr %s40, 16
          %s666 = smul.addr %s665, 4
          %s667 = scalar_lea.hbm %s7, %s666
          %s668 = sshll.u32 %s667, 4
          %s669 = int_to_ptr.hbm [resolvable:$true] %s668
          %s670 = sshll.u32 %s662, 4
          %s671 = int_to_ptr.vmem [resolvable:$true] %s670
          %676 = dma.hbm_to_vmem [thread:$0]  %s669, 1024, %s671, %s659, 64, 64, 4
        $region56: #{tpu_custom_call.1} parent=31 // pred_fallthru
          _
        // Predicated region
        $region57: #{tpu_custom_call.1} parent=31 // pred_check
          %p677 = pneg %p258
        $region58: #{tpu_custom_call.1} parent=31 // pred_check_branch
          %679 = sbr.rel (%p677) target = $region60
        $region59: #{tpu_custom_call.1} parent=31 // pred_region
          %p680 = scmp.lt.s32.totalorder %s40, 1
          %s681 = scalar_select %p680, %s40, 1
          %s682 = scalar_lea.vmem %s8, %s681
        $region60: #{tpu_custom_call.1} parent=31 // pred_fallthru
          _
        // Predicated region
        $region61: #{tpu_custom_call.1} parent=31 // pred_check
          %p683 = pneg %p284
        $region62: #{tpu_custom_call.1} parent=31 // pred_check_branch
          %685 = sbr.rel (%p683) target = $region64
        $region63: #{tpu_custom_call.1} parent=31 // pred_region
          %p686 = scmp.lt.s32.totalorder %s40, 1
          %s687 = scalar_select %p686, %s40, 1
          %s688 = scalar_lea.vmem %s9, %s687
        $region64: #{tpu_custom_call.1} parent=31 // pred_fallthru
          _
        // Predicated region
        $region65: #{tpu_custom_call.1} parent=31 // pred_check
          %p689 = pneg %p310
        $region66: #{tpu_custom_call.1} parent=31 // pred_check_branch
          %691 = sbr.rel (%p689) target = $region68
        $region67: #{tpu_custom_call.1} parent=31 // pred_region
          %s692 = sand.u32 %s40, 1
          %s693 = scalar_lea.sflag [#allocation12], %s692
          %s694 = sand.u32 %s300, 1
          %s695 = smul.addr %s694, 128
          %s696 = scalar_lea.vmem [#allocation11], %s695
          %698 = vsyncadd %s693, 0
          %s699 = smul.addr %s40, 32
          %s700 = smul.addr %s699, 4
          %s701 = scalar_lea.hbm %s10, %s700
          %s702 = sshll.u32 %s701, 4
          %s703 = int_to_ptr.hbm [resolvable:$true] %s702
          %s704 = sshll.u32 %s696, 4
          %s705 = int_to_ptr.vmem [resolvable:$true] %s704
          %710 = dma.hbm_to_vmem [thread:$0]  %s703, 2048, %s705, %s693, 128, 128, 8
        $region68: #{tpu_custom_call.1} parent=31 // pred_fallthru
          _
        // Predicated region
        $region69: #{tpu_custom_call.1} parent=31 // pred_check
          %p711 = pneg %p336
        $region70: #{tpu_custom_call.1} parent=31 // pred_check_branch
          %713 = sbr.rel (%p711) target = $region72
        $region71: #{tpu_custom_call.1} parent=31 // pred_region
          %p714 = scmp.lt.s32.totalorder %s40, 1
          %s715 = scalar_select %p714, %s40, 1
          %s716 = smul.addr %s715, 2
          %s717 = scalar_lea.vmem %s11, %s716
        $region72: #{tpu_custom_call.1} parent=31 // pred_fallthru
          _
        // Predicated region
        $region73: #{tpu_custom_call.1} parent=31 // pred_check
          %p718 = pneg %p362
        $region74: #{tpu_custom_call.1} parent=31 // pred_check_branch
          %720 = sbr.rel (%p718) target = $region76
        $region75: #{tpu_custom_call.1} parent=31 // pred_region
          %s721 = sand.u32 %s40, 1
          %s722 = scalar_lea.sflag [#allocation12], %s721
          %s723 = sand.u32 %s352, 1
          %s724 = smul.addr %s723, 128
          %s725 = scalar_lea.vmem [#allocation13], %s724
          %727 = vsyncadd %s722, 0
          %s728 = smul.addr %s40, 32
          %s729 = smul.addr %s728, 4
          %s730 = scalar_lea.hbm %s12, %s729
          %s731 = sshll.u32 %s730, 4
          %s732 = int_to_ptr.hbm [resolvable:$true] %s731
          %s733 = sshll.u32 %s725, 4
          %s734 = int_to_ptr.vmem [resolvable:$true] %s733
          %739 = dma.hbm_to_vmem [thread:$0]  %s732, 2048, %s734, %s722, 64, 64, 4
        $region76: #{tpu_custom_call.1} parent=31 // pred_fallthru
          _
        // Predicated region
        $region77: #{tpu_custom_call.1} parent=31 // pred_check
          %p740 = pneg %p388
        $region78: #{tpu_custom_call.1} parent=31 // pred_check_branch
          %742 = sbr.rel (%p740) target = $region80
        $region79: #{tpu_custom_call.1} parent=31 // pred_region
          %p743 = scmp.lt.s32.totalorder %s40, 1
          %s744 = scalar_select %p743, %s40, 1
          %s745 = scalar_lea.vmem %s13, %s744
        $region80: #{tpu_custom_call.1} parent=31 // pred_fallthru
          _
        // Predicated region
        $region81: #{tpu_custom_call.1} parent=31 // pred_check
          %p746 = pneg %p414
        $region82: #{tpu_custom_call.1} parent=31 // pred_check_branch
          %748 = sbr.rel (%p746) target = $region84
        $region83: #{tpu_custom_call.1} parent=31 // pred_region
          %p749 = scmp.lt.s32.totalorder %s40, 1
          %s750 = scalar_select %p749, %s40, 1
          %s751 = scalar_lea.vmem %s14, %s750
        $region84: #{tpu_custom_call.1} parent=31 // pred_fallthru
          _
        // Predicated region
        $region85: #{tpu_custom_call.1} parent=31 // pred_check
          %p752 = pneg %p440
        $region86: #{tpu_custom_call.1} parent=31 // pred_check_branch
          %754 = sbr.rel (%p752) target = $region88
        $region87: #{tpu_custom_call.1} parent=31 // pred_region
          %p755 = scmp.lt.s32.totalorder %s40, 1
          %s756 = scalar_select %p755, %s40, 1
          %s757 = scalar_lea.vmem %s15, %s756
        $region88: #{tpu_custom_call.1} parent=31 // pred_fallthru
          _
      $region32: #{tpu_custom_call.1} parent=5 // pred_fallthru
        _
      %p758 = scmp.le.s32.totalorder 1, %s40
      %p759 = scmp.lt.s32.totalorder %s40, 3
      %p760 = pnand %p758, %p759
      %p761 = pneg %p760
      // Predicated region
      $region89: #{tpu_custom_call.1} parent=5 // pred_check
        _
      $region90: #{tpu_custom_call.1} parent=5 // pred_check_branch
        %763 = sbr.rel (%p760) target = $region92
      $region91: #{tpu_custom_call.1} parent=5 // pred_region
        %s764 = ssub.s32 %s40, 1
        %s765 = sand.u32 %s95, 1
        %s766 = scalar_lea.sflag [#allocation3], %s765
        %s767 = sand.u32 %s95, 1
        %s768 = smul.addr %s767, 64
        %s769 = scalar_lea.vmem [#allocation2], %s768
        // Predicated region
        $region93: #{tpu_custom_call.1} parent=91 // pred_check
          %p770 = pneg %p108
        $region94: #{tpu_custom_call.1} parent=91 // pred_check_branch
          %772 = sbr.rel (%p770) target = $region96
        $region95: #{tpu_custom_call.1} parent=91 // pred_region
          %774 = dma.done %s766, 1024
        $region96: #{tpu_custom_call.1} parent=91 // pred_fallthru
          _
        %s775 = sand.u32 %s45, 1
        %s776 = scalar_lea.sflag [#allocation6], %s775
        %s777 = sand.u32 %s147, 1
        %s778 = smul.addr %s777, 64
        %s779 = scalar_lea.vmem [#allocation5], %s778
        // Predicated region
        $region97: #{tpu_custom_call.1} parent=91 // pred_check
          %p780 = pneg %p160
        $region98: #{tpu_custom_call.1} parent=91 // pred_check_branch
          %782 = sbr.rel (%p780) target = $region100
        $region99: #{tpu_custom_call.1} parent=91 // pred_region
          %784 = dma.done %s776, 1024
        $region100: #{tpu_custom_call.1} parent=91 // pred_fallthru
          _
        %s785 = sand.u32 %s45, 1
        %s786 = scalar_lea.sflag [#allocation6], %s785
        %s787 = sand.u32 %s173, 1
        %s788 = smul.addr %s787, 64
        %s789 = scalar_lea.vmem [#allocation7], %s788
        // Predicated region
        $region101: #{tpu_custom_call.1} parent=91 // pred_check
          %p790 = pneg %p186
        $region102: #{tpu_custom_call.1} parent=91 // pred_check_branch
          %792 = sbr.rel (%p790) target = $region104
        $region103: #{tpu_custom_call.1} parent=91 // pred_region
          %794 = dma.done %s786, 1024
        $region104: #{tpu_custom_call.1} parent=91 // pred_fallthru
          _
        %s795 = sand.u32 %s45, 1
        %s796 = scalar_lea.sflag [#allocation9], %s795
        %s797 = sand.u32 %s199, 1
        %s798 = smul.addr %s797, 64
        %s799 = scalar_lea.vmem [#allocation8], %s798
        // Predicated region
        $region105: #{tpu_custom_call.1} parent=91 // pred_check
          %p800 = pneg %p212
        $region106: #{tpu_custom_call.1} parent=91 // pred_check_branch
          %802 = sbr.rel (%p800) target = $region108
        $region107: #{tpu_custom_call.1} parent=91 // pred_region
          %804 = dma.done %s796, 1024
        $region108: #{tpu_custom_call.1} parent=91 // pred_fallthru
          _
        %s805 = sand.u32 %s45, 1
        %s806 = scalar_lea.sflag [#allocation9], %s805
        %s807 = sand.u32 %s225, 1
        %s808 = smul.addr %s807, 64
        %s809 = scalar_lea.vmem [#allocation10], %s808
        // Predicated region
        $region109: #{tpu_custom_call.1} parent=91 // pred_check
          %p810 = pneg %p238
        $region110: #{tpu_custom_call.1} parent=91 // pred_check_branch
          %812 = sbr.rel (%p810) target = $region112
        $region111: #{tpu_custom_call.1} parent=91 // pred_region
          %814 = dma.done %s806, 1024
        $region112: #{tpu_custom_call.1} parent=91 // pred_fallthru
          _
        %s815 = sand.u32 %s45, 1
        %s816 = scalar_lea.sflag [#allocation12], %s815
        %s817 = sand.u32 %s303, 1
        %s818 = smul.addr %s817, 128
        %s819 = scalar_lea.vmem [#allocation11], %s818
        // Predicated region
        $region113: #{tpu_custom_call.1} parent=91 // pred_check
          %p820 = pneg %p316
        $region114: #{tpu_custom_call.1} parent=91 // pred_check_branch
          %822 = sbr.rel (%p820) target = $region116
        $region115: #{tpu_custom_call.1} parent=91 // pred_region
          %824 = dma.done %s816, 2048
        $region116: #{tpu_custom_call.1} parent=91 // pred_fallthru
          _
        %s825 = sand.u32 %s45, 1
        %s826 = scalar_lea.sflag [#allocation12], %s825
        %s827 = sand.u32 %s355, 1
        %s828 = smul.addr %s827, 128
        %s829 = scalar_lea.vmem [#allocation13], %s828
        // Predicated region
        $region117: #{tpu_custom_call.1} parent=91 // pred_check
          %p830 = pneg %p368
        $region118: #{tpu_custom_call.1} parent=91 // pred_check_branch
          %832 = sbr.rel (%p830) target = $region120
        $region119: #{tpu_custom_call.1} parent=91 // pred_region
          %834 = dma.done %s826, 2048
        $region120: #{tpu_custom_call.1} parent=91 // pred_fallthru
          _
        %p835 = pneg %p61
        %p836 = pneg %p58
        %p837 = pneg %p82
        %p838 = pneg %p79
        %s839 = sand.u32 %s95, 1
        %s840 = scalar_lea.sflag [#allocation3], %s839
        %s841 = sand.u32 %s95, 1
        %s842 = smul.addr %s841, 64
        %s843 = scalar_lea.vmem [#allocation2], %s842
        %p844 = pneg %p108
        %p845 = pneg %p105
        %p846 = scmp.lt.s32.totalorder %s45, 1
        %s847 = scalar_select %p846, %s45, 1
        %s848 = scalar_lea.vmem %s3, %s847
        %p849 = pneg %p134
        %p850 = pneg %p131
        %s851 = sand.u32 %s45, 1
        %s852 = scalar_lea.sflag [#allocation6], %s851
        %s853 = sand.u32 %s147, 1
        %s854 = smul.addr %s853, 64
        %s855 = scalar_lea.vmem [#allocation5], %s854
        %p856 = pneg %p160
        %p857 = pneg %p157
        %s858 = sand.u32 %s45, 1
        %s859 = scalar_lea.sflag [#allocation6], %s858
        %s860 = sand.u32 %s173, 1
        %s861 = smul.addr %s860, 64
        %s862 = scalar_lea.vmem [#allocation7], %s861
        %p863 = pneg %p186
        %p864 = pneg %p183
        %s865 = sand.u32 %s45, 1
        %s866 = scalar_lea.sflag [#allocation9], %s865
        %s867 = sand.u32 %s199, 1
        %s868 = smul.addr %s867, 64
        %s869 = scalar_lea.vmem [#allocation8], %s868
        %p870 = pneg %p212
        %p871 = pneg %p209
        %s872 = sand.u32 %s45, 1
        %s873 = scalar_lea.sflag [#allocation9], %s872
        %s874 = sand.u32 %s225, 1
        %s875 = smul.addr %s874, 64
        %s876 = scalar_lea.vmem [#allocation10], %s875
        %p877 = pneg %p238
        %p878 = pneg %p235
        %p879 = scmp.lt.s32.totalorder %s45, 1
        %s880 = scalar_select %p879, %s45, 1
        %s881 = scalar_lea.vmem %s8, %s880
        %p882 = pneg %p264
        %p883 = pneg %p261
        %p884 = scmp.lt.s32.totalorder %s45, 1
        %s885 = scalar_select %p884, %s45, 1
        %s886 = scalar_lea.vmem %s9, %s885
        %p887 = pneg %p290
        %p888 = pneg %p287
        %s889 = sand.u32 %s45, 1
        %s890 = scalar_lea.sflag [#allocation12], %s889
        %s891 = sand.u32 %s303, 1
        %s892 = smul.addr %s891, 128
        %s893 = scalar_lea.vmem [#allocation11], %s892
        %p894 = pneg %p316
        %p895 = pneg %p313
        %p896 = scmp.lt.s32.totalorder %s45, 1
        %s897 = scalar_select %p896, %s45, 1
        %s898 = smul.addr %s897, 2
        %s899 = scalar_lea.vmem %s11, %s898
        %p900 = pneg %p342
        %p901 = pneg %p339
        %s902 = sand.u32 %s45, 1
        %s903 = scalar_lea.sflag [#allocation12], %s902
        %s904 = sand.u32 %s355, 1
        %s905 = smul.addr %s904, 128
        %s906 = scalar_lea.vmem [#allocation13], %s905
        %p907 = pneg %p368
        %p908 = pneg %p365
        %p909 = scmp.lt.s32.totalorder %s45, 1
        %s910 = scalar_select %p909, %s45, 1
        %s911 = scalar_lea.vmem %s13, %s910
        %p912 = pneg %p394
        %p913 = pneg %p391
        %p914 = scmp.lt.s32.totalorder %s45, 1
        %s915 = scalar_select %p914, %s45, 1
        %s916 = scalar_lea.vmem %s14, %s915
        %p917 = pneg %p420
        %p918 = pneg %p417
        %p919 = scmp.lt.s32.totalorder %s45, 1
        %s920 = scalar_select %p919, %s45, 1
        %s921 = scalar_lea.vmem %s15, %s920
        %p922 = pneg %p446
        %p923 = pneg %p443
        %p924 = pneg %p467
        %p925 = pneg %p464
        %p926 = pneg %p488
        %p927 = pneg %p485
        %p928 = pneg %p509
        %p929 = pneg %p506
        %p930 = pneg %p530
        %p931 = pneg %p527
        %p932 = scmp.lt.s32.totalorder %s45, 1
        %s933 = scalar_select %p932, %s45, 1
        %s934 = scalar_lea.vmem %s3, %s933
        %p935 = scmp.lt.s32.totalorder %s45, 1
        %s936 = scalar_select %p935, %s45, 1
        %s937 = scalar_lea.vmem %s8, %s936
        %p938 = scmp.lt.s32.totalorder %s45, 1
        %s939 = scalar_select %p938, %s45, 1
        %s940 = scalar_lea.vmem %s9, %s939
        %p941 = scmp.lt.s32.totalorder %s45, 1
        %s942 = scalar_select %p941, %s45, 1
        %s943 = smul.addr %s942, 2
        %s944 = scalar_lea.vmem %s11, %s943
        %p945 = scmp.lt.s32.totalorder %s45, 1
        %s946 = scalar_select %p945, %s45, 1
        %s947 = scalar_lea.vmem %s13, %s946
        %p948 = scmp.lt.s32.totalorder %s45, 1
        %s949 = scalar_select %p948, %s45, 1
        %s950 = scalar_lea.vmem %s14, %s949
        %p951 = scmp.lt.s32.totalorder %s45, 1
        %s952 = scalar_select %p951, %s45, 1
        %s953 = scalar_lea.vmem %s15, %s952
        %p955 = scmp.eq.s32.totalorder %s45, 0
        // Predicated region
        $region121: #{tpu_custom_call.1} parent=91 // pred_check
          %p956 = pneg %p955
        $region122: #{tpu_custom_call.1} parent=91 // pred_check_branch
          %958 = sbr.rel (%p956) target = $region124
        $region123: #{tpu_custom_call.1} parent=91 // pred_region
          %v959 = vld [vmem:[%s0] sm:$0xff]
          %v960 = vld [vmem:[%s0 + $0x8] sm:$0xff]
          %961 = vst [vmem:[#allocation14] sm:$0xff] %v959
          %962 = vst [vmem:[#allocation14 + $0x8] sm:$0xff] %v960
          %vm963 = vcmask 293888
          %964 = vst.msk [vmem:[#allocation15] sm:$0xff] %vm963, 0.0
          %965 = vst.msk [vmem:[#allocation15 + $0x8] sm:$0xff] %vm963, 0.0
        $region124: #{tpu_custom_call.1} parent=91 // pred_fallthru
          _
        %v966 = vld [vmem:[#allocation14] sm:$0xff]
        %v967 = vld [vmem:[#allocation14 + $0x8] sm:$0xff]
        %v968 = vpack.c.bf16 %v967, %v966
        %v969 = vld [vmem:[%s1] sm:$0xf]
        %v970 = vld [vmem:[%s1 + $0x4] sm:$0xf]
        %v971 = vld [vmem:[%s769] sm:$0xf]
        %v972 = vld [vmem:[%s769 + $0x4] sm:$0xf]
        %v973 = vld [vmem:[%s769 + $0x8] sm:$0xf]
        %v974 = vld [vmem:[%s769 + $0xc] sm:$0xf]
        %v975 = vld [vmem:[%s769 + $0x10] sm:$0xf]
        %v976 = vld [vmem:[%s769 + $0x14] sm:$0xf]
        %v977 = vld [vmem:[%s769 + $0x18] sm:$0xf]
        %v978 = vld [vmem:[%s769 + $0x1c] sm:$0xf]
        %v979 = vld [vmem:[%s769 + $0x20] sm:$0xf]
        %v980 = vld [vmem:[%s769 + $0x24] sm:$0xf]
        %v981 = vld [vmem:[%s769 + $0x28] sm:$0xf]
        %v982 = vld [vmem:[%s769 + $0x2c] sm:$0xf]
        %v983 = vld [vmem:[%s769 + $0x30] sm:$0xf]
        %v984 = vld [vmem:[%s769 + $0x34] sm:$0xf]
        %v985 = vld [vmem:[%s769 + $0x38] sm:$0xf]
        %v986 = vld [vmem:[%s769 + $0x3c] sm:$0xf]
        %v987 = vld [vmem:[%s934] sm:$0x1]
        %v989 = vperm.slane %v987, 0
        %v1007 = vunpack.c.l.b16 %v971
        %v1008 = vunpack.c.l.b16 %v972
        %v1009 = vunpack.c.l.b16 %v973
        %v1010 = vunpack.c.l.b16 %v974
        %v1011 = vunpack.c.l.b16 %v975
        %v1012 = vunpack.c.l.b16 %v976
        %v1013 = vunpack.c.l.b16 %v977
        %v1014 = vunpack.c.l.b16 %v978
        %v1015 = vunpack.c.l.b16 %v979
        %v1016 = vunpack.c.l.b16 %v980
        %v1017 = vunpack.c.l.b16 %v981
        %v1018 = vunpack.c.l.b16 %v982
        %v1019 = vunpack.c.l.b16 %v983
        %v1020 = vunpack.c.l.b16 %v984
        %v1021 = vunpack.c.l.b16 %v985
        %v1022 = vunpack.c.l.b16 %v986
        %v1023 = vpack.c.b16 %v1008, %v1007
        %v1024 = vpack.c.b16 %v1010, %v1009
        %v1025 = vpack.c.b16 %v1012, %v1011
        %v1026 = vpack.c.b16 %v1014, %v1013
        %v1027 = vpack.c.b16 %v1016, %v1015
        %v1028 = vpack.c.b16 %v1018, %v1017
        %v1029 = vpack.c.b16 %v1020, %v1019
        %v1030 = vpack.c.b16 %v1022, %v1021
        %1039 = vmatpush.bf16.msra.mxu0 %v1030
        %1040 = vmatpush.bf16.msra.mxu0 %v1029
        %1041 = vmatpush.bf16.msra.mxu0 %v1028
        %1042 = vmatpush.bf16.msra.mxu0 %v1027
        %1043 = vmatpush.bf16.msra.mxu0 %v1026
        %1044 = vmatpush.bf16.msra.mxu0 %v1025
        %1045 = vmatpush.bf16.msra.mxu0 %v1024
        %1046 = vmatpush.bf16.msra.mxu0 %v1023
        %1047 = vmatmul.bf16.gmra.mxu0 %v968
        %v1048 = vpop.f32.mrf.mxu0
        %v1049 = vadd.f32 %v989, %v1048
        %v1050 = vpop.f32.mrf.mxu0
        %v1051 = vadd.f32 %v989, %v1050
        %1052 = vdwg.mxu0
        %v1053 = vpack.c.bf16 %v1051, %v1049
        %v1056 = vunpack.c.l.b16 %v969
        %v1057 = vunpack.c.l.b16 %v970
        %v1058 = vpack.c.b16 %v1057, %v1056
        %vm1059 = vcmask 130048
        %v1061 = vsel %vm1059, %v1058, 0
        %1063 = vmatpush.bf16.msra.mxu0 0
        %1064 = vmatpush.bf16.msra.mxu0 0
        %1065 = vmatpush.bf16.msra.mxu0 0
        %1066 = vmatpush.bf16.msra.mxu0 0
        %1067 = vmatpush.bf16.msra.mxu0 0
        %1068 = vmatpush.bf16.msra.mxu0 0
        %1069 = vmatpush.bf16.msra.mxu0 0
        %1070 = vmatpush.bf16.msra.mxu0 %v1053
        %1071 = vmatmul.bf16.gmra.mxu0 %v1061
        %v1072 = vpop.f32.mrf.mxu0
        %v1073 = vadd.f32 0.0, %v1072
        %v1074 = vpop.f32.mrf.mxu0
        %v1075 = vadd.f32 0.0, %v1074
        %1076 = vdwg.mxu0
        %v1077 = vmax.f32 %v1073, 0.0
        %v1078 = vmax.f32 %v1075, 0.0
        %v1079 = vadd.f32 %v966, %v1077
        %v1080 = vadd.f32 %v967, %v1078
        %v1081 = vld [vmem:[%s779] sm:$0xf]
        %v1082 = vld [vmem:[%s779 + $0x4] sm:$0xf]
        %v1083 = vld [vmem:[%s779 + $0x8] sm:$0xf]
        %v1084 = vld [vmem:[%s779 + $0xc] sm:$0xf]
        %v1085 = vld [vmem:[%s779 + $0x10] sm:$0xf]
        %v1086 = vld [vmem:[%s779 + $0x14] sm:$0xf]
        %v1087 = vld [vmem:[%s779 + $0x18] sm:$0xf]
        %v1088 = vld [vmem:[%s779 + $0x1c] sm:$0xf]
        %v1089 = vld [vmem:[%s779 + $0x20] sm:$0xf]
        %v1090 = vld [vmem:[%s779 + $0x24] sm:$0xf]
        %v1091 = vld [vmem:[%s779 + $0x28] sm:$0xf]
        %v1092 = vld [vmem:[%s779 + $0x2c] sm:$0xf]
        %v1093 = vld [vmem:[%s779 + $0x30] sm:$0xf]
        %v1094 = vld [vmem:[%s779 + $0x34] sm:$0xf]
        %v1095 = vld [vmem:[%s779 + $0x38] sm:$0xf]
        %v1096 = vld [vmem:[%s779 + $0x3c] sm:$0xf]
        %v1113 = vunpack.c.l.b16 %v1081
        %v1114 = vunpack.c.l.b16 %v1082
        %v1115 = vunpack.c.l.b16 %v1083
        %v1116 = vunpack.c.l.b16 %v1084
        %v1117 = vunpack.c.l.b16 %v1085
        %v1118 = vunpack.c.l.b16 %v1086
        %v1119 = vunpack.c.l.b16 %v1087
        %v1120 = vunpack.c.l.b16 %v1088
        %v1121 = vunpack.c.l.b16 %v1089
        %v1122 = vunpack.c.l.b16 %v1090
        %v1123 = vunpack.c.l.b16 %v1091
        %v1124 = vunpack.c.l.b16 %v1092
        %v1125 = vunpack.c.l.b16 %v1093
        %v1126 = vunpack.c.l.b16 %v1094
        %v1127 = vunpack.c.l.b16 %v1095
        %v1128 = vunpack.c.l.b16 %v1096
        %v1129 = vpack.c.b16 %v1114, %v1113
        %v1130 = vpack.c.b16 %v1116, %v1115
        %v1131 = vpack.c.b16 %v1118, %v1117
        %v1132 = vpack.c.b16 %v1120, %v1119
        %v1133 = vpack.c.b16 %v1122, %v1121
        %v1134 = vpack.c.b16 %v1124, %v1123
        %v1135 = vpack.c.b16 %v1126, %v1125
        %v1136 = vpack.c.b16 %v1128, %v1127
        %1145 = vmatpush.bf16.msra.mxu0 %v1136
        %1146 = vmatpush.bf16.msra.mxu0 %v1135
        %1147 = vmatpush.bf16.msra.mxu0 %v1134
        %1148 = vmatpush.bf16.msra.mxu0 %v1133
        %1149 = vmatpush.bf16.msra.mxu0 %v1132
        %1150 = vmatpush.bf16.msra.mxu0 %v1131
        %1151 = vmatpush.bf16.msra.mxu0 %v1130
        %1152 = vmatpush.bf16.msra.mxu0 %v1129
        %1153 = vmatmul.bf16.gmra.mxu0 %v968
        %v1154 = vpop.f32.mrf.mxu0
        %v1155 = vadd.f32 0.0, %v1154
        %v1156 = vpop.f32.mrf.mxu0
        %v1157 = vadd.f32 0.0, %v1156
        %1158 = vdwg.mxu0
        %v1159 = vld [vmem:[%s789] sm:$0xf]
        %v1160 = vld [vmem:[%s789 + $0x4] sm:$0xf]
        %v1161 = vld [vmem:[%s789 + $0x8] sm:$0xf]
        %v1162 = vld [vmem:[%s789 + $0xc] sm:$0xf]
        %v1163 = vld [vmem:[%s789 + $0x10] sm:$0xf]
        %v1164 = vld [vmem:[%s789 + $0x14] sm:$0xf]
        %v1165 = vld [vmem:[%s789 + $0x18] sm:$0xf]
        %v1166 = vld [vmem:[%s789 + $0x1c] sm:$0xf]
        %v1167 = vld [vmem:[%s789 + $0x20] sm:$0xf]
        %v1168 = vld [vmem:[%s789 + $0x24] sm:$0xf]
        %v1169 = vld [vmem:[%s789 + $0x28] sm:$0xf]
        %v1170 = vld [vmem:[%s789 + $0x2c] sm:$0xf]
        %v1171 = vld [vmem:[%s789 + $0x30] sm:$0xf]
        %v1172 = vld [vmem:[%s789 + $0x34] sm:$0xf]
        %v1173 = vld [vmem:[%s789 + $0x38] sm:$0xf]
        %v1174 = vld [vmem:[%s789 + $0x3c] sm:$0xf]
        %v1191 = vunpack.c.l.b16 %v1159
        %v1192 = vunpack.c.l.b16 %v1160
        %v1193 = vunpack.c.l.b16 %v1161
        %v1194 = vunpack.c.l.b16 %v1162
        %v1195 = vunpack.c.l.b16 %v1163
        %v1196 = vunpack.c.l.b16 %v1164
        %v1197 = vunpack.c.l.b16 %v1165
        %v1198 = vunpack.c.l.b16 %v1166
        %v1199 = vunpack.c.l.b16 %v1167
        %v1200 = vunpack.c.l.b16 %v1168
        %v1201 = vunpack.c.l.b16 %v1169
        %v1202 = vunpack.c.l.b16 %v1170
        %v1203 = vunpack.c.l.b16 %v1171
        %v1204 = vunpack.c.l.b16 %v1172
        %v1205 = vunpack.c.l.b16 %v1173
        %v1206 = vunpack.c.l.b16 %v1174
        %v1207 = vpack.c.b16 %v1192, %v1191
        %v1208 = vpack.c.b16 %v1194, %v1193
        %v1209 = vpack.c.b16 %v1196, %v1195
        %v1210 = vpack.c.b16 %v1198, %v1197
        %v1211 = vpack.c.b16 %v1200, %v1199
        %v1212 = vpack.c.b16 %v1202, %v1201
        %v1213 = vpack.c.b16 %v1204, %v1203
        %v1214 = vpack.c.b16 %v1206, %v1205
        %1223 = vmatpush.bf16.msra.mxu0 %v1214
        %1224 = vmatpush.bf16.msra.mxu0 %v1213
        %1225 = vmatpush.bf16.msra.mxu0 %v1212
        %1226 = vmatpush.bf16.msra.mxu0 %v1211
        %1227 = vmatpush.bf16.msra.mxu0 %v1210
        %1228 = vmatpush.bf16.msra.mxu0 %v1209
        %1229 = vmatpush.bf16.msra.mxu0 %v1208
        %1230 = vmatpush.bf16.msra.mxu0 %v1207
        %1231 = vmatmul.bf16.gmra.mxu0 %v968
        %v1232 = vpop.f32.mrf.mxu0
        %v1233 = vadd.f32 0.0, %v1232
        %v1234 = vpop.f32.mrf.mxu0
        %v1235 = vadd.f32 0.0, %v1234
        %1236 = vdwg.mxu0
        %v1237 = vld [vmem:[%s799] sm:$0xf]
        %v1238 = vld [vmem:[%s799 + $0x4] sm:$0xf]
        %v1239 = vld [vmem:[%s799 + $0x8] sm:$0xf]
        %v1240 = vld [vmem:[%s799 + $0xc] sm:$0xf]
        %v1241 = vld [vmem:[%s799 + $0x10] sm:$0xf]
        %v1242 = vld [vmem:[%s799 + $0x14] sm:$0xf]
        %v1243 = vld [vmem:[%s799 + $0x18] sm:$0xf]
        %v1244 = vld [vmem:[%s799 + $0x1c] sm:$0xf]
        %v1245 = vld [vmem:[%s799 + $0x20] sm:$0xf]
        %v1246 = vld [vmem:[%s799 + $0x24] sm:$0xf]
        %v1247 = vld [vmem:[%s799 + $0x28] sm:$0xf]
        %v1248 = vld [vmem:[%s799 + $0x2c] sm:$0xf]
        %v1249 = vld [vmem:[%s799 + $0x30] sm:$0xf]
        %v1250 = vld [vmem:[%s799 + $0x34] sm:$0xf]
        %v1251 = vld [vmem:[%s799 + $0x38] sm:$0xf]
        %v1252 = vld [vmem:[%s799 + $0x3c] sm:$0xf]
        %v1269 = vunpack.c.l.b16 %v1237
        %v1270 = vunpack.c.l.b16 %v1238
        %v1271 = vunpack.c.l.b16 %v1239
        %v1272 = vunpack.c.l.b16 %v1240
        %v1273 = vunpack.c.l.b16 %v1241
        %v1274 = vunpack.c.l.b16 %v1242
        %v1275 = vunpack.c.l.b16 %v1243
        %v1276 = vunpack.c.l.b16 %v1244
        %v1277 = vunpack.c.l.b16 %v1245
        %v1278 = vunpack.c.l.b16 %v1246
        %v1279 = vunpack.c.l.b16 %v1247
        %v1280 = vunpack.c.l.b16 %v1248
        %v1281 = vunpack.c.l.b16 %v1249
        %v1282 = vunpack.c.l.b16 %v1250
        %v1283 = vunpack.c.l.b16 %v1251
        %v1284 = vunpack.c.l.b16 %v1252
        %v1285 = vpack.c.b16 %v1270, %v1269
        %v1286 = vpack.c.b16 %v1272, %v1271
        %v1287 = vpack.c.b16 %v1274, %v1273
        %v1288 = vpack.c.b16 %v1276, %v1275
        %v1289 = vpack.c.b16 %v1278, %v1277
        %v1290 = vpack.c.b16 %v1280, %v1279
        %v1291 = vpack.c.b16 %v1282, %v1281
        %v1292 = vpack.c.b16 %v1284, %v1283
        %1301 = vmatpush.bf16.msra.mxu0 %v1292
        %1302 = vmatpush.bf16.msra.mxu0 %v1291
        %1303 = vmatpush.bf16.msra.mxu0 %v1290
        %1304 = vmatpush.bf16.msra.mxu0 %v1289
        %1305 = vmatpush.bf16.msra.mxu0 %v1288
        %1306 = vmatpush.bf16.msra.mxu0 %v1287
        %1307 = vmatpush.bf16.msra.mxu0 %v1286
        %1308 = vmatpush.bf16.msra.mxu0 %v1285
        %1309 = vmatmul.bf16.gmra.mxu0 %v968
        %v1310 = vpop.f32.mrf.mxu0
        %v1311 = vadd.f32 0.0, %v1310
        %v1312 = vpop.f32.mrf.mxu0
        %v1313 = vadd.f32 0.0, %v1312
        %1314 = vdwg.mxu0
        %1317 = vrot.lane.b32.xlu0 %v1155, 96
        %v1318 = vpop.permute.xlu0 %1317
        %1319 = vrot.lane.b32.xlu0 %v1157, 96
        %v1320 = vpop.permute.xlu0 %1319
        %1323 = vrot.lane.b32.xlu0 %v1155, 64
        %v1324 = vpop.permute.xlu0 %1323
        %1325 = vrot.lane.b32.xlu0 %v1157, 64
        %v1326 = vpop.permute.xlu0 %1325
        %1329 = vrot.lane.b32.xlu0 %v1155, 32
        %v1330 = vpop.permute.xlu0 %1329
        %1331 = vrot.lane.b32.xlu0 %v1157, 32
        %v1332 = vpop.permute.xlu0 %1331
        %v1335 = vrot.slane %v1324, 4
        %vm1336 = vcmask 1047556
        %v1337 = vsel %vm1336, %v1335, %v1155
        %v1338 = vrot.slane %v1155, 4
        %v1339 = vsel %vm1336, %v1324, %v1338
        %v1341 = vunpack.c.l.s4 1983009808
        %v1342 = vunpack.c.0.s8 %v1341
        %v1343 = vperm.slane %v1337, %v1342
        %v1345 = vunpack.c.l.s4 1983009808
        %v1346 = vunpack.c.0.s8 %v1345
        %v1347 = vperm.slane %v1339, %v1346
        %v1348 = vrot.slane %v1330, 4
        %v1349 = vsel %vm1336, %v1348, %v1318
        %v1350 = vrot.slane %v1318, 4
        %v1351 = vsel %vm1336, %v1330, %v1350
        %v1353 = vunpack.c.l.s4 1983009808
        %v1354 = vunpack.c.0.s8 %v1353
        %v1355 = vperm.slane %v1349, %v1354
        %v1357 = vunpack.c.l.s4 1983009808
        %v1358 = vunpack.c.0.s8 %v1357
        %v1359 = vperm.slane %v1351, %v1358
        %v1360 = vrot.slane %v1355, 4
        %v1361 = vsel %vm1336, %v1360, %v1343
        %v1362 = vrot.slane %v1343, 4
        %v1363 = vsel %vm1336, %v1355, %v1362
        %v1365 = vunpack.c.l.s4 1934713408
        %v1366 = vunpack.c.0.s8 %v1365
        %v1367 = vperm.slane %v1361, %v1366
        %v1369 = vunpack.c.l.s4 1934713408
        %v1370 = vunpack.c.0.s8 %v1369
        %v1371 = vperm.slane %v1363, %v1370
        %v1372 = vrot.slane %v1359, 4
        %v1373 = vsel %vm1336, %v1372, %v1347
        %v1374 = vrot.slane %v1347, 4
        %v1375 = vsel %vm1336, %v1359, %v1374
        %v1377 = vunpack.c.l.s4 1934713408
        %v1378 = vunpack.c.0.s8 %v1377
        %v1379 = vperm.slane %v1373, %v1378
        %v1381 = vunpack.c.l.s4 1934713408
        %v1382 = vunpack.c.0.s8 %v1381
        %v1383 = vperm.slane %v1375, %v1382
        %v1384 = vrot.slane %v1367, 4
        %v1385 = vsel %vm1336, 0.0, %v1384
        %v1386 = vrot.slane %v1371, 4
        %v1387 = vsel %vm1336, 0.0, %v1386
        %v1388 = vrot.slane %v1379, 4
        %v1389 = vsel %vm1336, 0.0, %v1388
        %v1390 = vrot.slane %v1383, 4
        %v1391 = vsel %vm1336, 0.0, %v1390
        %v1392 = vrot.slane %v1326, 4
        %v1393 = vsel %vm1336, %v1392, %v1157
        %v1394 = vrot.slane %v1157, 4
        %v1395 = vsel %vm1336, %v1326, %v1394
        %v1397 = vunpack.c.l.s4 1983009808
        %v1398 = vunpack.c.0.s8 %v1397
        %v1399 = vperm.slane %v1393, %v1398
        %v1401 = vunpack.c.l.s4 1983009808
        %v1402 = vunpack.c.0.s8 %v1401
        %v1403 = vperm.slane %v1395, %v1402
        %v1404 = vrot.slane %v1332, 4
        %v1405 = vsel %vm1336, %v1404, %v1320
        %v1406 = vrot.slane %v1320, 4
        %v1407 = vsel %vm1336, %v1332, %v1406
        %v1409 = vunpack.c.l.s4 1983009808
        %v1410 = vunpack.c.0.s8 %v1409
        %v1411 = vperm.slane %v1405, %v1410
        %v1413 = vunpack.c.l.s4 1983009808
        %v1414 = vunpack.c.0.s8 %v1413
        %v1415 = vperm.slane %v1407, %v1414
        %v1416 = vrot.slane %v1411, 4
        %v1417 = vsel %vm1336, %v1416, %v1399
        %v1418 = vrot.slane %v1399, 4
        %v1419 = vsel %vm1336, %v1411, %v1418
        %v1421 = vunpack.c.l.s4 1934713408
        %v1422 = vunpack.c.0.s8 %v1421
        %v1423 = vperm.slane %v1417, %v1422
        %v1425 = vunpack.c.l.s4 1934713408
        %v1426 = vunpack.c.0.s8 %v1425
        %v1427 = vperm.slane %v1419, %v1426
        %v1428 = vrot.slane %v1415, 4
        %v1429 = vsel %vm1336, %v1428, %v1403
        %v1430 = vrot.slane %v1403, 4
        %v1431 = vsel %vm1336, %v1415, %v1430
        %v1433 = vunpack.c.l.s4 1934713408
        %v1434 = vunpack.c.0.s8 %v1433
        %v1435 = vperm.slane %v1429, %v1434
        %v1437 = vunpack.c.l.s4 1934713408
        %v1438 = vunpack.c.0.s8 %v1437
        %v1439 = vperm.slane %v1431, %v1438
        %v1440 = vrot.slane %v1423, 4
        %v1441 = vsel %vm1336, 0.0, %v1440
        %v1442 = vrot.slane %v1427, 4
        %v1443 = vsel %vm1336, 0.0, %v1442
        %v1444 = vrot.slane %v1435, 4
        %v1445 = vsel %vm1336, 0.0, %v1444
        %v1446 = vrot.slane %v1439, 4
        %v1447 = vsel %vm1336, 0.0, %v1446
        %v1448 = vsel %vm1336, %v1386, %v1367
        %v1450 = vunpack.c.l.s4 1983009808
        %v1451 = vunpack.c.0.s8 %v1450
        %v1452 = vperm.slane %v1448, %v1451
        %v1453 = vrot.slane %v1387, 4
        %v1454 = vsel %vm1336, %v1453, %v1385
        %v1456 = vunpack.c.l.s4 1983009808
        %v1457 = vunpack.c.0.s8 %v1456
        %v1458 = vperm.slane %v1454, %v1457
        %v1459 = vsel %vm1336, %v1390, %v1379
        %v1461 = vunpack.c.l.s4 1983009808
        %v1462 = vunpack.c.0.s8 %v1461
        %v1463 = vperm.slane %v1459, %v1462
        %v1464 = vrot.slane %v1391, 4
        %v1465 = vsel %vm1336, %v1464, %v1389
        %v1467 = vunpack.c.l.s4 1983009808
        %v1468 = vunpack.c.0.s8 %v1467
        %v1469 = vperm.slane %v1465, %v1468
        %v1470 = vrot.slane %v1458, 4
        %v1471 = vsel %vm1336, %v1470, %v1452
        %v1472 = vrot.slane %v1452, 4
        %v1473 = vsel %vm1336, %v1458, %v1472
        %v1475 = vunpack.c.l.s4 1934713408
        %v1476 = vunpack.c.0.s8 %v1475
        %v1477 = vperm.slane %v1471, %v1476
        %v1479 = vunpack.c.l.s4 1934713408
        %v1480 = vunpack.c.0.s8 %v1479
        %v1481 = vperm.slane %v1473, %v1480
        %v1482 = vrot.slane %v1469, 4
        %v1483 = vsel %vm1336, %v1482, %v1463
        %v1484 = vrot.slane %v1463, 4
        %v1485 = vsel %vm1336, %v1469, %v1484
        %v1487 = vunpack.c.l.s4 1934713408
        %v1488 = vunpack.c.0.s8 %v1487
        %v1489 = vperm.slane %v1483, %v1488
        %v1491 = vunpack.c.l.s4 1934713408
        %v1492 = vunpack.c.0.s8 %v1491
        %v1493 = vperm.slane %v1485, %v1492
        %v1494 = vrot.slane %v1489, 4
        %v1495 = vsel %vm1336, %v1494, %v1477
        %v1496 = vrot.slane %v1477, 4
        %v1497 = vsel %vm1336, %v1489, %v1496
        %v1498 = vrot.slane %v1493, 4
        %v1499 = vsel %vm1336, %v1498, %v1481
        %v1500 = vrot.slane %v1481, 4
        %v1501 = vsel %vm1336, %v1493, %v1500
        %v1502 = vsel %vm1336, %v1442, %v1423
        %v1504 = vunpack.c.l.s4 1983009808
        %v1505 = vunpack.c.0.s8 %v1504
        %v1506 = vperm.slane %v1502, %v1505
        %v1507 = vrot.slane %v1443, 4
        %v1508 = vsel %vm1336, %v1507, %v1441
        %v1510 = vunpack.c.l.s4 1983009808
        %v1511 = vunpack.c.0.s8 %v1510
        %v1512 = vperm.slane %v1508, %v1511
        %v1513 = vsel %vm1336, %v1446, %v1435
        %v1515 = vunpack.c.l.s4 1983009808
        %v1516 = vunpack.c.0.s8 %v1515
        %v1517 = vperm.slane %v1513, %v1516
        %v1518 = vrot.slane %v1447, 4
        %v1519 = vsel %vm1336, %v1518, %v1445
        %v1521 = vunpack.c.l.s4 1983009808
        %v1522 = vunpack.c.0.s8 %v1521
        %v1523 = vperm.slane %v1519, %v1522
        %v1524 = vrot.slane %v1512, 4
        %v1525 = vsel %vm1336, %v1524, %v1506
        %v1526 = vrot.slane %v1506, 4
        %v1527 = vsel %vm1336, %v1512, %v1526
        %v1529 = vunpack.c.l.s4 1934713408
        %v1530 = vunpack.c.0.s8 %v1529
        %v1531 = vperm.slane %v1525, %v1530
        %v1533 = vunpack.c.l.s4 1934713408
        %v1534 = vunpack.c.0.s8 %v1533
        %v1535 = vperm.slane %v1527, %v1534
        %v1536 = vrot.slane %v1523, 4
        %v1537 = vsel %vm1336, %v1536, %v1517
        %v1538 = vrot.slane %v1517, 4
        %v1539 = vsel %vm1336, %v1523, %v1538
        %v1541 = vunpack.c.l.s4 1934713408
        %v1542 = vunpack.c.0.s8 %v1541
        %v1543 = vperm.slane %v1537, %v1542
        %v1545 = vunpack.c.l.s4 1934713408
        %v1546 = vunpack.c.0.s8 %v1545
        %v1547 = vperm.slane %v1539, %v1546
        %v1548 = vrot.slane %v1543, 4
        %v1549 = vsel %vm1336, %v1548, %v1531
        %v1550 = vrot.slane %v1531, 4
        %v1551 = vsel %vm1336, %v1543, %v1550
        %v1552 = vrot.slane %v1547, 4
        %v1553 = vsel %vm1336, %v1552, %v1535
        %v1554 = vrot.slane %v1535, 4
        %v1555 = vsel %vm1336, %v1547, %v1554
        %v1556 = vpack.c.bf16 %v1495, %v1495
        %v1557 = vpack.c.bf16 %v1549, %v1549
        %v1558 = vpack.c.bf16 %v1497, %v1497
        %v1559 = vpack.c.bf16 %v1551, %v1551
        %v1560 = vpack.c.bf16 %v1499, %v1499
        %v1561 = vpack.c.bf16 %v1553, %v1553
        %v1562 = vpack.c.bf16 %v1501, %v1501
        %v1563 = vpack.c.bf16 %v1555, %v1555
        %1566 = vrot.lane.b32.xlu0 %v1233, 96
        %v1567 = vpop.permute.xlu0 %1566
        %1568 = vrot.lane.b32.xlu0 %v1235, 96
        %v1569 = vpop.permute.xlu0 %1568
        %1572 = vrot.lane.b32.xlu0 %v1233, 64
        %v1573 = vpop.permute.xlu0 %1572
        %1574 = vrot.lane.b32.xlu0 %v1235, 64
        %v1575 = vpop.permute.xlu0 %1574
        %1578 = vrot.lane.b32.xlu0 %v1233, 32
        %v1579 = vpop.permute.xlu0 %1578
        %1580 = vrot.lane.b32.xlu0 %v1235, 32
        %v1581 = vpop.permute.xlu0 %1580
        %v1584 = vrot.slane %v1573, 4
        %v1585 = vsel %vm1336, %v1584, %v1233
        %v1586 = vrot.slane %v1233, 4
        %v1587 = vsel %vm1336, %v1573, %v1586
        %v1589 = vunpack.c.l.s4 1983009808
        %v1590 = vunpack.c.0.s8 %v1589
        %v1591 = vperm.slane %v1585, %v1590
        %v1593 = vunpack.c.l.s4 1983009808
        %v1594 = vunpack.c.0.s8 %v1593
        %v1595 = vperm.slane %v1587, %v1594
        %v1596 = vrot.slane %v1579, 4
        %v1597 = vsel %vm1336, %v1596, %v1567
        %v1598 = vrot.slane %v1567, 4
        %v1599 = vsel %vm1336, %v1579, %v1598
        %v1601 = vunpack.c.l.s4 1983009808
        %v1602 = vunpack.c.0.s8 %v1601
        %v1603 = vperm.slane %v1597, %v1602
        %v1605 = vunpack.c.l.s4 1983009808
        %v1606 = vunpack.c.0.s8 %v1605
        %v1607 = vperm.slane %v1599, %v1606
        %v1608 = vrot.slane %v1603, 4
        %v1609 = vsel %vm1336, %v1608, %v1591
        %v1610 = vrot.slane %v1591, 4
        %v1611 = vsel %vm1336, %v1603, %v1610
        %v1613 = vunpack.c.l.s4 1934713408
        %v1614 = vunpack.c.0.s8 %v1613
        %v1615 = vperm.slane %v1609, %v1614
        %v1617 = vunpack.c.l.s4 1934713408
        %v1618 = vunpack.c.0.s8 %v1617
        %v1619 = vperm.slane %v1611, %v1618
        %v1620 = vrot.slane %v1607, 4
        %v1621 = vsel %vm1336, %v1620, %v1595
        %v1622 = vrot.slane %v1595, 4
        %v1623 = vsel %vm1336, %v1607, %v1622
        %v1625 = vunpack.c.l.s4 1934713408
        %v1626 = vunpack.c.0.s8 %v1625
        %v1627 = vperm.slane %v1621, %v1626
        %v1629 = vunpack.c.l.s4 1934713408
        %v1630 = vunpack.c.0.s8 %v1629
        %v1631 = vperm.slane %v1623, %v1630
        %v1632 = vrot.slane %v1615, 4
        %v1633 = vsel %vm1336, 0.0, %v1632
        %v1634 = vrot.slane %v1619, 4
        %v1635 = vsel %vm1336, 0.0, %v1634
        %v1636 = vrot.slane %v1627, 4
        %v1637 = vsel %vm1336, 0.0, %v1636
        %v1638 = vrot.slane %v1631, 4
        %v1639 = vsel %vm1336, 0.0, %v1638
        %v1640 = vrot.slane %v1575, 4
        %v1641 = vsel %vm1336, %v1640, %v1235
        %v1642 = vrot.slane %v1235, 4
        %v1643 = vsel %vm1336, %v1575, %v1642
        %v1645 = vunpack.c.l.s4 1983009808
        %v1646 = vunpack.c.0.s8 %v1645
        %v1647 = vperm.slane %v1641, %v1646
        %v1649 = vunpack.c.l.s4 1983009808
        %v1650 = vunpack.c.0.s8 %v1649
        %v1651 = vperm.slane %v1643, %v1650
        %v1652 = vrot.slane %v1581, 4
        %v1653 = vsel %vm1336, %v1652, %v1569
        %v1654 = vrot.slane %v1569, 4
        %v1655 = vsel %vm1336, %v1581, %v1654
        %v1657 = vunpack.c.l.s4 1983009808
        %v1658 = vunpack.c.0.s8 %v1657
        %v1659 = vperm.slane %v1653, %v1658
        %v1661 = vunpack.c.l.s4 1983009808
        %v1662 = vunpack.c.0.s8 %v1661
        %v1663 = vperm.slane %v1655, %v1662
        %v1664 = vrot.slane %v1659, 4
        %v1665 = vsel %vm1336, %v1664, %v1647
        %v1666 = vrot.slane %v1647, 4
        %v1667 = vsel %vm1336, %v1659, %v1666
        %v1669 = vunpack.c.l.s4 1934713408
        %v1670 = vunpack.c.0.s8 %v1669
        %v1671 = vperm.slane %v1665, %v1670
        %v1673 = vunpack.c.l.s4 1934713408
        %v1674 = vunpack.c.0.s8 %v1673
        %v1675 = vperm.slane %v1667, %v1674
        %v1676 = vrot.slane %v1663, 4
        %v1677 = vsel %vm1336, %v1676, %v1651
        %v1678 = vrot.slane %v1651, 4
        %v1679 = vsel %vm1336, %v1663, %v1678
        %v1681 = vunpack.c.l.s4 1934713408
        %v1682 = vunpack.c.0.s8 %v1681
        %v1683 = vperm.slane %v1677, %v1682
        %v1685 = vunpack.c.l.s4 1934713408
        %v1686 = vunpack.c.0.s8 %v1685
        %v1687 = vperm.slane %v1679, %v1686
        %v1688 = vrot.slane %v1671, 4
        %v1689 = vsel %vm1336, 0.0, %v1688
        %v1690 = vrot.slane %v1675, 4
        %v1691 = vsel %vm1336, 0.0, %v1690
        %v1692 = vrot.slane %v1683, 4
        %v1693 = vsel %vm1336, 0.0, %v1692
        %v1694 = vrot.slane %v1687, 4
        %v1695 = vsel %vm1336, 0.0, %v1694
        %v1696 = vsel %vm1336, %v1634, %v1615
        %v1698 = vunpack.c.l.s4 1983009808
        %v1699 = vunpack.c.0.s8 %v1698
        %v1700 = vperm.slane %v1696, %v1699
        %v1701 = vrot.slane %v1635, 4
        %v1702 = vsel %vm1336, %v1701, %v1633
        %v1704 = vunpack.c.l.s4 1983009808
        %v1705 = vunpack.c.0.s8 %v1704
        %v1706 = vperm.slane %v1702, %v1705
        %v1707 = vsel %vm1336, %v1638, %v1627
        %v1709 = vunpack.c.l.s4 1983009808
        %v1710 = vunpack.c.0.s8 %v1709
        %v1711 = vperm.slane %v1707, %v1710
        %v1712 = vrot.slane %v1639, 4
        %v1713 = vsel %vm1336, %v1712, %v1637
        %v1715 = vunpack.c.l.s4 1983009808
        %v1716 = vunpack.c.0.s8 %v1715
        %v1717 = vperm.slane %v1713, %v1716
        %v1718 = vrot.slane %v1706, 4
        %v1719 = vsel %vm1336, %v1718, %v1700
        %v1720 = vrot.slane %v1700, 4
        %v1721 = vsel %vm1336, %v1706, %v1720
        %v1723 = vunpack.c.l.s4 1934713408
        %v1724 = vunpack.c.0.s8 %v1723
        %v1725 = vperm.slane %v1719, %v1724
        %v1727 = vunpack.c.l.s4 1934713408
        %v1728 = vunpack.c.0.s8 %v1727
        %v1729 = vperm.slane %v1721, %v1728
        %v1730 = vrot.slane %v1717, 4
        %v1731 = vsel %vm1336, %v1730, %v1711
        %v1732 = vrot.slane %v1711, 4
        %v1733 = vsel %vm1336, %v1717, %v1732
        %v1735 = vunpack.c.l.s4 1934713408
        %v1736 = vunpack.c.0.s8 %v1735
        %v1737 = vperm.slane %v1731, %v1736
        %v1739 = vunpack.c.l.s4 1934713408
        %v1740 = vunpack.c.0.s8 %v1739
        %v1741 = vperm.slane %v1733, %v1740
        %v1742 = vrot.slane %v1737, 4
        %v1743 = vsel %vm1336, %v1742, %v1725
        %v1744 = vrot.slane %v1725, 4
        %v1745 = vsel %vm1336, %v1737, %v1744
        %v1746 = vrot.slane %v1741, 4
        %v1747 = vsel %vm1336, %v1746, %v1729
        %v1748 = vrot.slane %v1729, 4
        %v1749 = vsel %vm1336, %v1741, %v1748
        %v1750 = vsel %vm1336, %v1690, %v1671
        %v1752 = vunpack.c.l.s4 1983009808
        %v1753 = vunpack.c.0.s8 %v1752
        %v1754 = vperm.slane %v1750, %v1753
        %v1755 = vrot.slane %v1691, 4
        %v1756 = vsel %vm1336, %v1755, %v1689
        %v1758 = vunpack.c.l.s4 1983009808
        %v1759 = vunpack.c.0.s8 %v1758
        %v1760 = vperm.slane %v1756, %v1759
        %v1761 = vsel %vm1336, %v1694, %v1683
        %v1763 = vunpack.c.l.s4 1983009808
        %v1764 = vunpack.c.0.s8 %v1763
        %v1765 = vperm.slane %v1761, %v1764
        %v1766 = vrot.slane %v1695, 4
        %v1767 = vsel %vm1336, %v1766, %v1693
        %v1769 = vunpack.c.l.s4 1983009808
        %v1770 = vunpack.c.0.s8 %v1769
        %v1771 = vperm.slane %v1767, %v1770
        %v1772 = vrot.slane %v1760, 4
        %v1773 = vsel %vm1336, %v1772, %v1754
        %v1774 = vrot.slane %v1754, 4
        %v1775 = vsel %vm1336, %v1760, %v1774
        %v1777 = vunpack.c.l.s4 1934713408
        %v1778 = vunpack.c.0.s8 %v1777
        %v1779 = vperm.slane %v1773, %v1778
        %v1781 = vunpack.c.l.s4 1934713408
        %v1782 = vunpack.c.0.s8 %v1781
        %v1783 = vperm.slane %v1775, %v1782
        %v1784 = vrot.slane %v1771, 4
        %v1785 = vsel %vm1336, %v1784, %v1765
        %v1786 = vrot.slane %v1765, 4
        %v1787 = vsel %vm1336, %v1771, %v1786
        %v1789 = vunpack.c.l.s4 1934713408
        %v1790 = vunpack.c.0.s8 %v1789
        %v1791 = vperm.slane %v1785, %v1790
        %v1793 = vunpack.c.l.s4 1934713408
        %v1794 = vunpack.c.0.s8 %v1793
        %v1795 = vperm.slane %v1787, %v1794
        %v1796 = vrot.slane %v1791, 4
        %v1797 = vsel %vm1336, %v1796, %v1779
        %v1798 = vrot.slane %v1779, 4
        %v1799 = vsel %vm1336, %v1791, %v1798
        %v1800 = vrot.slane %v1795, 4
        %v1801 = vsel %vm1336, %v1800, %v1783
        %v1802 = vrot.slane %v1783, 4
        %v1803 = vsel %vm1336, %v1795, %v1802
        %v1804 = vpack.c.bf16 %v1743, %v1743
        %v1805 = vpack.c.bf16 %v1797, %v1797
        %v1806 = vpack.c.bf16 %v1745, %v1745
        %v1807 = vpack.c.bf16 %v1799, %v1799
        %v1808 = vpack.c.bf16 %v1747, %v1747
        %v1809 = vpack.c.bf16 %v1801, %v1801
        %v1810 = vpack.c.bf16 %v1749, %v1749
        %v1811 = vpack.c.bf16 %v1803, %v1803
        %1814 = vrot.lane.b32.xlu0 %v1311, 96
        %v1815 = vpop.permute.xlu0 %1814
        %1816 = vrot.lane.b32.xlu0 %v1313, 96
        %v1817 = vpop.permute.xlu0 %1816
        %1820 = vrot.lane.b32.xlu0 %v1311, 64
        %v1821 = vpop.permute.xlu0 %1820
        %1822 = vrot.lane.b32.xlu0 %v1313, 64
        %v1823 = vpop.permute.xlu0 %1822
        %1826 = vrot.lane.b32.xlu0 %v1311, 32
        %v1827 = vpop.permute.xlu0 %1826
        %1828 = vrot.lane.b32.xlu0 %v1313, 32
        %v1829 = vpop.permute.xlu0 %1828
        %v1832 = vrot.slane %v1821, 4
        %v1833 = vsel %vm1336, %v1832, %v1311
        %v1834 = vrot.slane %v1311, 4
        %v1835 = vsel %vm1336, %v1821, %v1834
        %v1837 = vunpack.c.l.s4 1983009808
        %v1838 = vunpack.c.0.s8 %v1837
        %v1839 = vperm.slane %v1833, %v1838
        %v1841 = vunpack.c.l.s4 1983009808
        %v1842 = vunpack.c.0.s8 %v1841
        %v1843 = vperm.slane %v1835, %v1842
        %v1844 = vrot.slane %v1827, 4
        %v1845 = vsel %vm1336, %v1844, %v1815
        %v1846 = vrot.slane %v1815, 4
        %v1847 = vsel %vm1336, %v1827, %v1846
        %v1849 = vunpack.c.l.s4 1983009808
        %v1850 = vunpack.c.0.s8 %v1849
        %v1851 = vperm.slane %v1845, %v1850
        %v1853 = vunpack.c.l.s4 1983009808
        %v1854 = vunpack.c.0.s8 %v1853
        %v1855 = vperm.slane %v1847, %v1854
        %v1856 = vrot.slane %v1851, 4
        %v1857 = vsel %vm1336, %v1856, %v1839
        %v1858 = vrot.slane %v1839, 4
        %v1859 = vsel %vm1336, %v1851, %v1858
        %v1861 = vunpack.c.l.s4 1934713408
        %v1862 = vunpack.c.0.s8 %v1861
        %v1863 = vperm.slane %v1857, %v1862
        %v1865 = vunpack.c.l.s4 1934713408
        %v1866 = vunpack.c.0.s8 %v1865
        %v1867 = vperm.slane %v1859, %v1866
        %v1868 = vrot.slane %v1855, 4
        %v1869 = vsel %vm1336, %v1868, %v1843
        %v1870 = vrot.slane %v1843, 4
        %v1871 = vsel %vm1336, %v1855, %v1870
        %v1873 = vunpack.c.l.s4 1934713408
        %v1874 = vunpack.c.0.s8 %v1873
        %v1875 = vperm.slane %v1869, %v1874
        %v1877 = vunpack.c.l.s4 1934713408
        %v1878 = vunpack.c.0.s8 %v1877
        %v1879 = vperm.slane %v1871, %v1878
        %v1880 = vrot.slane %v1863, 4
        %v1881 = vsel %vm1336, 0.0, %v1880
        %v1882 = vrot.slane %v1867, 4
        %v1883 = vsel %vm1336, 0.0, %v1882
        %v1884 = vrot.slane %v1875, 4
        %v1885 = vsel %vm1336, 0.0, %v1884
        %v1886 = vrot.slane %v1879, 4
        %v1887 = vsel %vm1336, 0.0, %v1886
        %v1888 = vrot.slane %v1823, 4
        %v1889 = vsel %vm1336, %v1888, %v1313
        %v1890 = vrot.slane %v1313, 4
        %v1891 = vsel %vm1336, %v1823, %v1890
        %v1893 = vunpack.c.l.s4 1983009808
        %v1894 = vunpack.c.0.s8 %v1893
        %v1895 = vperm.slane %v1889, %v1894
        %v1897 = vunpack.c.l.s4 1983009808
        %v1898 = vunpack.c.0.s8 %v1897
        %v1899 = vperm.slane %v1891, %v1898
        %v1900 = vrot.slane %v1829, 4
        %v1901 = vsel %vm1336, %v1900, %v1817
        %v1902 = vrot.slane %v1817, 4
        %v1903 = vsel %vm1336, %v1829, %v1902
        %v1905 = vunpack.c.l.s4 1983009808
        %v1906 = vunpack.c.0.s8 %v1905
        %v1907 = vperm.slane %v1901, %v1906
        %v1909 = vunpack.c.l.s4 1983009808
        %v1910 = vunpack.c.0.s8 %v1909
        %v1911 = vperm.slane %v1903, %v1910
        %v1912 = vrot.slane %v1907, 4
        %v1913 = vsel %vm1336, %v1912, %v1895
        %v1914 = vrot.slane %v1895, 4
        %v1915 = vsel %vm1336, %v1907, %v1914
        %v1917 = vunpack.c.l.s4 1934713408
        %v1918 = vunpack.c.0.s8 %v1917
        %v1919 = vperm.slane %v1913, %v1918
        %v1921 = vunpack.c.l.s4 1934713408
        %v1922 = vunpack.c.0.s8 %v1921
        %v1923 = vperm.slane %v1915, %v1922
        %v1924 = vrot.slane %v1911, 4
        %v1925 = vsel %vm1336, %v1924, %v1899
        %v1926 = vrot.slane %v1899, 4
        %v1927 = vsel %vm1336, %v1911, %v1926
        %v1929 = vunpack.c.l.s4 1934713408
        %v1930 = vunpack.c.0.s8 %v1929
        %v1931 = vperm.slane %v1925, %v1930
        %v1933 = vunpack.c.l.s4 1934713408
        %v1934 = vunpack.c.0.s8 %v1933
        %v1935 = vperm.slane %v1927, %v1934
        %v1936 = vrot.slane %v1919, 4
        %v1937 = vsel %vm1336, 0.0, %v1936
        %v1938 = vrot.slane %v1923, 4
        %v1939 = vsel %vm1336, 0.0, %v1938
        %v1940 = vrot.slane %v1931, 4
        %v1941 = vsel %vm1336, 0.0, %v1940
        %v1942 = vrot.slane %v1935, 4
        %v1943 = vsel %vm1336, 0.0, %v1942
        %v1944 = vsel %vm1336, %v1882, %v1863
        %v1946 = vunpack.c.l.s4 1983009808
        %v1947 = vunpack.c.0.s8 %v1946
        %v1948 = vperm.slane %v1944, %v1947
        %v1949 = vrot.slane %v1883, 4
        %v1950 = vsel %vm1336, %v1949, %v1881
        %v1952 = vunpack.c.l.s4 1983009808
        %v1953 = vunpack.c.0.s8 %v1952
        %v1954 = vperm.slane %v1950, %v1953
        %v1955 = vsel %vm1336, %v1886, %v1875
        %v1957 = vunpack.c.l.s4 1983009808
        %v1958 = vunpack.c.0.s8 %v1957
        %v1959 = vperm.slane %v1955, %v1958
        %v1960 = vrot.slane %v1887, 4
        %v1961 = vsel %vm1336, %v1960, %v1885
        %v1963 = vunpack.c.l.s4 1983009808
        %v1964 = vunpack.c.0.s8 %v1963
        %v1965 = vperm.slane %v1961, %v1964
        %v1966 = vrot.slane %v1954, 4
        %v1967 = vsel %vm1336, %v1966, %v1948
        %v1968 = vrot.slane %v1948, 4
        %v1969 = vsel %vm1336, %v1954, %v1968
        %v1971 = vunpack.c.l.s4 1934713408
        %v1972 = vunpack.c.0.s8 %v1971
        %v1973 = vperm.slane %v1967, %v1972
        %v1975 = vunpack.c.l.s4 1934713408
        %v1976 = vunpack.c.0.s8 %v1975
        %v1977 = vperm.slane %v1969, %v1976
        %v1978 = vrot.slane %v1965, 4
        %v1979 = vsel %vm1336, %v1978, %v1959
        %v1980 = vrot.slane %v1959, 4
        %v1981 = vsel %vm1336, %v1965, %v1980
        %v1983 = vunpack.c.l.s4 1934713408
        %v1984 = vunpack.c.0.s8 %v1983
        %v1985 = vperm.slane %v1979, %v1984
        %v1987 = vunpack.c.l.s4 1934713408
        %v1988 = vunpack.c.0.s8 %v1987
        %v1989 = vperm.slane %v1981, %v1988
        %v1990 = vrot.slane %v1985, 4
        %v1991 = vsel %vm1336, %v1990, %v1973
        %v1992 = vrot.slane %v1973, 4
        %v1993 = vsel %vm1336, %v1985, %v1992
        %v1994 = vrot.slane %v1989, 4
        %v1995 = vsel %vm1336, %v1994, %v1977
        %v1996 = vrot.slane %v1977, 4
        %v1997 = vsel %vm1336, %v1989, %v1996
        %v1998 = vsel %vm1336, %v1938, %v1919
        %v2000 = vunpack.c.l.s4 1983009808
        %v2001 = vunpack.c.0.s8 %v2000
        %v2002 = vperm.slane %v1998, %v2001
        %v2003 = vrot.slane %v1939, 4
        %v2004 = vsel %vm1336, %v2003, %v1937
        %v2006 = vunpack.c.l.s4 1983009808
        %v2007 = vunpack.c.0.s8 %v2006
        %v2008 = vperm.slane %v2004, %v2007
        %v2009 = vsel %vm1336, %v1942, %v1931
        %v2011 = vunpack.c.l.s4 1983009808
        %v2012 = vunpack.c.0.s8 %v2011
        %v2013 = vperm.slane %v2009, %v2012
        %v2014 = vrot.slane %v1943, 4
        %v2015 = vsel %vm1336, %v2014, %v1941
        %v2017 = vunpack.c.l.s4 1983009808
        %v2018 = vunpack.c.0.s8 %v2017
        %v2019 = vperm.slane %v2015, %v2018
        %v2020 = vrot.slane %v2008, 4
        %v2021 = vsel %vm1336, %v2020, %v2002
        %v2022 = vrot.slane %v2002, 4
        %v2023 = vsel %vm1336, %v2008, %v2022
        %v2025 = vunpack.c.l.s4 1934713408
        %v2026 = vunpack.c.0.s8 %v2025
        %v2027 = vperm.slane %v2021, %v2026
        %v2029 = vunpack.c.l.s4 1934713408
        %v2030 = vunpack.c.0.s8 %v2029
        %v2031 = vperm.slane %v2023, %v2030
        %v2032 = vrot.slane %v2019, 4
        %v2033 = vsel %vm1336, %v2032, %v2013
        %v2034 = vrot.slane %v2013, 4
        %v2035 = vsel %vm1336, %v2019, %v2034
        %v2037 = vunpack.c.l.s4 1934713408
        %v2038 = vunpack.c.0.s8 %v2037
        %v2039 = vperm.slane %v2033, %v2038
        %v2041 = vunpack.c.l.s4 1934713408
        %v2042 = vunpack.c.0.s8 %v2041
        %v2043 = vperm.slane %v2035, %v2042
        %v2044 = vrot.slane %v2039, 4
        %v2045 = vsel %vm1336, %v2044, %v2027
        %v2046 = vrot.slane %v2027, 4
        %v2047 = vsel %vm1336, %v2039, %v2046
        %v2048 = vrot.slane %v2043, 4
        %v2049 = vsel %vm1336, %v2048, %v2031
        %v2050 = vrot.slane %v2031, 4
        %v2051 = vsel %vm1336, %v2043, %v2050
        %v2052 = vpack.c.bf16 %v1991, %v1991
        %v2053 = vpack.c.bf16 %v2045, %v2045
        %v2054 = vpack.c.bf16 %v1993, %v1993
        %v2055 = vpack.c.bf16 %v2047, %v2047
        %v2056 = vpack.c.bf16 %v1995, %v1995
        %v2057 = vpack.c.bf16 %v2049, %v2049
        %v2058 = vpack.c.bf16 %v1997, %v1997
        %v2059 = vpack.c.bf16 %v2051, %v2051
        %v2062 = vunpack.c.l.b16 %v1556
        %v2063 = vunpack.c.l.b16 %v1557
        %v2064 = vpack.c.b16 %v2063, %v2062
        %v2067 = vunpack.c.l.b16 %v1804
        %v2068 = vunpack.c.l.b16 %v1805
        %v2069 = vpack.c.b16 %v2068, %v2067
        %vm2070 = vcmask 261120
        %v2072 = vsel %vm2070, %v2064, 0
        %v2075 = vsel %vm2070, %v2069, 0
        %2077 = vmatpush.bf16.xpose.msra.mxu0 0
        %2078 = vmatpush.bf16.xpose.msra.mxu0 0
        %2079 = vmatpush.bf16.xpose.msra.mxu0 0
        %2080 = vmatpush.bf16.xpose.msra.mxu0 0
        %2081 = vmatpush.bf16.xpose.msra.mxu0 0
        %2082 = vmatpush.bf16.xpose.msra.mxu0 0
        %2083 = vmatpush.bf16.xpose.msra.mxu0 0
        %2084 = vmatpush.bf16.xpose.msra.mxu0 %v2075
        %2085 = vmatmul.bf16.gmra.mxu0 %v2072
        %v2086 = vpop.f32.mrf.mxu0
        %v2087 = vadd.f32 0.0, %v2086
        %v2088 = vpop.f32.mrf.mxu0
        %v2089 = vadd.f32 0.0, %v2088
        %2090 = vdwg.mxu0
        %v2093 = vunpack.c.l.b16 %v1558
        %v2094 = vunpack.c.l.b16 %v1559
        %v2095 = vpack.c.b16 %v2094, %v2093
        %v2098 = vunpack.c.l.b16 %v1806
        %v2099 = vunpack.c.l.b16 %v1807
        %v2100 = vpack.c.b16 %v2099, %v2098
        %v2102 = vsel %vm2070, %v2095, 0
        %v2105 = vsel %vm2070, %v2100, 0
        %2107 = vmatpush.bf16.xpose.msra.mxu0 0
        %2108 = vmatpush.bf16.xpose.msra.mxu0 0
        %2109 = vmatpush.bf16.xpose.msra.mxu0 0
        %2110 = vmatpush.bf16.xpose.msra.mxu0 0
        %2111 = vmatpush.bf16.xpose.msra.mxu0 0
        %2112 = vmatpush.bf16.xpose.msra.mxu0 0
        %2113 = vmatpush.bf16.xpose.msra.mxu0 0
        %2114 = vmatpush.bf16.xpose.msra.mxu0 %v2105
        %2115 = vmatmul.bf16.gmra.mxu0 %v2102
        %v2116 = vpop.f32.mrf.mxu0
        %v2117 = vadd.f32 0.0, %v2116
        %v2118 = vpop.f32.mrf.mxu0
        %v2119 = vadd.f32 0.0, %v2118
        %2120 = vdwg.mxu0
        %v2123 = vunpack.c.l.b16 %v1560
        %v2124 = vunpack.c.l.b16 %v1561
        %v2125 = vpack.c.b16 %v2124, %v2123
        %v2128 = vunpack.c.l.b16 %v1808
        %v2129 = vunpack.c.l.b16 %v1809
        %v2130 = vpack.c.b16 %v2129, %v2128
        %v2132 = vsel %vm2070, %v2125, 0
        %v2135 = vsel %vm2070, %v2130, 0
        %2137 = vmatpush.bf16.xpose.msra.mxu0 0
        %2138 = vmatpush.bf16.xpose.msra.mxu0 0
        %2139 = vmatpush.bf16.xpose.msra.mxu0 0
        %2140 = vmatpush.bf16.xpose.msra.mxu0 0
        %2141 = vmatpush.bf16.xpose.msra.mxu0 0
        %2142 = vmatpush.bf16.xpose.msra.mxu0 0
        %2143 = vmatpush.bf16.xpose.msra.mxu0 0
        %2144 = vmatpush.bf16.xpose.msra.mxu0 %v2135
        %2145 = vmatmul.bf16.gmra.mxu0 %v2132
        %v2146 = vpop.f32.mrf.mxu0
        %v2147 = vadd.f32 0.0, %v2146
        %v2148 = vpop.f32.mrf.mxu0
        %v2149 = vadd.f32 0.0, %v2148
        %2150 = vdwg.mxu0
        %v2153 = vunpack.c.l.b16 %v1562
        %v2154 = vunpack.c.l.b16 %v1563
        %v2155 = vpack.c.b16 %v2154, %v2153
        %v2158 = vunpack.c.l.b16 %v1810
        %v2159 = vunpack.c.l.b16 %v1811
        %v2160 = vpack.c.b16 %v2159, %v2158
        %v2162 = vsel %vm2070, %v2155, 0
        %v2165 = vsel %vm2070, %v2160, 0
        %2167 = vmatpush.bf16.xpose.msra.mxu0 0
        %2168 = vmatpush.bf16.xpose.msra.mxu0 0
        %2169 = vmatpush.bf16.xpose.msra.mxu0 0
        %2170 = vmatpush.bf16.xpose.msra.mxu0 0
        %2171 = vmatpush.bf16.xpose.msra.mxu0 0
        %2172 = vmatpush.bf16.xpose.msra.mxu0 0
        %2173 = vmatpush.bf16.xpose.msra.mxu0 0
        %2174 = vmatpush.bf16.xpose.msra.mxu0 %v2165
        %2175 = vmatmul.bf16.gmra.mxu0 %v2162
        %v2176 = vpop.f32.mrf.mxu0
        %v2177 = vadd.f32 0.0, %v2176
        %v2178 = vpop.f32.mrf.mxu0
        %v2179 = vadd.f32 0.0, %v2178
        %2180 = vdwg.mxu0
        %v2181 = vmul.f32 %v2087, 0.17677669
        %v2182 = vmul.f32 %v2089, 0.17677669
        %v2183 = vmul.f32 %v2117, 0.17677669
        %v2184 = vmul.f32 %v2119, 0.17677669
        %v2185 = vmul.f32 %v2147, 0.17677669
        %v2186 = vmul.f32 %v2149, 0.17677669
        %v2187 = vmul.f32 %v2177, 0.17677669
        %v2188 = vmul.f32 %v2179, 0.17677669
        %v2189 = vsel %vm1059, %v2181, -inf
        %2190 = vmax.xlane.f32.xlu0 %v2189
        %v2191 = vpop.xlane.xlu0 %2190
        %v2192 = vsel %vm1059, %v2182, -inf
        %2193 = vmax.xlane.f32.xlu0 %v2192
        %v2194 = vpop.xlane.xlu0 %2193
        %v2195 = vsel %vm1059, %v2183, -inf
        %2196 = vmax.xlane.f32.xlu0 %v2195
        %v2197 = vpop.xlane.xlu0 %2196
        %v2198 = vsel %vm1059, %v2184, -inf
        %2199 = vmax.xlane.f32.xlu0 %v2198
        %v2200 = vpop.xlane.xlu0 %2199
        %v2201 = vsel %vm1059, %v2185, -inf
        %2202 = vmax.xlane.f32.xlu0 %v2201
        %v2203 = vpop.xlane.xlu0 %2202
        %v2204 = vsel %vm1059, %v2186, -inf
        %2205 = vmax.xlane.f32.xlu0 %v2204
        %v2206 = vpop.xlane.xlu0 %2205
        %v2207 = vsel %vm1059, %v2187, -inf
        %2208 = vmax.xlane.f32.xlu0 %v2207
        %v2209 = vpop.xlane.xlu0 %2208
        %v2210 = vsel %vm1059, %v2188, -inf
        %2211 = vmax.xlane.f32.xlu0 %v2210
        %v2212 = vpop.xlane.xlu0 %2211
        %v2213 = vsub.f32 %v2181, %v2191
        %v2214 = vsub.f32 %v2182, %v2194
        %v2215 = vsub.f32 %v2183, %v2197
        %v2216 = vsub.f32 %v2184, %v2200
        %v2217 = vsub.f32 %v2185, %v2203
        %v2218 = vsub.f32 %v2186, %v2206
        %v2219 = vsub.f32 %v2187, %v2209
        %v2220 = vsub.f32 %v2188, %v2212
        %v2221 = vmul.f32 %v2213, 1.442695
        %v2222 = vpow.pop %v2221
        %v2223 = vmul.f32 %v2214, 1.442695
        %v2224 = vpow.pop %v2223
        %v2225 = vmul.f32 %v2215, 1.442695
        %v2226 = vpow.pop %v2225
        %v2227 = vmul.f32 %v2216, 1.442695
        %v2228 = vpow.pop %v2227
        %v2229 = vmul.f32 %v2217, 1.442695
        %v2230 = vpow.pop %v2229
        %v2231 = vmul.f32 %v2218, 1.442695
        %v2232 = vpow.pop %v2231
        %v2233 = vmul.f32 %v2219, 1.442695
        %v2234 = vpow.pop %v2233
        %v2235 = vmul.f32 %v2220, 1.442695
        %v2236 = vpow.pop %v2235
        %v2237 = vsel %vm1059, %v2222, 0.0
        %2238 = vadd.xlane.f32.xlu0 %v2237
        %v2239 = vpop.xlane.xlu0 %2238
        %v2240 = vsel %vm1059, %v2224, 0.0
        %2241 = vadd.xlane.f32.xlu0 %v2240
        %v2242 = vpop.xlane.xlu0 %2241
        %v2243 = vsel %vm1059, %v2226, 0.0
        %2244 = vadd.xlane.f32.xlu0 %v2243
        %v2245 = vpop.xlane.xlu0 %2244
        %v2246 = vsel %vm1059, %v2228, 0.0
        %2247 = vadd.xlane.f32.xlu0 %v2246
        %v2248 = vpop.xlane.xlu0 %2247
        %v2249 = vsel %vm1059, %v2230, 0.0
        %2250 = vadd.xlane.f32.xlu0 %v2249
        %v2251 = vpop.xlane.xlu0 %2250
        %v2252 = vsel %vm1059, %v2232, 0.0
        %2253 = vadd.xlane.f32.xlu0 %v2252
        %v2254 = vpop.xlane.xlu0 %2253
        %v2255 = vsel %vm1059, %v2234, 0.0
        %2256 = vadd.xlane.f32.xlu0 %v2255
        %v2257 = vpop.xlane.xlu0 %2256
        %v2258 = vsel %vm1059, %v2236, 0.0
        %2259 = vadd.xlane.f32.xlu0 %v2258
        %v2260 = vpop.xlane.xlu0 %2259
        %v2261 = vrcp.pop %v2239
        %v2262 = vrcp.pop %v2242
        %v2263 = vrcp.pop %v2245
        %v2264 = vrcp.pop %v2248
        %v2265 = vrcp.pop %v2251
        %v2266 = vrcp.pop %v2254
        %v2267 = vrcp.pop %v2257
        %v2268 = vrcp.pop %v2260
        %v2269 = vmul.f32 %v2222, %v2261
        %v2270 = vmul.f32 %v2224, %v2262
        %v2271 = vmul.f32 %v2226, %v2263
        %v2272 = vmul.f32 %v2228, %v2264
        %v2273 = vmul.f32 %v2230, %v2265
        %v2274 = vmul.f32 %v2232, %v2266
        %v2275 = vmul.f32 %v2234, %v2267
        %v2276 = vmul.f32 %v2236, %v2268
        %v2277 = vpack.c.bf16 %v2269, %v2269
        %v2278 = vpack.c.bf16 %v2270, %v2270
        %v2279 = vpack.c.bf16 %v2271, %v2271
        %v2280 = vpack.c.bf16 %v2272, %v2272
        %v2281 = vpack.c.bf16 %v2273, %v2273
        %v2282 = vpack.c.bf16 %v2274, %v2274
        %v2283 = vpack.c.bf16 %v2275, %v2275
        %v2284 = vpack.c.bf16 %v2276, %v2276
        %v2287 = vunpack.c.l.b16 %v2277
        %v2288 = vunpack.c.l.b16 %v2278
        %v2289 = vpack.c.b16 %v2288, %v2287
        %v2292 = vunpack.c.l.b16 %v2052
        %v2293 = vunpack.c.l.b16 %v2053
        %v2294 = vpack.c.b16 %v2293, %v2292
        %v2297 = vsel %vm1059, %v2289, 0
        %2299 = vmatpush.bf16.msra.mxu0 0
        %2300 = vmatpush.bf16.msra.mxu0 0
        %2301 = vmatpush.bf16.msra.mxu0 0
        %2302 = vmatpush.bf16.msra.mxu0 0
        %2303 = vmatpush.bf16.msra.mxu0 0
        %2304 = vmatpush.bf16.msra.mxu0 0
        %2305 = vmatpush.bf16.msra.mxu0 0
        %2306 = vmatpush.bf16.msra.mxu0 %v2294
        %2307 = vmatmul.bf16.gmra.mxu0 %v2297
        %v2308 = vpop.f32.mrf.mxu0
        %v2309 = vadd.f32 0.0, %v2308
        %v2310 = vpop.f32.mrf.mxu0
        %v2311 = vadd.f32 0.0, %v2310
        %2312 = vdwg.mxu0
        %v2315 = vunpack.c.l.b16 %v2279
        %v2316 = vunpack.c.l.b16 %v2280
        %v2317 = vpack.c.b16 %v2316, %v2315
        %v2320 = vunpack.c.l.b16 %v2054
        %v2321 = vunpack.c.l.b16 %v2055
        %v2322 = vpack.c.b16 %v2321, %v2320
        %v2325 = vsel %vm1059, %v2317, 0
        %2327 = vmatpush.bf16.msra.mxu0 0
        %2328 = vmatpush.bf16.msra.mxu0 0
        %2329 = vmatpush.bf16.msra.mxu0 0
        %2330 = vmatpush.bf16.msra.mxu0 0
        %2331 = vmatpush.bf16.msra.mxu0 0
        %2332 = vmatpush.bf16.msra.mxu0 0
        %2333 = vmatpush.bf16.msra.mxu0 0
        %2334 = vmatpush.bf16.msra.mxu0 %v2322
        %2335 = vmatmul.bf16.gmra.mxu0 %v2325
        %v2336 = vpop.f32.mrf.mxu0
        %v2337 = vadd.f32 0.0, %v2336
        %v2338 = vpop.f32.mrf.mxu0
        %v2339 = vadd.f32 0.0, %v2338
        %2340 = vdwg.mxu0
        %v2343 = vunpack.c.l.b16 %v2281
        %v2344 = vunpack.c.l.b16 %v2282
        %v2345 = vpack.c.b16 %v2344, %v2343
        %v2348 = vunpack.c.l.b16 %v2056
        %v2349 = vunpack.c.l.b16 %v2057
        %v2350 = vpack.c.b16 %v2349, %v2348
        %v2353 = vsel %vm1059, %v2345, 0
        %2355 = vmatpush.bf16.msra.mxu0 0
        %2356 = vmatpush.bf16.msra.mxu0 0
        %2357 = vmatpush.bf16.msra.mxu0 0
        %2358 = vmatpush.bf16.msra.mxu0 0
        %2359 = vmatpush.bf16.msra.mxu0 0
        %2360 = vmatpush.bf16.msra.mxu0 0
        %2361 = vmatpush.bf16.msra.mxu0 0
        %2362 = vmatpush.bf16.msra.mxu0 %v2350
        %2363 = vmatmul.bf16.gmra.mxu0 %v2353
        %v2364 = vpop.f32.mrf.mxu0
        %v2365 = vadd.f32 0.0, %v2364
        %v2366 = vpop.f32.mrf.mxu0
        %v2367 = vadd.f32 0.0, %v2366
        %2368 = vdwg.mxu0
        %v2371 = vunpack.c.l.b16 %v2283
        %v2372 = vunpack.c.l.b16 %v2284
        %v2373 = vpack.c.b16 %v2372, %v2371
        %v2376 = vunpack.c.l.b16 %v2058
        %v2377 = vunpack.c.l.b16 %v2059
        %v2378 = vpack.c.b16 %v2377, %v2376
        %v2381 = vsel %vm1059, %v2373, 0
        %2383 = vmatpush.bf16.msra.mxu0 0
        %2384 = vmatpush.bf16.msra.mxu0 0
        %2385 = vmatpush.bf16.msra.mxu0 0
        %2386 = vmatpush.bf16.msra.mxu0 0
        %2387 = vmatpush.bf16.msra.mxu0 0
        %2388 = vmatpush.bf16.msra.mxu0 0
        %2389 = vmatpush.bf16.msra.mxu0 0
        %2390 = vmatpush.bf16.msra.mxu0 %v2378
        %2391 = vmatmul.bf16.gmra.mxu0 %v2381
        %v2392 = vpop.f32.mrf.mxu0
        %v2393 = vadd.f32 0.0, %v2392
        %v2394 = vpop.f32.mrf.mxu0
        %v2395 = vadd.f32 0.0, %v2394
        %2396 = vdwg.mxu0
        %v2397 = vrot.slane %v2365, 4
        %v2398 = vsel %vm1336, %v2397, %v2309
        %v2399 = vrot.slane %v2309, 4
        %v2400 = vsel %vm1336, %v2365, %v2399
        %v2402 = vunpack.c.l.s4 1983009808
        %v2403 = vunpack.c.0.s8 %v2402
        %v2404 = vperm.slane %v2398, %v2403
        %v2406 = vunpack.c.l.s4 1983009808
        %v2407 = vunpack.c.0.s8 %v2406
        %v2408 = vperm.slane %v2400, %v2407
        %v2409 = vrot.slane %v2393, 4
        %v2410 = vsel %vm1336, %v2409, %v2337
        %v2411 = vrot.slane %v2337, 4
        %v2412 = vsel %vm1336, %v2393, %v2411
        %v2414 = vunpack.c.l.s4 1983009808
        %v2415 = vunpack.c.0.s8 %v2414
        %v2416 = vperm.slane %v2410, %v2415
        %v2418 = vunpack.c.l.s4 1983009808
        %v2419 = vunpack.c.0.s8 %v2418
        %v2420 = vperm.slane %v2412, %v2419
        %v2421 = vrot.slane %v2416, 4
        %v2422 = vsel %vm1336, %v2421, %v2404
        %v2423 = vrot.slane %v2404, 4
        %v2424 = vsel %vm1336, %v2416, %v2423
        %v2426 = vunpack.c.l.s4 1934713408
        %v2427 = vunpack.c.0.s8 %v2426
        %v2428 = vperm.slane %v2422, %v2427
        %v2430 = vunpack.c.l.s4 1934713408
        %v2431 = vunpack.c.0.s8 %v2430
        %v2432 = vperm.slane %v2424, %v2431
        %v2433 = vrot.slane %v2420, 4
        %v2434 = vsel %vm1336, %v2433, %v2408
        %v2435 = vrot.slane %v2408, 4
        %v2436 = vsel %vm1336, %v2420, %v2435
        %v2438 = vunpack.c.l.s4 1934713408
        %v2439 = vunpack.c.0.s8 %v2438
        %v2440 = vperm.slane %v2434, %v2439
        %v2442 = vunpack.c.l.s4 1934713408
        %v2443 = vunpack.c.0.s8 %v2442
        %v2444 = vperm.slane %v2436, %v2443
        %v2445 = vrot.slane %v2428, 4
        %v2446 = vsel %vm1336, 0.0, %v2445
        %v2447 = vrot.slane %v2432, 4
        %v2448 = vsel %vm1336, 0.0, %v2447
        %v2449 = vrot.slane %v2440, 4
        %v2450 = vsel %vm1336, 0.0, %v2449
        %v2451 = vrot.slane %v2444, 4
        %v2452 = vsel %vm1336, 0.0, %v2451
        %v2453 = vrot.slane %v2367, 4
        %v2454 = vsel %vm1336, %v2453, %v2311
        %v2455 = vrot.slane %v2311, 4
        %v2456 = vsel %vm1336, %v2367, %v2455
        %v2458 = vunpack.c.l.s4 1983009808
        %v2459 = vunpack.c.0.s8 %v2458
        %v2460 = vperm.slane %v2454, %v2459
        %v2462 = vunpack.c.l.s4 1983009808
        %v2463 = vunpack.c.0.s8 %v2462
        %v2464 = vperm.slane %v2456, %v2463
        %v2465 = vrot.slane %v2395, 4
        %v2466 = vsel %vm1336, %v2465, %v2339
        %v2467 = vrot.slane %v2339, 4
        %v2468 = vsel %vm1336, %v2395, %v2467
        %v2470 = vunpack.c.l.s4 1983009808
        %v2471 = vunpack.c.0.s8 %v2470
        %v2472 = vperm.slane %v2466, %v2471
        %v2474 = vunpack.c.l.s4 1983009808
        %v2475 = vunpack.c.0.s8 %v2474
        %v2476 = vperm.slane %v2468, %v2475
        %v2477 = vrot.slane %v2472, 4
        %v2478 = vsel %vm1336, %v2477, %v2460
        %v2479 = vrot.slane %v2460, 4
        %v2480 = vsel %vm1336, %v2472, %v2479
        %v2482 = vunpack.c.l.s4 1934713408
        %v2483 = vunpack.c.0.s8 %v2482
        %v2484 = vperm.slane %v2478, %v2483
        %v2486 = vunpack.c.l.s4 1934713408
        %v2487 = vunpack.c.0.s8 %v2486
        %v2488 = vperm.slane %v2480, %v2487
        %v2489 = vrot.slane %v2476, 4
        %v2490 = vsel %vm1336, %v2489, %v2464
        %v2491 = vrot.slane %v2464, 4
        %v2492 = vsel %vm1336, %v2476, %v2491
        %v2494 = vunpack.c.l.s4 1934713408
        %v2495 = vunpack.c.0.s8 %v2494
        %v2496 = vperm.slane %v2490, %v2495
        %v2498 = vunpack.c.l.s4 1934713408
        %v2499 = vunpack.c.0.s8 %v2498
        %v2500 = vperm.slane %v2492, %v2499
        %v2501 = vrot.slane %v2484, 4
        %v2502 = vsel %vm1336, 0.0, %v2501
        %v2503 = vrot.slane %v2488, 4
        %v2504 = vsel %vm1336, 0.0, %v2503
        %v2505 = vrot.slane %v2496, 4
        %v2506 = vsel %vm1336, 0.0, %v2505
        %v2507 = vrot.slane %v2500, 4
        %v2508 = vsel %vm1336, 0.0, %v2507
        %v2509 = vsel %vm1336, %v2447, %v2428
        %v2511 = vunpack.c.l.s4 1983009808
        %v2512 = vunpack.c.0.s8 %v2511
        %v2513 = vperm.slane %v2509, %v2512
        %v2514 = vrot.slane %v2448, 4
        %v2515 = vsel %vm1336, %v2514, %v2446
        %v2517 = vunpack.c.l.s4 1983009808
        %v2518 = vunpack.c.0.s8 %v2517
        %v2519 = vperm.slane %v2515, %v2518
        %v2520 = vsel %vm1336, %v2451, %v2440
        %v2522 = vunpack.c.l.s4 1983009808
        %v2523 = vunpack.c.0.s8 %v2522
        %v2524 = vperm.slane %v2520, %v2523
        %v2525 = vrot.slane %v2452, 4
        %v2526 = vsel %vm1336, %v2525, %v2450
        %v2528 = vunpack.c.l.s4 1983009808
        %v2529 = vunpack.c.0.s8 %v2528
        %v2530 = vperm.slane %v2526, %v2529
        %v2531 = vrot.slane %v2519, 4
        %v2532 = vsel %vm1336, %v2531, %v2513
        %v2533 = vrot.slane %v2513, 4
        %v2534 = vsel %vm1336, %v2519, %v2533
        %v2536 = vunpack.c.l.s4 1934713408
        %v2537 = vunpack.c.0.s8 %v2536
        %v2538 = vperm.slane %v2532, %v2537
        %v2540 = vunpack.c.l.s4 1934713408
        %v2541 = vunpack.c.0.s8 %v2540
        %v2542 = vperm.slane %v2534, %v2541
        %v2543 = vrot.slane %v2530, 4
        %v2544 = vsel %vm1336, %v2543, %v2524
        %v2545 = vrot.slane %v2524, 4
        %v2546 = vsel %vm1336, %v2530, %v2545
        %v2548 = vunpack.c.l.s4 1934713408
        %v2549 = vunpack.c.0.s8 %v2548
        %v2550 = vperm.slane %v2544, %v2549
        %v2552 = vunpack.c.l.s4 1934713408
        %v2553 = vunpack.c.0.s8 %v2552
        %v2554 = vperm.slane %v2546, %v2553
        %v2555 = vrot.slane %v2550, 4
        %v2556 = vsel %vm1336, %v2555, %v2538
        %v2557 = vrot.slane %v2538, 4
        %v2558 = vsel %vm1336, %v2550, %v2557
        %v2559 = vrot.slane %v2554, 4
        %v2560 = vsel %vm1336, %v2559, %v2542
        %v2561 = vrot.slane %v2542, 4
        %v2562 = vsel %vm1336, %v2554, %v2561
        %v2563 = vsel %vm1336, %v2503, %v2484
        %v2565 = vunpack.c.l.s4 1983009808
        %v2566 = vunpack.c.0.s8 %v2565
        %v2567 = vperm.slane %v2563, %v2566
        %v2568 = vrot.slane %v2504, 4
        %v2569 = vsel %vm1336, %v2568, %v2502
        %v2571 = vunpack.c.l.s4 1983009808
        %v2572 = vunpack.c.0.s8 %v2571
        %v2573 = vperm.slane %v2569, %v2572
        %v2574 = vsel %vm1336, %v2507, %v2496
        %v2576 = vunpack.c.l.s4 1983009808
        %v2577 = vunpack.c.0.s8 %v2576
        %v2578 = vperm.slane %v2574, %v2577
        %v2579 = vrot.slane %v2508, 4
        %v2580 = vsel %vm1336, %v2579, %v2506
        %v2582 = vunpack.c.l.s4 1983009808
        %v2583 = vunpack.c.0.s8 %v2582
        %v2584 = vperm.slane %v2580, %v2583
        %v2585 = vrot.slane %v2573, 4
        %v2586 = vsel %vm1336, %v2585, %v2567
        %v2587 = vrot.slane %v2567, 4
        %v2588 = vsel %vm1336, %v2573, %v2587
        %v2590 = vunpack.c.l.s4 1934713408
        %v2591 = vunpack.c.0.s8 %v2590
        %v2592 = vperm.slane %v2586, %v2591
        %v2594 = vunpack.c.l.s4 1934713408
        %v2595 = vunpack.c.0.s8 %v2594
        %v2596 = vperm.slane %v2588, %v2595
        %v2597 = vrot.slane %v2584, 4
        %v2598 = vsel %vm1336, %v2597, %v2578
        %v2599 = vrot.slane %v2578, 4
        %v2600 = vsel %vm1336, %v2584, %v2599
        %v2602 = vunpack.c.l.s4 1934713408
        %v2603 = vunpack.c.0.s8 %v2602
        %v2604 = vperm.slane %v2598, %v2603
        %v2606 = vunpack.c.l.s4 1934713408
        %v2607 = vunpack.c.0.s8 %v2606
        %v2608 = vperm.slane %v2600, %v2607
        %v2609 = vrot.slane %v2604, 4
        %v2610 = vsel %vm1336, %v2609, %v2592
        %v2611 = vrot.slane %v2592, 4
        %v2612 = vsel %vm1336, %v2604, %v2611
        %v2613 = vrot.slane %v2608, 4
        %v2614 = vsel %vm1336, %v2613, %v2596
        %v2615 = vrot.slane %v2596, 4
        %v2616 = vsel %vm1336, %v2608, %v2615
        %2619 = vrot.lane.b32.xlu0 %v2558, 32
        %v2620 = vpop.permute.xlu0 %2619
        %2621 = vrot.lane.b32.xlu0 %v2612, 32
        %v2622 = vpop.permute.xlu0 %2621
        %2627 = vrot.lane.b32.xlu0 %v2560, 64
        %v2628 = vpop.permute.xlu0 %2627
        %2629 = vrot.lane.b32.xlu0 %v2614, 64
        %v2630 = vpop.permute.xlu0 %2629
        %2635 = vrot.lane.b32.xlu0 %v2562, 96
        %v2636 = vpop.permute.xlu0 %2635
        %2637 = vrot.lane.b32.xlu0 %v2616, 96
        %v2638 = vpop.permute.xlu0 %2637
        %v2641 = vsel %vm2070, %v2556, %v2620
        %v2642 = vsel %vm2070, %v2610, %v2622
        %vm2643 = vcmask 523264
        %v2644 = vsel %vm2643, %v2641, %v2628
        %v2645 = vsel %vm2643, %v2642, %v2630
        %vm2646 = vcmask 785408
        %v2647 = vsel %vm2646, %v2644, %v2636
        %v2648 = vsel %vm2646, %v2645, %v2638
        %v2649 = vpack.c.bf16 %v2648, %v2647
        %v2650 = vld [vmem:[%s809] sm:$0xf]
        %v2651 = vld [vmem:[%s809 + $0x4] sm:$0xf]
        %v2652 = vld [vmem:[%s809 + $0x8] sm:$0xf]
        %v2653 = vld [vmem:[%s809 + $0xc] sm:$0xf]
        %v2654 = vld [vmem:[%s809 + $0x10] sm:$0xf]
        %v2655 = vld [vmem:[%s809 + $0x14] sm:$0xf]
        %v2656 = vld [vmem:[%s809 + $0x18] sm:$0xf]
        %v2657 = vld [vmem:[%s809 + $0x1c] sm:$0xf]
        %v2658 = vld [vmem:[%s809 + $0x20] sm:$0xf]
        %v2659 = vld [vmem:[%s809 + $0x24] sm:$0xf]
        %v2660 = vld [vmem:[%s809 + $0x28] sm:$0xf]
        %v2661 = vld [vmem:[%s809 + $0x2c] sm:$0xf]
        %v2662 = vld [vmem:[%s809 + $0x30] sm:$0xf]
        %v2663 = vld [vmem:[%s809 + $0x34] sm:$0xf]
        %v2664 = vld [vmem:[%s809 + $0x38] sm:$0xf]
        %v2665 = vld [vmem:[%s809 + $0x3c] sm:$0xf]
        %v2682 = vunpack.c.l.b16 %v2650
        %v2683 = vunpack.c.l.b16 %v2651
        %v2684 = vunpack.c.l.b16 %v2652
        %v2685 = vunpack.c.l.b16 %v2653
        %v2686 = vunpack.c.l.b16 %v2654
        %v2687 = vunpack.c.l.b16 %v2655
        %v2688 = vunpack.c.l.b16 %v2656
        %v2689 = vunpack.c.l.b16 %v2657
        %v2690 = vunpack.c.l.b16 %v2658
        %v2691 = vunpack.c.l.b16 %v2659
        %v2692 = vunpack.c.l.b16 %v2660
        %v2693 = vunpack.c.l.b16 %v2661
        %v2694 = vunpack.c.l.b16 %v2662
        %v2695 = vunpack.c.l.b16 %v2663
        %v2696 = vunpack.c.l.b16 %v2664
        %v2697 = vunpack.c.l.b16 %v2665
        %v2698 = vpack.c.b16 %v2683, %v2682
        %v2699 = vpack.c.b16 %v2685, %v2684
        %v2700 = vpack.c.b16 %v2687, %v2686
        %v2701 = vpack.c.b16 %v2689, %v2688
        %v2702 = vpack.c.b16 %v2691, %v2690
        %v2703 = vpack.c.b16 %v2693, %v2692
        %v2704 = vpack.c.b16 %v2695, %v2694
        %v2705 = vpack.c.b16 %v2697, %v2696
        %2714 = vmatpush.bf16.msra.mxu0 %v2705
        %2715 = vmatpush.bf16.msra.mxu0 %v2704
        %2716 = vmatpush.bf16.msra.mxu0 %v2703
        %2717 = vmatpush.bf16.msra.mxu0 %v2702
        %2718 = vmatpush.bf16.msra.mxu0 %v2701
        %2719 = vmatpush.bf16.msra.mxu0 %v2700
        %2720 = vmatpush.bf16.msra.mxu0 %v2699
        %2721 = vmatpush.bf16.msra.mxu0 %v2698
        %2722 = vmatmul.bf16.gmra.mxu0 %v2649
        %v2723 = vpop.f32.mrf.mxu0
        %v2724 = vadd.f32 0.0, %v2723
        %v2725 = vpop.f32.mrf.mxu0
        %v2726 = vadd.f32 0.0, %v2725
        %2727 = vdwg.mxu0
        %v2728 = vadd.f32 %v966, %v2724
        %v2729 = vadd.f32 %v967, %v2726
        %v2730 = vadd.f32 %v1079, %v2728
        %v2731 = vadd.f32 %v1080, %v2729
        %v2732 = vld [vmem:[%s937] sm:$0x1]
        %v2733 = vld [vmem:[%s940] sm:$0x1]
        %2734 = vadd.xlane.f32.xlu0 %v2730
        %v2735 = vpop.xlane.xlu0 %2734
        %2736 = vadd.xlane.f32.xlu0 %v2731
        %v2737 = vpop.xlane.xlu0 %2736
        %v2738 = vrcp.pop 128.0
        %v2739 = vmul.f32 128.0, %v2738
        %v2740 = vsub.f32 1.0, %v2739
        %v2741 = vmul.f32 %v2738, %v2740
        %v2742 = vadd.f32 %v2738, %v2741
        %vm2743 = vweird.f32 %v2738
        %v2744 = vsel %vm2743, %v2738, %v2742
        %v2745 = vmul.f32 %v2735, %v2744
        %v2746 = vmul.f32 %v2737, %v2744
        %v2747 = vsub.f32 %v2730, %v2745
        %v2748 = vsub.f32 %v2731, %v2746
        %v2749 = vmul.f32 %v2747, %v2747
        %v2750 = vmul.f32 %v2748, %v2748
        %2751 = vadd.xlane.f32.xlu0 %v2749
        %v2752 = vpop.xlane.xlu0 %2751
        %2753 = vadd.xlane.f32.xlu0 %v2750
        %v2754 = vpop.xlane.xlu0 %2753
        %v2755 = vmul.f32 %v2752, %v2744
        %v2756 = vmul.f32 %v2754, %v2744
        %v2757 = vadd.f32 %v2755, 1e-05
        %v2758 = vadd.f32 %v2756, 1e-05
        %v2759 = vrsqrt.pop %v2757
        %v2760 = vmul.f32 %v2759, %v2757
        %v2761 = vmul.f32 %v2760, %v2759
        %v2762 = vmul.f32 0.5, %v2761
        %v2763 = vsub.f32 1.5, %v2762
        %v2764 = vmul.f32 %v2759, %v2763
        %vm2765 = vweird.f32 %v2757
        %vm2766 = vweird.f32 %v2759
        %vm2767 = vmor %vm2765, %vm2766
        %v2768 = vsel %vm2767, %v2759, %v2764
        %v2769 = vrsqrt.pop %v2758
        %v2770 = vmul.f32 %v2769, %v2758
        %v2771 = vmul.f32 %v2770, %v2769
        %v2772 = vmul.f32 0.5, %v2771
        %v2773 = vsub.f32 1.5, %v2772
        %v2774 = vmul.f32 %v2769, %v2773
        %vm2775 = vweird.f32 %v2758
        %vm2776 = vweird.f32 %v2769
        %vm2777 = vmor %vm2775, %vm2776
        %v2778 = vsel %vm2777, %v2769, %v2774
        %v2779 = vmul.f32 %v2747, %v2768
        %v2780 = vmul.f32 %v2748, %v2778
        %v2782 = vperm.slane %v2732, 0
        %v2784 = vmul.f32 %v2779, %v2782
        %v2785 = vmul.f32 %v2780, %v2782
        %v2787 = vperm.slane %v2733, 0
        %v2789 = vadd.f32 %v2784, %v2787
        %v2790 = vadd.f32 %v2785, %v2787
        %v2791 = vpack.c.bf16 %v2790, %v2789
        %v2792 = vld [vmem:[%s819] sm:$0xff]
        %v2793 = vld [vmem:[%s819 + $0x8] sm:$0xff]
        %v2794 = vld [vmem:[%s819 + $0x10] sm:$0xff]
        %v2795 = vld [vmem:[%s819 + $0x18] sm:$0xff]
        %v2796 = vld [vmem:[%s819 + $0x20] sm:$0xff]
        %v2797 = vld [vmem:[%s819 + $0x28] sm:$0xff]
        %v2798 = vld [vmem:[%s819 + $0x30] sm:$0xff]
        %v2799 = vld [vmem:[%s819 + $0x38] sm:$0xff]
        %v2800 = vld [vmem:[%s819 + $0x40] sm:$0xff]
        %v2801 = vld [vmem:[%s819 + $0x48] sm:$0xff]
        %v2802 = vld [vmem:[%s819 + $0x50] sm:$0xff]
        %v2803 = vld [vmem:[%s819 + $0x58] sm:$0xff]
        %v2804 = vld [vmem:[%s819 + $0x60] sm:$0xff]
        %v2805 = vld [vmem:[%s819 + $0x68] sm:$0xff]
        %v2806 = vld [vmem:[%s819 + $0x70] sm:$0xff]
        %v2807 = vld [vmem:[%s819 + $0x78] sm:$0xff]
        %v2808 = vld [vmem:[%s944] sm:$0x3]
        %v2810 = vperm.slane %v2808, 0
        %v2811 = vperm.slane %v2808, 1
        %v2830 = vunpack.c.l.b16 %v2792
        %v2831 = vunpack.c.h.b16 %v2792
        %v2832 = vunpack.c.l.b16 %v2793
        %v2833 = vunpack.c.h.b16 %v2793
        %v2834 = vunpack.c.l.b16 %v2794
        %v2835 = vunpack.c.h.b16 %v2794
        %v2836 = vunpack.c.l.b16 %v2795
        %v2837 = vunpack.c.h.b16 %v2795
        %v2838 = vunpack.c.l.b16 %v2796
        %v2839 = vunpack.c.h.b16 %v2796
        %v2840 = vunpack.c.l.b16 %v2797
        %v2841 = vunpack.c.h.b16 %v2797
        %v2842 = vunpack.c.l.b16 %v2798
        %v2843 = vunpack.c.h.b16 %v2798
        %v2844 = vunpack.c.l.b16 %v2799
        %v2845 = vunpack.c.h.b16 %v2799
        %v2846 = vunpack.c.l.b16 %v2800
        %v2847 = vunpack.c.h.b16 %v2800
        %v2848 = vunpack.c.l.b16 %v2801
        %v2849 = vunpack.c.h.b16 %v2801
        %v2850 = vunpack.c.l.b16 %v2802
        %v2851 = vunpack.c.h.b16 %v2802
        %v2852 = vunpack.c.l.b16 %v2803
        %v2853 = vunpack.c.h.b16 %v2803
        %v2854 = vunpack.c.l.b16 %v2804
        %v2855 = vunpack.c.h.b16 %v2804
        %v2856 = vunpack.c.l.b16 %v2805
        %v2857 = vunpack.c.h.b16 %v2805
        %v2858 = vunpack.c.l.b16 %v2806
        %v2859 = vunpack.c.h.b16 %v2806
        %v2860 = vunpack.c.l.b16 %v2807
        %v2861 = vunpack.c.h.b16 %v2807
        %v2862 = vpack.c.b16 %v2832, %v2830
        %v2863 = vpack.c.b16 %v2833, %v2831
        %v2864 = vpack.c.b16 %v2836, %v2834
        %v2865 = vpack.c.b16 %v2837, %v2835
        %v2866 = vpack.c.b16 %v2840, %v2838
        %v2867 = vpack.c.b16 %v2841, %v2839
        %v2868 = vpack.c.b16 %v2844, %v2842
        %v2869 = vpack.c.b16 %v2845, %v2843
        %v2870 = vpack.c.b16 %v2848, %v2846
        %v2871 = vpack.c.b16 %v2849, %v2847
        %v2872 = vpack.c.b16 %v2852, %v2850
        %v2873 = vpack.c.b16 %v2853, %v2851
        %v2874 = vpack.c.b16 %v2856, %v2854
        %v2875 = vpack.c.b16 %v2857, %v2855
        %v2876 = vpack.c.b16 %v2860, %v2858
        %v2877 = vpack.c.b16 %v2861, %v2859
        %2894 = vmatpush.bf16.msra.mxu0 %v2876
        %2895 = vmatpush.bf16.msra.mxu0 %v2874
        %2896 = vmatpush.bf16.msra.mxu0 %v2872
        %2897 = vmatpush.bf16.msra.mxu0 %v2870
        %2898 = vmatpush.bf16.msra.mxu0 %v2868
        %2899 = vmatpush.bf16.msra.mxu0 %v2866
        %2900 = vmatpush.bf16.msra.mxu0 %v2864
        %2901 = vmatpush.bf16.msra.mxu0 %v2862
        %2902 = vmatmul.bf16.gmra.mxu0 %v2791
        %v2903 = vpop.f32.mrf.mxu0
        %v2904 = vadd.f32 %v2810, %v2903
        %v2905 = vpop.f32.mrf.mxu0
        %v2906 = vadd.f32 %v2810, %v2905
        %2907 = vdwg.mxu0
        %2908 = vmatpush.bf16.msra.mxu0 %v2877
        %2909 = vmatpush.bf16.msra.mxu0 %v2875
        %2910 = vmatpush.bf16.msra.mxu0 %v2873
        %2911 = vmatpush.bf16.msra.mxu0 %v2871
        %2912 = vmatpush.bf16.msra.mxu0 %v2869
        %2913 = vmatpush.bf16.msra.mxu0 %v2867
        %2914 = vmatpush.bf16.msra.mxu0 %v2865
        %2915 = vmatpush.bf16.msra.mxu0 %v2863
        %2916 = vmatmul.bf16.gmra.mxu0 %v2791
        %v2917 = vpop.f32.mrf.mxu0
        %v2918 = vadd.f32 %v2811, %v2917
        %v2919 = vpop.f32.mrf.mxu0
        %v2920 = vadd.f32 %v2811, %v2919
        %2921 = vdwg.mxu0
        %v2922 = vmax.f32 %v2904, 0.0
        %v2923 = vmax.f32 %v2918, 0.0
        %v2924 = vmax.f32 %v2906, 0.0
        %v2925 = vmax.f32 %v2920, 0.0
        %v2926 = vpack.c.bf16 %v2924, %v2922
        %v2927 = vpack.c.bf16 %v2925, %v2923
        %v2928 = vld [vmem:[%s829] sm:$0xf]
        %v2929 = vld [vmem:[%s829 + $0x4] sm:$0xf]
        %v2930 = vld [vmem:[%s829 + $0x8] sm:$0xf]
        %v2931 = vld [vmem:[%s829 + $0xc] sm:$0xf]
        %v2932 = vld [vmem:[%s829 + $0x10] sm:$0xf]
        %v2933 = vld [vmem:[%s829 + $0x14] sm:$0xf]
        %v2934 = vld [vmem:[%s829 + $0x18] sm:$0xf]
        %v2935 = vld [vmem:[%s829 + $0x1c] sm:$0xf]
        %v2936 = vld [vmem:[%s829 + $0x20] sm:$0xf]
        %v2937 = vld [vmem:[%s829 + $0x24] sm:$0xf]
        %v2938 = vld [vmem:[%s829 + $0x28] sm:$0xf]
        %v2939 = vld [vmem:[%s829 + $0x2c] sm:$0xf]
        %v2940 = vld [vmem:[%s829 + $0x30] sm:$0xf]
        %v2941 = vld [vmem:[%s829 + $0x34] sm:$0xf]
        %v2942 = vld [vmem:[%s829 + $0x38] sm:$0xf]
        %v2943 = vld [vmem:[%s829 + $0x3c] sm:$0xf]
        %v2944 = vld [vmem:[%s829 + $0x40] sm:$0xf]
        %v2945 = vld [vmem:[%s829 + $0x44] sm:$0xf]
        %v2946 = vld [vmem:[%s829 + $0x48] sm:$0xf]
        %v2947 = vld [vmem:[%s829 + $0x4c] sm:$0xf]
        %v2948 = vld [vmem:[%s829 + $0x50] sm:$0xf]
        %v2949 = vld [vmem:[%s829 + $0x54] sm:$0xf]
        %v2950 = vld [vmem:[%s829 + $0x58] sm:$0xf]
        %v2951 = vld [vmem:[%s829 + $0x5c] sm:$0xf]
        %v2952 = vld [vmem:[%s829 + $0x60] sm:$0xf]
        %v2953 = vld [vmem:[%s829 + $0x64] sm:$0xf]
        %v2954 = vld [vmem:[%s829 + $0x68] sm:$0xf]
        %v2955 = vld [vmem:[%s829 + $0x6c] sm:$0xf]
        %v2956 = vld [vmem:[%s829 + $0x70] sm:$0xf]
        %v2957 = vld [vmem:[%s829 + $0x74] sm:$0xf]
        %v2958 = vld [vmem:[%s829 + $0x78] sm:$0xf]
        %v2959 = vld [vmem:[%s829 + $0x7c] sm:$0xf]
        %v2960 = vld [vmem:[%s947] sm:$0x1]
        %v2962 = vperm.slane %v2960, 0
        %v2996 = vunpack.c.l.b16 %v2928
        %v2997 = vunpack.c.l.b16 %v2929
        %v2998 = vunpack.c.l.b16 %v2930
        %v2999 = vunpack.c.l.b16 %v2931
        %v3000 = vunpack.c.l.b16 %v2932
        %v3001 = vunpack.c.l.b16 %v2933
        %v3002 = vunpack.c.l.b16 %v2934
        %v3003 = vunpack.c.l.b16 %v2935
        %v3004 = vunpack.c.l.b16 %v2936
        %v3005 = vunpack.c.l.b16 %v2937
        %v3006 = vunpack.c.l.b16 %v2938
        %v3007 = vunpack.c.l.b16 %v2939
        %v3008 = vunpack.c.l.b16 %v2940
        %v3009 = vunpack.c.l.b16 %v2941
        %v3010 = vunpack.c.l.b16 %v2942
        %v3011 = vunpack.c.l.b16 %v2943
        %v3012 = vunpack.c.l.b16 %v2944
        %v3013 = vunpack.c.l.b16 %v2945
        %v3014 = vunpack.c.l.b16 %v2946
        %v3015 = vunpack.c.l.b16 %v2947
        %v3016 = vunpack.c.l.b16 %v2948
        %v3017 = vunpack.c.l.b16 %v2949
        %v3018 = vunpack.c.l.b16 %v2950
        %v3019 = vunpack.c.l.b16 %v2951
        %v3020 = vunpack.c.l.b16 %v2952
        %v3021 = vunpack.c.l.b16 %v2953
        %v3022 = vunpack.c.l.b16 %v2954
        %v3023 = vunpack.c.l.b16 %v2955
        %v3024 = vunpack.c.l.b16 %v2956
        %v3025 = vunpack.c.l.b16 %v2957
        %v3026 = vunpack.c.l.b16 %v2958
        %v3027 = vunpack.c.l.b16 %v2959
        %v3028 = vpack.c.b16 %v2997, %v2996
        %v3029 = vpack.c.b16 %v2999, %v2998
        %v3030 = vpack.c.b16 %v3001, %v3000
        %v3031 = vpack.c.b16 %v3003, %v3002
        %v3032 = vpack.c.b16 %v3005, %v3004
        %v3033 = vpack.c.b16 %v3007, %v3006
        %v3034 = vpack.c.b16 %v3009, %v3008
        %v3035 = vpack.c.b16 %v3011, %v3010
        %v3036 = vpack.c.b16 %v3013, %v3012
        %v3037 = vpack.c.b16 %v3015, %v3014
        %v3038 = vpack.c.b16 %v3017, %v3016
        %v3039 = vpack.c.b16 %v3019, %v3018
        %v3040 = vpack.c.b16 %v3021, %v3020
        %v3041 = vpack.c.b16 %v3023, %v3022
        %v3042 = vpack.c.b16 %v3025, %v3024
        %v3043 = vpack.c.b16 %v3027, %v3026
        %3060 = vmatpush.bf16.msra.mxu0 %v3035
        %3061 = vmatpush.bf16.msra.mxu0 %v3034
        %3062 = vmatpush.bf16.msra.mxu0 %v3033
        %3063 = vmatpush.bf16.msra.mxu0 %v3032
        %3064 = vmatpush.bf16.msra.mxu0 %v3031
        %3065 = vmatpush.bf16.msra.mxu0 %v3030
        %3066 = vmatpush.bf16.msra.mxu0 %v3029
        %3067 = vmatpush.bf16.msra.mxu0 %v3028
        %3068 = vmatmul.bf16.gmra.mxu0 %v2926
        %v3069 = vpop.f32.mrf.mxu0
        %v3070 = vadd.f32 %v2962, %v3069
        %v3071 = vpop.f32.mrf.mxu0
        %v3072 = vadd.f32 %v2962, %v3071
        %3073 = vdwg.mxu0
        %3074 = vmatpush.bf16.msra.mxu0 %v3043
        %3075 = vmatpush.bf16.msra.mxu0 %v3042
        %3076 = vmatpush.bf16.msra.mxu0 %v3041
        %3077 = vmatpush.bf16.msra.mxu0 %v3040
        %3078 = vmatpush.bf16.msra.mxu0 %v3039
        %3079 = vmatpush.bf16.msra.mxu0 %v3038
        %3080 = vmatpush.bf16.msra.mxu0 %v3037
        %3081 = vmatpush.bf16.msra.mxu0 %v3036
        %3082 = vmatmul.bf16.gmra.mxu0 %v2927
        %v3083 = vpop.f32.mrf.mxu0
        %v3084 = vadd.f32 %v3070, %v3083
        %v3085 = vpop.f32.mrf.mxu0
        %v3086 = vadd.f32 %v3072, %v3085
        %3087 = vdwg.mxu0
        %v3088 = vadd.f32 %v2789, %v3084
        %v3089 = vadd.f32 %v2790, %v3086
        %v3090 = vld [vmem:[%s950] sm:$0x1]
        %v3091 = vld [vmem:[%s953] sm:$0x1]
        %3092 = vadd.xlane.f32.xlu0 %v3088
        %v3093 = vpop.xlane.xlu0 %3092
        %3094 = vadd.xlane.f32.xlu0 %v3089
        %v3095 = vpop.xlane.xlu0 %3094
        %v3096 = vmul.f32 %v3093, %v2744
        %v3097 = vmul.f32 %v3095, %v2744
        %v3098 = vsub.f32 %v3088, %v3096
        %v3099 = vsub.f32 %v3089, %v3097
        %v3100 = vmul.f32 %v3098, %v3098
        %v3101 = vmul.f32 %v3099, %v3099
        %3102 = vadd.xlane.f32.xlu0 %v3100
        %v3103 = vpop.xlane.xlu0 %3102
        %3104 = vadd.xlane.f32.xlu0 %v3101
        %v3105 = vpop.xlane.xlu0 %3104
        %v3106 = vmul.f32 %v3103, %v2744
        %v3107 = vmul.f32 %v3105, %v2744
        %v3108 = vadd.f32 %v3106, 1e-05
        %v3109 = vadd.f32 %v3107, 1e-05
        %v3110 = vrsqrt.pop %v3108
        %v3111 = vmul.f32 %v3110, %v3108
        %v3112 = vmul.f32 %v3111, %v3110
        %v3113 = vmul.f32 0.5, %v3112
        %v3114 = vsub.f32 1.5, %v3113
        %v3115 = vmul.f32 %v3110, %v3114
        %vm3116 = vweird.f32 %v3108
        %vm3117 = vweird.f32 %v3110
        %vm3118 = vmor %vm3116, %vm3117
        %v3119 = vsel %vm3118, %v3110, %v3115
        %v3120 = vrsqrt.pop %v3109
        %v3121 = vmul.f32 %v3120, %v3109
        %v3122 = vmul.f32 %v3121, %v3120
        %v3123 = vmul.f32 0.5, %v3122
        %v3124 = vsub.f32 1.5, %v3123
        %v3125 = vmul.f32 %v3120, %v3124
        %vm3126 = vweird.f32 %v3109
        %vm3127 = vweird.f32 %v3120
        %vm3128 = vmor %vm3126, %vm3127
        %v3129 = vsel %vm3128, %v3120, %v3125
        %v3130 = vmul.f32 %v3098, %v3119
        %v3131 = vmul.f32 %v3099, %v3129
        %v3133 = vperm.slane %v3090, 0
        %v3135 = vmul.f32 %v3130, %v3133
        %v3136 = vmul.f32 %v3131, %v3133
        %v3138 = vperm.slane %v3091, 0
        %v3140 = vadd.f32 %v3135, %v3138
        %v3141 = vadd.f32 %v3136, %v3138
        %3142 = vst [vmem:[#allocation14] sm:$0xff] %v3140
        %3143 = vst [vmem:[#allocation14 + $0x8] sm:$0xff] %v3141
        %v3144 = vpack.c.bf16 %v3141, %v3140
        %v3145 = vld [vmem:[%s16] sm:$0xf]
        %v3146 = vld [vmem:[%s16 + $0x4] sm:$0xf]
        %v3147 = vld [vmem:[%s16 + $0x8] sm:$0xf]
        %v3148 = vld [vmem:[%s16 + $0xc] sm:$0xf]
        %v3149 = vld [vmem:[%s16 + $0x10] sm:$0xf]
        %v3150 = vld [vmem:[%s16 + $0x14] sm:$0xf]
        %v3151 = vld [vmem:[%s16 + $0x18] sm:$0xf]
        %v3152 = vld [vmem:[%s16 + $0x1c] sm:$0xf]
        %v3153 = vld [vmem:[%s16 + $0x20] sm:$0xf]
        %v3154 = vld [vmem:[%s16 + $0x24] sm:$0xf]
        %v3155 = vld [vmem:[%s16 + $0x28] sm:$0xf]
        %v3156 = vld [vmem:[%s16 + $0x2c] sm:$0xf]
        %v3157 = vld [vmem:[%s16 + $0x30] sm:$0xf]
        %v3158 = vld [vmem:[%s16 + $0x34] sm:$0xf]
        %v3159 = vld [vmem:[%s16 + $0x38] sm:$0xf]
        %v3160 = vld [vmem:[%s16 + $0x3c] sm:$0xf]
        %v3161 = vld [vmem:[%s17] sm:$0x1]
        %v3163 = vperm.slane %v3161, 0
        %v3181 = vunpack.c.l.b16 %v3145
        %v3182 = vunpack.c.l.b16 %v3146
        %v3183 = vunpack.c.l.b16 %v3147
        %v3184 = vunpack.c.l.b16 %v3148
        %v3185 = vunpack.c.l.b16 %v3149
        %v3186 = vunpack.c.l.b16 %v3150
        %v3187 = vunpack.c.l.b16 %v3151
        %v3188 = vunpack.c.l.b16 %v3152
        %v3189 = vunpack.c.l.b16 %v3153
        %v3190 = vunpack.c.l.b16 %v3154
        %v3191 = vunpack.c.l.b16 %v3155
        %v3192 = vunpack.c.l.b16 %v3156
        %v3193 = vunpack.c.l.b16 %v3157
        %v3194 = vunpack.c.l.b16 %v3158
        %v3195 = vunpack.c.l.b16 %v3159
        %v3196 = vunpack.c.l.b16 %v3160
        %v3197 = vpack.c.b16 %v3182, %v3181
        %v3198 = vpack.c.b16 %v3184, %v3183
        %v3199 = vpack.c.b16 %v3186, %v3185
        %v3200 = vpack.c.b16 %v3188, %v3187
        %v3201 = vpack.c.b16 %v3190, %v3189
        %v3202 = vpack.c.b16 %v3192, %v3191
        %v3203 = vpack.c.b16 %v3194, %v3193
        %v3204 = vpack.c.b16 %v3196, %v3195
        %3213 = vmatpush.bf16.msra.mxu0 %v3204
        %3214 = vmatpush.bf16.msra.mxu0 %v3203
        %3215 = vmatpush.bf16.msra.mxu0 %v3202
        %3216 = vmatpush.bf16.msra.mxu0 %v3201
        %3217 = vmatpush.bf16.msra.mxu0 %v3200
        %3218 = vmatpush.bf16.msra.mxu0 %v3199
        %3219 = vmatpush.bf16.msra.mxu0 %v3198
        %3220 = vmatpush.bf16.msra.mxu0 %v3197
        %3221 = vmatmul.bf16.gmra.mxu0 %v3144
        %v3222 = vpop.f32.mrf.mxu0
        %v3223 = vadd.f32 %v3163, %v3222
        %v3224 = vpop.f32.mrf.mxu0
        %v3225 = vadd.f32 %v3163, %v3224
        %3226 = vdwg.mxu0
        %v3227 = vld [vmem:[#allocation15] sm:$0xff]
        %v3228 = vld [vmem:[#allocation15 + $0x8] sm:$0xff]
        %v3229 = vadd.f32 %v3227, %v3223
        %v3230 = vadd.f32 %v3228, %v3225
        %vm3231 = vcmask 293888
        %3232 = vst.msk [vmem:[#allocation15] sm:$0xff] %vm3231, %v3229
        %3233 = vst.msk [vmem:[#allocation15 + $0x8] sm:$0xff] %vm3231, %v3230
        // Predicated region
        $region125: #{tpu_custom_call.1} parent=91 // pred_check
          %p3234 = pneg %p506
        $region126: #{tpu_custom_call.1} parent=91 // pred_check_branch
          %3236 = sbr.rel (%p3234) target = $region128
        $region127: #{tpu_custom_call.1} parent=91 // pred_region
          %3238 = vsyncadd [#allocation4], 0
          %s3239 = sshll.u32 [#allocation14], 4
          %s3240 = int_to_ptr.vmem [resolvable:$true] %s3239
          %s3241 = sshll.u32 %s18, 4
          %s3242 = int_to_ptr.hbm [resolvable:$true] %s3241
          %3247 = dma.vmem_to_hbm [thread:$0]  %s3240, 256, %s3242, [#allocation4], 128, 128, 8
        $region128: #{tpu_custom_call.1} parent=91 // pred_fallthru
          _
        // Predicated region
        $region129: #{tpu_custom_call.1} parent=91 // pred_check
          %p3248 = pneg %p527
        $region130: #{tpu_custom_call.1} parent=91 // pred_check_branch
          %3250 = sbr.rel (%p3248) target = $region132
        $region131: #{tpu_custom_call.1} parent=91 // pred_region
          %3252 = vsyncadd [#allocation16], 0
          %s3253 = sshll.u32 [#allocation15], 4
          %s3254 = int_to_ptr.vmem [resolvable:$true] %s3253
          %s3255 = sshll.u32 %s19, 4
          %s3256 = int_to_ptr.hbm [resolvable:$true] %s3255
          %3261 = dma.vmem_to_hbm [thread:$0]  %s3254, 256, %s3256, [#allocation16], 128, 128, 8
        $region132: #{tpu_custom_call.1} parent=91 // pred_fallthru
          _
        // Predicated region
        $region133: #{tpu_custom_call.1} parent=91 // pred_check
          %p3262 = pneg %p506
        $region134: #{tpu_custom_call.1} parent=91 // pred_check_branch
          %3264 = sbr.rel (%p3262) target = $region136
        $region135: #{tpu_custom_call.1} parent=91 // pred_region
          %3266 = dma.done [#allocation4], 256
        $region136: #{tpu_custom_call.1} parent=91 // pred_fallthru
          _
        // Predicated region
        $region137: #{tpu_custom_call.1} parent=91 // pred_check
          %p3267 = pneg %p527
        $region138: #{tpu_custom_call.1} parent=91 // pred_check_branch
          %3269 = sbr.rel (%p3267) target = $region140
        $region139: #{tpu_custom_call.1} parent=91 // pred_region
          %3271 = dma.done [#allocation16], 256
        $region140: #{tpu_custom_call.1} parent=91 // pred_fallthru
          _
      $region92: #{tpu_custom_call.1} parent=5 // pred_fallthru
        _
      %p3272 = scmp.le.s32.totalorder 2, %s40
      // Predicated region
      $region141: #{tpu_custom_call.1} parent=5 // pred_check
        %p3273 = pneg %p3272
      $region142: #{tpu_custom_call.1} parent=5 // pred_check_branch
        %3275 = sbr.rel (%p3273) target = $region144
      $region143: #{tpu_custom_call.1} parent=5 // pred_region
        %s3276 = ssub.s32 %s40, 2
      $region144: #{tpu_custom_call.1} parent=5 // pred_fallthru
        _
    $region6: #{tpu_custom_call.1} parent=1 // loop_footer
      %s44 = sadd.s32 1, %s40
    $region7: #{tpu_custom_call.1} parent=1 // loop_footer_branch
      %39 = sbr.rel target = $region3
    $region8: #{tpu_custom_call.1} parent=1 // loop_exit
      _
    %3277 = vsyncpa [#allocation3], 1
    %s3278 = scalar_lea.sflag [#allocation3], 1
    %3279 = vsyncpa %s3278, 1
    %3280 = vsyncpa [#allocation6], 1
    %s3281 = scalar_lea.sflag [#allocation6], 1
    %3282 = vsyncpa %s3281, 1
    %3283 = vsyncpa [#allocation9], 1
    %s3284 = scalar_lea.sflag [#allocation9], 1
    %3285 = vsyncpa %s3284, 1
    %3286 = vsyncpa [#allocation12], 1
    %s3287 = scalar_lea.sflag [#allocation12], 1
    %3288 = vsyncpa %s3287, 1
    %3289 = vsyncpa [#allocation4], 1
    %s3290 = scalar_lea.sflag [#allocation4], 1
    %3291 = vsyncpa %s3290, 1
    %3292 = vsyncpa [#allocation16], 1

</llo_original>
